<compile_context>
chip_gen: v7x
topology: tpu7x:2x2x1
jax: 0.10.0
libtpu: 0.0.40
codegen_flags: <defaults>
</compile_context>

<pallas_src>
import jax
import jax.numpy as jnp
from jax.experimental import pallas as pl
from jax.experimental.pallas import tpu as pltpu


def vqa_adapter_kernel(frcn_ref, bbox_ref, wb_ref, wf1_ref, wf2_ref, bias_ref,
                       img_ref, msum_ref):
    # frcn_ref: (TM, Df) f32     bbox_ref: (TM, 5)  f32
    # wb_ref:   (5, E)   f32     wf1_ref:  (Df, H)  bf16
    # wf2_ref:  (E, H)   bf16    bias_ref: (1, H)   f32   (= bb @ Wf2 + bf)
    # img_ref:  (TM, H)  f32     msum_ref: (TM, 1)  f32   (row abs-sum for mask)
    frcn = frcn_ref[...]                                          # (TM, Df) f32

    # Push the big K=Df contraction to the MXU first (bf16 in, f32 accumulate).
    # The f32->bf16 cast is VPU work fully hidden under this matmul.
    acc = jnp.dot(frcn.astype(jnp.bfloat16), wf1_ref[...],
                  preferred_element_type=jnp.float32)             # (TM, H) f32

    # Zero-row abs-sum for the mask, from the exact f32 features (VPU filler).
    msum_ref[...] = jnp.sum(jnp.abs(frcn), axis=-1, keepdims=True)

    # bbox linear (K=5) as an unrolled VPU broadcast-MAC (no bias: it is folded
    # into bias_ref).  The MXU keeps working on the K=Df matmul meanwhile.
    bbox = bbox_ref[...]                                          # (TM, 5) f32
    emb = bbox[:, 0:1] * wb_ref[0:1, :]                           # (TM, E) f32
    for k in range(1, 5):
        emb = emb + bbox[:, k:k + 1] * wb_ref[k:k + 1, :]

    # Second split matmul: bbox_emb @ Wf2 (bf16 in, f32 accumulate).
    acc = acc + jnp.dot(emb.astype(jnp.bfloat16), wf2_ref[...],
                        preferred_element_type=jnp.float32)

    img_ref[...] = (acc + bias_ref[...]).astype(img_ref.dtype)


def prepare_vqa_adapter_params(wb, bb, wf, bf, frcn_dim):
    """One-time weight prep (transpose / split / cast / bias fusion).

    PyTorch nn.Linear layout in: wb: (E, 5), bb: (E,), wf: (H, Df+E), bf: (H,).
    """
    Df = frcn_dim
    wb = jnp.asarray(wb, jnp.float32)
    bb = jnp.asarray(bb, jnp.float32)
    wf = jnp.asarray(wf, jnp.float32)
    bf = jnp.asarray(bf, jnp.float32)
    wf_b = wf[:, Df:]                                   # (H, E)
    bias_h = (bb @ wf_b.T + bf).reshape(1, -1)          # (1, H) f32, exact
    return {
        "wb_t": wb.T,                                   # (5, E)  f32 (VPU path)
        "wf1_t": wf[:, :Df].T.astype(jnp.bfloat16),     # (Df, H) bf16 (MXU)
        "wf2_t": wf_b.T.astype(jnp.bfloat16),           # (E, H)  bf16 (MXU)
        "bias_h": bias_h,                               # (1, H)  f32
    }


def vqa_adapter(frcn_feat, bbox_feat, params, *, block_rows=512):
    """frcn_feat: (B, N, Df), bbox_feat: (B, N, 5).
    Returns (img_feat (B, N, H) f32, img_feat_mask (B, 1, 1, N) bool)."""
    B, N, Df = frcn_feat.shape
    E = params["wb_t"].shape[1]
    H = params["bias_h"].shape[1]
    M = B * N

    # Free reshapes only -- no pad / cast / mask passes over frcn in the wrapper.
    frcn2 = frcn_feat.reshape(M, Df).astype(jnp.float32)
    bbox2 = bbox_feat.reshape(M, 5).astype(jnp.float32)

    # Row tile: multiple of 8 (f32 second-minor rule) or the full row count.
    # grid = cdiv(M, TM); the ragged tail tile is handled by Pallas OOB blocks.
    if M >= block_rows:
        TM = block_rows
    elif M >= 8:
        TM = (M // 8) * 8
    else:
        TM = M
    grid = (pl.cdiv(M, TM),)

    def run(single_buffer_weights):
        # Grid-invariant operands: single buffer (they never change per step).
        wkw = ({"pipeline_mode": pl.Buffered(1)} if single_buffer_weights else {})
        grid_spec = pltpu.PrefetchScalarGridSpec(
            num_scalar_prefetch=0,
            grid=grid,
            in_specs=[
                pl.BlockSpec((TM, Df), lambda i: (i, 0)),          # frcn rows f32
                pl.BlockSpec((TM, 5), lambda i: (i, 0)),           # bbox rows f32
                pl.BlockSpec((5, E), lambda i: (0, 0), **wkw),     # wb^T
                pl.BlockSpec((Df, H), lambda i: (0, 0), **wkw),    # wf[:, :Df]^T bf16
                pl.BlockSpec((E, H), lambda i: (0, 0), **wkw),     # wf[:, Df:]^T bf16
                pl.BlockSpec((1, H), lambda i: (0, 0), **wkw),     # fused bias
            ],
            out_specs=[
                pl.BlockSpec((TM, H), lambda i: (i, 0)),           # img rows
                pl.BlockSpec((TM, 1), lambda i: (i, 0)),           # mask row sums
            ],
        )
        return pl.pallas_call(
            vqa_adapter_kernel,
            out_shape=(
                jax.ShapeDtypeStruct((M, H), jnp.float32),
                jax.ShapeDtypeStruct((M, 1), jnp.float32),
            ),
            grid_spec=grid_spec,
            compiler_params=pltpu.CompilerParams(
                dimension_semantics=("parallel",),
                # ~20 MiB actually used at production shapes with TM=512;
                # 48 MiB keeps headroom and stays legal on v7x (64 MiB/TC).
                # v6e users may raise to ~96 MiB together with block_rows=1024.
                vmem_limit_bytes=48 * 1024 * 1024,
            ),
        )(frcn2, bbox2, params["wb_t"], params["wf1_t"],
          params["wf2_t"], params["bias_h"])

    try:
        img2, msum = run(True)
    except Exception:
        # Fallback for jax versions where pipeline_mode=pl.Buffered(1) is not
        # accepted on input BlockSpecs: accept double-buffered weights instead.
        img2, msum = run(False)

    img_feat = img2.reshape(B, N, H)
    # Exact make_mask semantics: sum(|x|) over f32 non-negatives is 0 iff all 0.
    img_feat_mask = (msum.reshape(B, 1, 1, N) == 0)
    return img_feat, img_feat_mask


if __name__ == "__main__":
    # Small shapes consistent with the module (production: N=100, Df=2048,
    # E=H=1024).  N=50 -> M=100 also exercises the ragged-tail tile path
    # (TM=96, grid=2, last tile partially out of bounds).
    B, N, Df, E, H = 2, 50, 256, 128, 128

    key = jax.random.PRNGKey(0)
    k1, k2, k3, k4, k5, k6 = jax.random.split(key, 6)

    frcn_feat = jax.random.normal(k1, (B, N, Df), dtype=jnp.float32)
    # Zero-out trailing objects so the mask path is exercised.
    row = jnp.arange(N)
    valid = jnp.stack([row < 37, row < 45], axis=0)              # (B, N)
    frcn_feat = frcn_feat * valid[:, :, None].astype(jnp.float32)
    bbox_feat = jax.random.normal(k2, (B, N, 5), dtype=jnp.float32)

    # Deterministic synthetic parameters (PyTorch nn.Linear layout: (out, in)).
    wb = jax.random.normal(k3, (E, 5), dtype=jnp.float32) * 0.1
    bb = jax.random.normal(k4, (E,), dtype=jnp.float32) * 0.1
    wf = jax.random.normal(k5, (H, Df + E), dtype=jnp.float32) * 0.05
    bf = jax.random.normal(k6, (H,), dtype=jnp.float32) * 0.1

    params = prepare_vqa_adapter_params(wb, bb, wf, bf, frcn_dim=Df)

    img_feat, img_feat_mask = vqa_adapter(frcn_feat, bbox_feat, params)
    jax.block_until_ready((img_feat, img_feat_mask))

    # --- references ---------------------------------------------------------
    # bf16-consistent reference (same operand casts / bias fusion as the kernel,
    # f32 accumulation everywhere).
    emb_nobias = bbox_feat @ wb.T                                 # f32, no bias
    frcn_bf = frcn_feat.astype(jnp.bfloat16).astype(jnp.float32)
    emb_bf = emb_nobias.astype(jnp.bfloat16).astype(jnp.float32)
    wf1_f = params["wf1_t"].astype(jnp.float32)                   # (Df, H)
    wf2_f = params["wf2_t"].astype(jnp.float32)                   # (E, H)
    img_ref_bf16 = frcn_bf @ wf1_f + emb_bf @ wf2_f + params["bias_h"]

    # Pure f32 reference (exact PyTorch math) for a looser sanity check.
    bbox_emb = bbox_feat @ wb.T + bb
    img_ref_f32 = jnp.concatenate([frcn_feat, bbox_emb], axis=-1) @ wf.T + bf
    mask_ref = (jnp.sum(jnp.abs(frcn_feat), axis=-1) == 0).reshape(B, 1, 1, N)

    assert img_feat.shape == (B, N, H)
    assert img_feat.dtype == jnp.float32
    assert img_feat_mask.shape == (B, 1, 1, N)
    assert img_feat_mask.dtype == jnp.bool_
    assert jnp.allclose(img_feat, img_ref_bf16, atol=2e-3, rtol=2e-3)
    assert jnp.allclose(img_feat, img_ref_f32, atol=6e-2, rtol=6e-2)
    assert jnp.array_equal(img_feat_mask, mask_ref)

    print("KERNEL_OK")
</pallas_src>

<mosaic_0001>
module attributes {stable_mosaic.version = 11 : i64} {
  func.func @vqa_adapter_kernel(%arg0: i32, %arg1: memref<96x256xf32, #tpu.memory_space<vmem>>, %arg2: memref<96x5xf32, #tpu.memory_space<vmem>>, %arg3: memref<5x128xf32, #tpu.memory_space<vmem>>, %arg4: memref<256x128xbf16, #tpu.memory_space<vmem>>, %arg5: memref<128x128xbf16, #tpu.memory_space<vmem>>, %arg6: memref<1x128xf32, #tpu.memory_space<vmem>>, %arg7: memref<96x128xf32, #tpu.memory_space<vmem>>, %arg8: memref<96x1xf32, #tpu.memory_space<vmem>>) attributes {dimension_semantics = [#tpu.dimension_semantics<parallel>], iteration_bounds = array<i64: 2>, scalar_prefetch = 0 : i64, scratch_operands = 0 : i64, tpu.core_type = #tpu.core_type<tc>, window_params = [{transform_indices = @transform_0, window_bounds = array<i64: 96, 256>}, {transform_indices = @transform_1, window_bounds = array<i64: 96, 5>}, {pipeline_mode = #tpu.pipeline_mode<synchronous>, transform_indices = @transform_2, window_bounds = array<i64: 5, 128>}, {pipeline_mode = #tpu.pipeline_mode<synchronous>, transform_indices = @transform_3, window_bounds = array<i64: 256, 128>}, {pipeline_mode = #tpu.pipeline_mode<synchronous>, transform_indices = @transform_4, window_bounds = array<i64: 128, 128>}, {pipeline_mode = #tpu.pipeline_mode<synchronous>, transform_indices = @transform_5, window_bounds = array<i64: 1, 128>}, {transform_indices = @transform_6, window_bounds = array<i64: 96, 128>}, {transform_indices = @transform_7, window_bounds = array<i64: 96, 1>}]} {
    %c0 = arith.constant 0 : index
    %c0_0 = arith.constant 0 : index
    %0 = vector.load %arg1[%c0, %c0_0] : memref<96x256xf32, #tpu.memory_space<vmem>>, vector<96x256xf32>
    %1 = arith.truncf %0 : vector<96x256xf32> to vector<96x256xbf16>
    %c0_1 = arith.constant 0 : index
    %c0_2 = arith.constant 0 : index
    %2 = vector.load %arg4[%c0_1, %c0_2] : memref<256x128xbf16, #tpu.memory_space<vmem>>, vector<256x128xbf16>
    %cst = arith.constant dense<0.000000e+00> : vector<96x128xf32>
    %3 = tpu.matmul %1, %2, %cst {dimension_numbers = #tpu.dot_dimension_numbers<[1], [0], [0], [1], [0, 0, 1, 1], [], []>} : vector<96x256xbf16>, vector<256x128xbf16>, vector<96x128xf32> -> vector<96x128xf32>
    %4 = math.absf %0 : vector<96x256xf32>
    %cst_3 = arith.constant dense<0.000000e+00> : vector<96xf32>
    %5 = vector.multi_reduction <add>, %4, %cst_3 [1] : vector<96x256xf32> to vector<96xf32>
    %6 = vector.shape_cast %5 : vector<96xf32> to vector<96x1xf32>
    %c0_4 = arith.constant 0 : index
    %c0_5 = arith.constant 0 : index
    %7 = vector.load %arg8[%c0_4, %c0_5] : memref<96x1xf32, #tpu.memory_space<vmem>>, vector<96x1xf32>
    tpu.vector_store %arg8[%c0_4, %c0_5], %6 {strides = array<i32>} : memref<96x1xf32, #tpu.memory_space<vmem>>, vector<96x1xf32>,
    %c0_6 = arith.constant 0 : index
    %c0_7 = arith.constant 0 : index
    %8 = vector.load %arg2[%c0_6, %c0_7] : memref<96x5xf32, #tpu.memory_space<vmem>>, vector<96x5xf32>
    %9 = vector.extract_strided_slice %8 {offsets = [0, 0], sizes = [96, 1], strides = [1, 1]} : vector<96x5xf32> to vector<96x1xf32>
    %c0_8 = arith.constant 0 : index
    %c0_9 = arith.constant 0 : index
    %10 = vector.load %arg3[%c0_8, %c0_9] : memref<5x128xf32, #tpu.memory_space<vmem>>, vector<1x128xf32>
    %11 = vector.broadcast %9 : vector<96x1xf32> to vector<96x128xf32>
    %12 = vector.broadcast %10 : vector<1x128xf32> to vector<96x128xf32>
    %13 = arith.mulf %11, %12 : vector<96x128xf32>
    %14 = vector.extract_strided_slice %8 {offsets = [0, 1], sizes = [96, 1], strides = [1, 1]} : vector<96x5xf32> to vector<96x1xf32>
    %c1 = arith.constant 1 : index
    %c0_10 = arith.constant 0 : index
    %15 = vector.load %arg3[%c1, %c0_10] : memref<5x128xf32, #tpu.memory_space<vmem>>, vector<1x128xf32>
    %16 = vector.broadcast %14 : vector<96x1xf32> to vector<96x128xf32>
    %17 = vector.broadcast %15 : vector<1x128xf32> to vector<96x128xf32>
    %18 = arith.mulf %16, %17 : vector<96x128xf32>
    %19 = arith.addf %13, %18 : vector<96x128xf32>
    %20 = vector.extract_strided_slice %8 {offsets = [0, 2], sizes = [96, 1], strides = [1, 1]} : vector<96x5xf32> to vector<96x1xf32>
    %c2 = arith.constant 2 : index
    %c0_11 = arith.constant 0 : index
    %21 = vector.load %arg3[%c2, %c0_11] : memref<5x128xf32, #tpu.memory_space<vmem>>, vector<1x128xf32>
    %22 = vector.broadcast %20 : vector<96x1xf32> to vector<96x128xf32>
    %23 = vector.broadcast %21 : vector<1x128xf32> to vector<96x128xf32>
    %24 = arith.mulf %22, %23 : vector<96x128xf32>
    %25 = arith.addf %19, %24 : vector<96x128xf32>
    %26 = vector.extract_strided_slice %8 {offsets = [0, 3], sizes = [96, 1], strides = [1, 1]} : vector<96x5xf32> to vector<96x1xf32>
    %c3 = arith.constant 3 : index
    %c0_12 = arith.constant 0 : index
    %27 = vector.load %arg3[%c3, %c0_12] : memref<5x128xf32, #tpu.memory_space<vmem>>, vector<1x128xf32>
    %28 = vector.broadcast %26 : vector<96x1xf32> to vector<96x128xf32>
    %29 = vector.broadcast %27 : vector<1x128xf32> to vector<96x128xf32>
    %30 = arith.mulf %28, %29 : vector<96x128xf32>
    %31 = arith.addf %25, %30 : vector<96x128xf32>
    %32 = vector.extract_strided_slice %8 {offsets = [0, 4], sizes = [96, 1], strides = [1, 1]} : vector<96x5xf32> to vector<96x1xf32>
    %c4 = arith.constant 4 : index
    %c0_13 = arith.constant 0 : index
    %33 = vector.load %arg3[%c4, %c0_13] : memref<5x128xf32, #tpu.memory_space<vmem>>, vector<1x128xf32>
    %34 = vector.broadcast %32 : vector<96x1xf32> to vector<96x128xf32>
    %35 = vector.broadcast %33 : vector<1x128xf32> to vector<96x128xf32>
    %36 = arith.mulf %34, %35 : vector<96x128xf32>
    %37 = arith.addf %31, %36 : vector<96x128xf32>
    %38 = arith.truncf %37 : vector<96x128xf32> to vector<96x128xbf16>
    %c0_14 = arith.constant 0 : index
    %c0_15 = arith.constant 0 : index
    %39 = vector.load %arg5[%c0_14, %c0_15] : memref<128x128xbf16, #tpu.memory_space<vmem>>, vector<128x128xbf16>
    %cst_16 = arith.constant dense<0.000000e+00> : vector<96x128xf32>
    %40 = tpu.matmul %38, %39, %cst_16 {dimension_numbers = #tpu.dot_dimension_numbers<[1], [0], [0], [1], [0, 0, 1, 1], [], []>} : vector<96x128xbf16>, vector<128x128xbf16>, vector<96x128xf32> -> vector<96x128xf32>
    %41 = arith.addf %3, %40 : vector<96x128xf32>
    %c0_17 = arith.constant 0 : index
    %c0_18 = arith.constant 0 : index
    %42 = vector.load %arg6[%c0_17, %c0_18] : memref<1x128xf32, #tpu.memory_space<vmem>>, vector<1x128xf32>
    %43 = vector.broadcast %42 : vector<1x128xf32> to vector<96x128xf32>
    %44 = arith.addf %41, %43 : vector<96x128xf32>
    %c0_19 = arith.constant 0 : index
    %c0_20 = arith.constant 0 : index
    %45 = vector.load %arg7[%c0_19, %c0_20] : memref<96x128xf32, #tpu.memory_space<vmem>>, vector<96x128xf32>
    tpu.vector_store %arg7[%c0_19, %c0_20], %44 {strides = array<i32>} : memref<96x128xf32, #tpu.memory_space<vmem>>, vector<96x128xf32>,
    return
  }
  func.func @transform_0(%arg0: i32) -> (i32, i32) {
    %c0_i32 = arith.constant 0 : i32
    %c0_i32_0 = arith.constant 0 : i32
    return %arg0, %c0_i32 : i32, i32
  }
  func.func @transform_1(%arg0: i32) -> (i32, i32) {
    %c0_i32 = arith.constant 0 : i32
    %c0_i32_0 = arith.constant 0 : i32
    return %arg0, %c0_i32 : i32, i32
  }
  func.func @transform_2(%arg0: i32) -> (i32, i32) {
    %c0_i32 = arith.constant 0 : i32
    %c0_i32_0 = arith.constant 0 : i32
    %c0_i32_1 = arith.constant 0 : i32
    return %c0_i32, %c0_i32_0 : i32, i32
  }
  func.func @transform_3(%arg0: i32) -> (i32, i32) {
    %c0_i32 = arith.constant 0 : i32
    %c0_i32_0 = arith.constant 0 : i32
    %c0_i32_1 = arith.constant 0 : i32
    return %c0_i32, %c0_i32_0 : i32, i32
  }
  func.func @transform_4(%arg0: i32) -> (i32, i32) {
    %c0_i32 = arith.constant 0 : i32
    %c0_i32_0 = arith.constant 0 : i32
    %c0_i32_1 = arith.constant 0 : i32
    return %c0_i32, %c0_i32_0 : i32, i32
  }
  func.func @transform_5(%arg0: i32) -> (i32, i32) {
    %c0_i32 = arith.constant 0 : i32
    %c0_i32_0 = arith.constant 0 : i32
    %c0_i32_1 = arith.constant 0 : i32
    return %c0_i32, %c0_i32_0 : i32, i32
  }
  func.func @transform_6(%arg0: i32) -> (i32, i32) {
    %c0_i32 = arith.constant 0 : i32
    %c0_i32_0 = arith.constant 0 : i32
    return %arg0, %c0_i32 : i32, i32
  }
  func.func @transform_7(%arg0: i32) -> (i32, i32) {
    %c0_i32 = arith.constant 0 : i32
    %c0_i32_0 = arith.constant 0 : i32
    return %arg0, %c0_i32 : i32, i32
  }
}

module attributes {stable_mosaic.version = 11 : i64} {
  func.func @vqa_adapter_kernel(%arg0: i32, %arg1: memref<96x256xf32, #tpu.memory_space<vmem>>, %arg2: memref<96x5xf32, #tpu.memory_space<vmem>>, %arg3: memref<5x128xf32, #tpu.memory_space<vmem>>, %arg4: memref<256x128xbf16, #tpu.memory_space<vmem>>, %arg5: memref<128x128xbf16, #tpu.memory_space<vmem>>, %arg6: memref<1x128xf32, #tpu.memory_space<vmem>>, %arg7: memref<96x128xf32, #tpu.memory_space<vmem>>, %arg8: memref<96x1xf32, #tpu.memory_space<vmem>>) attributes {dimension_semantics = [#tpu.dimension_semantics<parallel>], iteration_bounds = array<i64: 2>, scalar_prefetch = 0 : i64, scratch_operands = 0 : i64, tpu.core_type = #tpu.core_type<tc>, window_params = [{transform_indices = @transform_0, window_bounds = array<i64: 96, 256>}, {transform_indices = @transform_1, window_bounds = array<i64: 96, 5>}, {pipeline_mode = #tpu.pipeline_mode<synchronous>, transform_indices = @transform_2, window_bounds = array<i64: 5, 128>}, {pipeline_mode = #tpu.pipeline_mode<synchronous>, transform_indices = @transform_3, window_bounds = array<i64: 256, 128>}, {pipeline_mode = #tpu.pipeline_mode<synchronous>, transform_indices = @transform_4, window_bounds = array<i64: 128, 128>}, {pipeline_mode = #tpu.pipeline_mode<synchronous>, transform_indices = @transform_5, window_bounds = array<i64: 1, 128>}, {transform_indices = @transform_6, window_bounds = array<i64: 96, 128>}, {transform_indices = @transform_7, window_bounds = array<i64: 96, 1>}]} {
    %c0 = arith.constant 0 : index
    %c0_0 = arith.constant 0 : index
    %0 = vector.load %arg1[%c0, %c0_0] : memref<96x256xf32, #tpu.memory_space<vmem>>, vector<96x256xf32>
    %1 = arith.truncf %0 : vector<96x256xf32> to vector<96x256xbf16>
    %c0_1 = arith.constant 0 : index
    %c0_2 = arith.constant 0 : index
    %2 = vector.load %arg4[%c0_1, %c0_2] : memref<256x128xbf16, #tpu.memory_space<vmem>>, vector<256x128xbf16>
    %cst = arith.constant dense<0.000000e+00> : vector<96x128xf32>
    %3 = tpu.matmul %1, %2, %cst {dimension_numbers = #tpu.dot_dimension_numbers<[1], [0], [0], [1], [0, 0, 1, 1], [], []>} : vector<96x256xbf16>, vector<256x128xbf16>, vector<96x128xf32> -> vector<96x128xf32>
    %4 = math.absf %0 : vector<96x256xf32>
    %cst_3 = arith.constant dense<0.000000e+00> : vector<96xf32>
    %5 = vector.multi_reduction <add>, %4, %cst_3 [1] : vector<96x256xf32> to vector<96xf32>
    %6 = vector.shape_cast %5 : vector<96xf32> to vector<96x1xf32>
    %c0_4 = arith.constant 0 : index
    %c0_5 = arith.constant 0 : index
    %7 = vector.load %arg8[%c0_4, %c0_5] : memref<96x1xf32, #tpu.memory_space<vmem>>, vector<96x1xf32>
    tpu.vector_store %arg8[%c0_4, %c0_5], %6 {strides = array<i32>} : memref<96x1xf32, #tpu.memory_space<vmem>>, vector<96x1xf32>,
    %c0_6 = arith.constant 0 : index
    %c0_7 = arith.constant 0 : index
    %8 = vector.load %arg2[%c0_6, %c0_7] : memref<96x5xf32, #tpu.memory_space<vmem>>, vector<96x5xf32>
    %9 = vector.extract_strided_slice %8 {offsets = [0, 0], sizes = [96, 1], strides = [1, 1]} : vector<96x5xf32> to vector<96x1xf32>
    %c0_8 = arith.constant 0 : index
    %c0_9 = arith.constant 0 : index
    %10 = vector.load %arg3[%c0_8, %c0_9] : memref<5x128xf32, #tpu.memory_space<vmem>>, vector<1x128xf32>
    %11 = vector.broadcast %9 : vector<96x1xf32> to vector<96x128xf32>
    %12 = vector.broadcast %10 : vector<1x128xf32> to vector<96x128xf32>
    %13 = arith.mulf %11, %12 : vector<96x128xf32>
    %14 = vector.extract_strided_slice %8 {offsets = [0, 1], sizes = [96, 1], strides = [1, 1]} : vector<96x5xf32> to vector<96x1xf32>
    %c1 = arith.constant 1 : index
    %c0_10 = arith.constant 0 : index
    %15 = vector.load %arg3[%c1, %c0_10] : memref<5x128xf32, #tpu.memory_space<vmem>>, vector<1x128xf32>
    %16 = vector.broadcast %14 : vector<96x1xf32> to vector<96x128xf32>
    %17 = vector.broadcast %15 : vector<1x128xf32> to vector<96x128xf32>
    %18 = arith.mulf %16, %17 : vector<96x128xf32>
    %19 = arith.addf %13, %18 : vector<96x128xf32>
    %20 = vector.extract_strided_slice %8 {offsets = [0, 2], sizes = [96, 1], strides = [1, 1]} : vector<96x5xf32> to vector<96x1xf32>
    %c2 = arith.constant 2 : index
    %c0_11 = arith.constant 0 : index
    %21 = vector.load %arg3[%c2, %c0_11] : memref<5x128xf32, #tpu.memory_space<vmem>>, vector<1x128xf32>
    %22 = vector.broadcast %20 : vector<96x1xf32> to vector<96x128xf32>
    %23 = vector.broadcast %21 : vector<1x128xf32> to vector<96x128xf32>
    %24 = arith.mulf %22, %23 : vector<96x128xf32>
    %25 = arith.addf %19, %24 : vector<96x128xf32>
    %26 = vector.extract_strided_slice %8 {offsets = [0, 3], sizes = [96, 1], strides = [1, 1]} : vector<96x5xf32> to vector<96x1xf32>
    %c3 = arith.constant 3 : index
    %c0_12 = arith.constant 0 : index
    %27 = vector.load %arg3[%c3, %c0_12] : memref<5x128xf32, #tpu.memory_space<vmem>>, vector<1x128xf32>
    %28 = vector.broadcast %26 : vector<96x1xf32> to vector<96x128xf32>
    %29 = vector.broadcast %27 : vector<1x128xf32> to vector<96x128xf32>
    %30 = arith.mulf %28, %29 : vector<96x128xf32>
    %31 = arith.addf %25, %30 : vector<96x128xf32>
    %32 = vector.extract_strided_slice %8 {offsets = [0, 4], sizes = [96, 1], strides = [1, 1]} : vector<96x5xf32> to vector<96x1xf32>
    %c4 = arith.constant 4 : index
    %c0_13 = arith.constant 0 : index
    %33 = vector.load %arg3[%c4, %c0_13] : memref<5x128xf32, #tpu.memory_space<vmem>>, vector<1x128xf32>
    %34 = vector.broadcast %32 : vector<96x1xf32> to vector<96x128xf32>
    %35 = vector.broadcast %33 : vector<1x128xf32> to vector<96x128xf32>
    %36 = arith.mulf %34, %35 : vector<96x128xf32>
    %37 = arith.addf %31, %36 : vector<96x128xf32>
    %38 = arith.truncf %37 : vector<96x128xf32> to vector<96x128xbf16>
    %c0_14 = arith.constant 0 : index
    %c0_15 = arith.constant 0 : index
    %39 = vector.load %arg5[%c0_14, %c0_15] : memref<128x128xbf16, #tpu.memory_space<vmem>>, vector<128x128xbf16>
    %cst_16 = arith.constant dense<0.000000e+00> : vector<96x128xf32>
    %40 = tpu.matmul %38, %39, %cst_16 {dimension_numbers = #tpu.dot_dimension_numbers<[1], [0], [0], [1], [0, 0, 1, 1], [], []>} : vector<96x128xbf16>, vector<128x128xbf16>, vector<96x128xf32> -> vector<96x128xf32>
    %41 = arith.addf %3, %40 : vector<96x128xf32>
    %c0_17 = arith.constant 0 : index
    %c0_18 = arith.constant 0 : index
    %42 = vector.load %arg6[%c0_17, %c0_18] : memref<1x128xf32, #tpu.memory_space<vmem>>, vector<1x128xf32>
    %43 = vector.broadcast %42 : vector<1x128xf32> to vector<96x128xf32>
    %44 = arith.addf %41, %43 : vector<96x128xf32>
    %c0_19 = arith.constant 0 : index
    %c0_20 = arith.constant 0 : index
    %45 = vector.load %arg7[%c0_19, %c0_20] : memref<96x128xf32, #tpu.memory_space<vmem>>, vector<96x128xf32>
    tpu.vector_store %arg7[%c0_19, %c0_20], %44 {strides = array<i32>} : memref<96x128xf32, #tpu.memory_space<vmem>>, vector<96x128xf32>,
    return
  }
  func.func @transform_0(%arg0: i32) -> (i32, i32) {
    %c0_i32 = arith.constant 0 : i32
    %c0_i32_0 = arith.constant 0 : i32
    return %arg0, %c0_i32 : i32, i32
  }
  func.func @transform_1(%arg0: i32) -> (i32, i32) {
    %c0_i32 = arith.constant 0 : i32
    %c0_i32_0 = arith.constant 0 : i32
    return %arg0, %c0_i32 : i32, i32
  }
  func.func @transform_2(%arg0: i32) -> (i32, i32) {
    %c0_i32 = arith.constant 0 : i32
    %c0_i32_0 = arith.constant 0 : i32
    %c0_i32_1 = arith.constant 0 : i32
    return %c0_i32, %c0_i32_0 : i32, i32
  }
  func.func @transform_3(%arg0: i32) -> (i32, i32) {
    %c0_i32 = arith.constant 0 : i32
    %c0_i32_0 = arith.constant 0 : i32
    %c0_i32_1 = arith.constant 0 : i32
    return %c0_i32, %c0_i32_0 : i32, i32
  }
  func.func @transform_4(%arg0: i32) -> (i32, i32) {
    %c0_i32 = arith.constant 0 : i32
    %c0_i32_0 = arith.constant 0 : i32
    %c0_i32_1 = arith.constant 0 : i32
    return %c0_i32, %c0_i32_0 : i32, i32
  }
  func.func @transform_5(%arg0: i32) -> (i32, i32) {
    %c0_i32 = arith.constant 0 : i32
    %c0_i32_0 = arith.constant 0 : i32
    %c0_i32_1 = arith.constant 0 : i32
    return %c0_i32, %c0_i32_0 : i32, i32
  }
  func.func @transform_6(%arg0: i32) -> (i32, i32) {
    %c0_i32 = arith.constant 0 : i32
    %c0_i32_0 = arith.constant 0 : i32
    return %arg0, %c0_i32 : i32, i32
  }
  func.func @transform_7(%arg0: i32) -> (i32, i32) {
    %c0_i32 = arith.constant 0 : i32
    %c0_i32_0 = arith.constant 0 : i32
    return %arg0, %c0_i32 : i32, i32
  }
}

</mosaic_0001>

<llo_original>
// kernel: tpu_custom_call.1
$region0: #{tpu_custom_call.1}
  #allocation0 [shape = 'u32[]', space=smem, size = 0x4, offset = 0x4, fixed_abs, tag = 'smem constant byte address 0x4 - core index']
  #allocation1 [shape = 'u32[144,128]{1,0:T(1,128)}', space=vmem, size = 0x12000, scoped, tag = 'internal scratch']
  %s0 = inlined_call_operand.hbm [shape: f32[100,256], index: 0, kind: input, shape index: {}]
  %s1 = inlined_call_operand.vmem [shape: f32[100,5], index: 1, kind: input, shape index: {}]
  %s2 = inlined_call_operand.vmem [shape: f32[5,128], index: 2, kind: input, shape index: {}]
  %s3 = inlined_call_operand.hbm [shape: bf16[256,128], index: 3, kind: input, shape index: {}]
  %s4 = inlined_call_operand.vmem [shape: bf16[128,128], index: 4, kind: input, shape index: {}]
  %s5 = inlined_call_operand.vmem [shape: f32[1,128], index: 5, kind: input, shape index: {}]
  %s6 = inlined_call_operand.hbm [shape: f32[100,128], index: 6, kind: output, shape index: {0}]
  %s7 = inlined_call_operand.vmem [shape: f32[100,1], index: 7, kind: output, shape index: {1}]
  %8 = xla_tuple %s6, %s7
  %s9 = sld [smem:[#allocation0]]
  $region121: #{tpu_custom_call.1} parent=0
    _
  %s11 = ssub.s32 1, %s9
  %s12 = scalar_select 0, %s11, %s9
  $region1: #{tpu_custom_call.1} parent=0
    #allocation2 [shape = 'u8[196608]{0}', space=vmem, size = 0x30000, scoped, tag = 'input window, operand 0']
    #allocation3 [shape = 's32[2]{0}', space=sflag, size = 0x8, scoped, tag = 'scoped memory for tpu_custom_call.1']
    #allocation4 [shape = 's32[2]{0}', space=sflag, size = 0x8, scoped, tag = 'scoped memory for tpu_custom_call.1']
    #allocation5 [shape = 'u8[65536]{0}', space=vmem, size = 0x10000, scoped, tag = 'input window, operand 3, single buffered']
    #allocation6 [shape = 's32[1]{0}', space=sflag, size = 0x4, scoped, tag = 'scoped memory for tpu_custom_call.1']
    #allocation7 [shape = 'u8[98304]{0}', space=vmem, size = 0x18000, scoped, tag = 'output window, operand 0']
    #allocation8 [shape = 'u8[98304]{0}', space=vmem, size = 0x18000, scoped, tag = 'output window, operand 1']
    %13 = vsyncpa [#allocation3], 0
    %s14 = scalar_lea.sflag [#allocation3], 1
    %15 = vsyncpa %s14, 0
    %16 = vsyncpa [#allocation6], 0
    %17 = vsyncpa [#allocation4], 0
    %s18 = scalar_lea.sflag [#allocation4], 1
    %19 = vsyncpa %s18, 0
    loop: start=0, step=1, limit=4
    $region2: #{tpu_custom_call.1} parent=1 // loop_pre_header
      _
    $region3: #{tpu_custom_call.1} parent=1 // loop_header
      %s21 = sphi 0, %s25
      %p22 = scmp.ge.s32.totalorder %s21, 4
      %s31 = sphi 0, %s33
      %s34 = sphi 0, %s31
      %s35 = sphi 0, %s34
      %s51 = sphi 0, %s35
      %s57 = sphi 0, %s59
      %s60 = sphi 0, %s57
      %s61 = sphi 0, %s60
      %s77 = sphi 0, %s61
      %s81 = sphi 0, %s81
      %s83 = sphi 0, %s81
      %s84 = sphi 0, %s83
      %s98 = sphi 0, %s84
      %s102 = sphi 0, %s102
      %s104 = sphi 0, %s102
      %s105 = sphi 0, %s104
      %s119 = sphi 0, %s105
      %s123 = sphi 0, %s123
      %s125 = sphi 0, %s123
      %s126 = sphi 0, %s125
      %s140 = sphi 0, %s126
      %s144 = sphi 0, %s144
      %s146 = sphi 0, %s144
      %s147 = sphi 0, %s146
      %s161 = sphi 0, %s147
      %s167 = sphi 0, %s169
      %s170 = sphi 0, %s167
      %s171 = sphi 0, %s170
      %s187 = sphi 0, %s171
      %s193 = sphi 0, %s195
      %s196 = sphi 0, %s193
      %s197 = sphi 0, %s196
      %s213 = sphi 0, %s197
    $region4: #{tpu_custom_call.1} parent=1 // loop_header_branch
      %24 = sbr.rel (%p22) target = $region8
    $region5: #{tpu_custom_call.1} parent=1 // loop_body
      %s26 = ssub.s32 %s21, 1
      %s27 = ssub.s32 %s21, 2
      %s28 = sadd.s32 %s21, 1
      %s29 = ssub.s32 %s21, %s28
      %p30 = scmp.eq.s32.totalorder %s29, 0
      %s32 = sadd.s32 %s31, 1
      %s33 = scalar_select %p30, %s31, %s32
      %p36 = pneg %p30
      %p37 = scmp.eq.s32.totalorder %s21, 1
      %p38 = por %p36, %p37
      %p39 = scmp.ne.s32.totalorder %s31, %s34
      %p40 = scmp.eq.s32.totalorder %s21, 0
      %p41 = por %p39, %p40
      %p42 = scmp.ne.s32.totalorder %s31, %s34
      %p43 = scmp.eq.s32.totalorder %s26, 1
      %p44 = por %p42, %p43
      %p45 = scmp.ne.s32.totalorder %s34, %s35
      %p46 = scmp.eq.s32.totalorder %s26, 0
      %p47 = por %p45, %p46
      %p48 = scmp.ne.s32.totalorder %s34, %s35
      %p49 = scmp.eq.s32.totalorder %s27, 1
      %p50 = por %p48, %p49
      %p52 = scmp.ne.s32.totalorder %s35, %s51
      %p53 = scmp.eq.s32.totalorder %s27, 0
      %p54 = por %p52, %p53
      %s55 = ssub.s32 %s21, %s28
      %p56 = scmp.eq.s32.totalorder %s55, 0
      %s58 = sadd.s32 %s57, 1
      %s59 = scalar_select %p56, %s57, %s58
      %p62 = pneg %p56
      %p63 = scmp.eq.s32.totalorder %s21, 1
      %p64 = por %p62, %p63
      %p65 = scmp.ne.s32.totalorder %s57, %s60
      %p66 = scmp.eq.s32.totalorder %s21, 0
      %p67 = por %p65, %p66
      %p68 = scmp.ne.s32.totalorder %s57, %s60
      %p69 = scmp.eq.s32.totalorder %s26, 1
      %p70 = por %p68, %p69
      %p71 = scmp.ne.s32.totalorder %s60, %s61
      %p72 = scmp.eq.s32.totalorder %s26, 0
      %p73 = por %p71, %p72
      %p74 = scmp.ne.s32.totalorder %s60, %s61
      %p75 = scmp.eq.s32.totalorder %s27, 1
      %p76 = por %p74, %p75
      %p78 = scmp.ne.s32.totalorder %s61, %s77
      %p79 = scmp.eq.s32.totalorder %s27, 0
      %p80 = por %p78, %p79
      %s82 = sadd.s32 %s81, 1
      %p85 = scmp.eq.s32.totalorder %s21, 1
      %p86 = scmp.ne.s32.totalorder %s81, %s83
      %p87 = scmp.eq.s32.totalorder %s21, 0
      %p88 = por %p86, %p87
      %p89 = scmp.ne.s32.totalorder %s81, %s83
      %p90 = scmp.eq.s32.totalorder %s26, 1
      %p91 = por %p89, %p90
      %p92 = scmp.ne.s32.totalorder %s83, %s84
      %p93 = scmp.eq.s32.totalorder %s26, 0
      %p94 = por %p92, %p93
      %p95 = scmp.ne.s32.totalorder %s83, %s84
      %p96 = scmp.eq.s32.totalorder %s27, 1
      %p97 = por %p95, %p96
      %p99 = scmp.ne.s32.totalorder %s84, %s98
      %p100 = scmp.eq.s32.totalorder %s27, 0
      %p101 = por %p99, %p100
      %s103 = sadd.s32 %s102, 1
      %p106 = scmp.eq.s32.totalorder %s21, 1
      %p107 = scmp.ne.s32.totalorder %s102, %s104
      %p108 = scmp.eq.s32.totalorder %s21, 0
      %p109 = por %p107, %p108
      %p110 = scmp.ne.s32.totalorder %s102, %s104
      %p111 = scmp.eq.s32.totalorder %s26, 1
      %p112 = por %p110, %p111
      %p113 = scmp.ne.s32.totalorder %s104, %s105
      %p114 = scmp.eq.s32.totalorder %s26, 0
      %p115 = por %p113, %p114
      %p116 = scmp.ne.s32.totalorder %s104, %s105
      %p117 = scmp.eq.s32.totalorder %s27, 1
      %p118 = por %p116, %p117
      %p120 = scmp.ne.s32.totalorder %s105, %s119
      %p121 = scmp.eq.s32.totalorder %s27, 0
      %p122 = por %p120, %p121
      %s124 = sadd.s32 %s123, 1
      %p127 = scmp.eq.s32.totalorder %s21, 1
      %p128 = scmp.ne.s32.totalorder %s123, %s125
      %p129 = scmp.eq.s32.totalorder %s21, 0
      %p130 = por %p128, %p129
      %p131 = scmp.ne.s32.totalorder %s123, %s125
      %p132 = scmp.eq.s32.totalorder %s26, 1
      %p133 = por %p131, %p132
      %p134 = scmp.ne.s32.totalorder %s125, %s126
      %p135 = scmp.eq.s32.totalorder %s26, 0
      %p136 = por %p134, %p135
      %p137 = scmp.ne.s32.totalorder %s125, %s126
      %p138 = scmp.eq.s32.totalorder %s27, 1
      %p139 = por %p137, %p138
      %p141 = scmp.ne.s32.totalorder %s126, %s140
      %p142 = scmp.eq.s32.totalorder %s27, 0
      %p143 = por %p141, %p142
      %s145 = sadd.s32 %s144, 1
      %p148 = scmp.eq.s32.totalorder %s21, 1
      %p149 = scmp.ne.s32.totalorder %s144, %s146
      %p150 = scmp.eq.s32.totalorder %s21, 0
      %p151 = por %p149, %p150
      %p152 = scmp.ne.s32.totalorder %s144, %s146
      %p153 = scmp.eq.s32.totalorder %s26, 1
      %p154 = por %p152, %p153
      %p155 = scmp.ne.s32.totalorder %s146, %s147
      %p156 = scmp.eq.s32.totalorder %s26, 0
      %p157 = por %p155, %p156
      %p158 = scmp.ne.s32.totalorder %s146, %s147
      %p159 = scmp.eq.s32.totalorder %s27, 1
      %p160 = por %p158, %p159
      %p162 = scmp.ne.s32.totalorder %s147, %s161
      %p163 = scmp.eq.s32.totalorder %s27, 0
      %p164 = por %p162, %p163
      %s165 = ssub.s32 %s21, %s28
      %p166 = scmp.eq.s32.totalorder %s165, 0
      %s168 = sadd.s32 %s167, 1
      %s169 = scalar_select %p166, %s167, %s168
      %p172 = pneg %p166
      %p173 = scmp.eq.s32.totalorder %s21, 1
      %p174 = por %p172, %p173
      %p175 = scmp.ne.s32.totalorder %s167, %s170
      %p176 = scmp.eq.s32.totalorder %s21, 0
      %p177 = por %p175, %p176
      %p178 = scmp.ne.s32.totalorder %s167, %s170
      %p179 = scmp.eq.s32.totalorder %s26, 1
      %p180 = por %p178, %p179
      %p181 = scmp.ne.s32.totalorder %s170, %s171
      %p182 = scmp.eq.s32.totalorder %s26, 0
      %p183 = por %p181, %p182
      %p184 = scmp.ne.s32.totalorder %s170, %s171
      %p185 = scmp.eq.s32.totalorder %s27, 1
      %p186 = por %p184, %p185
      %p188 = scmp.ne.s32.totalorder %s171, %s187
      %p189 = scmp.eq.s32.totalorder %s27, 0
      %p190 = por %p188, %p189
      %s191 = ssub.s32 %s21, %s28
      %p192 = scmp.eq.s32.totalorder %s191, 0
      %s194 = sadd.s32 %s193, 1
      %s195 = scalar_select %p192, %s193, %s194
      %p198 = pneg %p192
      %p199 = scmp.eq.s32.totalorder %s21, 1
      %p200 = por %p198, %p199
      %p201 = scmp.ne.s32.totalorder %s193, %s196
      %p202 = scmp.eq.s32.totalorder %s21, 0
      %p203 = por %p201, %p202
      %p204 = scmp.ne.s32.totalorder %s193, %s196
      %p205 = scmp.eq.s32.totalorder %s26, 1
      %p206 = por %p204, %p205
      %p207 = scmp.ne.s32.totalorder %s196, %s197
      %p208 = scmp.eq.s32.totalorder %s26, 0
      %p209 = por %p207, %p208
      %p210 = scmp.ne.s32.totalorder %s196, %s197
      %p211 = scmp.eq.s32.totalorder %s27, 1
      %p212 = por %p210, %p211
      %p214 = scmp.ne.s32.totalorder %s197, %s213
      %p215 = scmp.eq.s32.totalorder %s27, 0
      %p216 = por %p214, %p215
      %p217 = scmp.le.s32.totalorder 1, %s21
      %p218 = scmp.lt.s32.totalorder %s21, 3
      %p219 = pnand %p217, %p218
      %p220 = pneg %p219
      // Predicated region
      $region9: #{tpu_custom_call.1} parent=5 // pred_check
        _
      $region10: #{tpu_custom_call.1} parent=5 // pred_check_branch
        %222 = sbr.rel (%p219) target = $region12
      $region11: #{tpu_custom_call.1} parent=5 // pred_region
        %s223 = ssub.s32 %s21, 1
        // Predicated region
        $region13: #{tpu_custom_call.1} parent=11 // pred_check
          %p224 = pneg %p94
        $region14: #{tpu_custom_call.1} parent=11 // pred_check_branch
          %226 = sbr.rel (%p224) target = $region16
        $region15: #{tpu_custom_call.1} parent=11 // pred_region
          _
        $region16: #{tpu_custom_call.1} parent=11 // pred_fallthru
          _
        // Predicated region
        $region17: #{tpu_custom_call.1} parent=11 // pred_check
          %p227 = pneg %p115
        $region18: #{tpu_custom_call.1} parent=11 // pred_check_branch
          %229 = sbr.rel (%p227) target = $region20
        $region19: #{tpu_custom_call.1} parent=11 // pred_region
          %s231 = ssub.s32 2048, 2048
          %232 = vsyncadd [#allocation6], %s231
          %s233 = sshll.u32 [#allocation5], 4
          %s234 = int_to_ptr.vmem [resolvable:$true] %s233
          %239 = dma.hbm_to_vmem [thread:$0]  %s3, 2048, %s234, [#allocation6], 64, 64, 4
        $region20: #{tpu_custom_call.1} parent=11 // pred_fallthru
          _
        // Predicated region
        $region21: #{tpu_custom_call.1} parent=11 // pred_check
          %p240 = pneg %p136
        $region22: #{tpu_custom_call.1} parent=11 // pred_check_branch
          %242 = sbr.rel (%p240) target = $region24
        $region23: #{tpu_custom_call.1} parent=11 // pred_region
          _
        $region24: #{tpu_custom_call.1} parent=11 // pred_fallthru
          _
        // Predicated region
        $region25: #{tpu_custom_call.1} parent=11 // pred_check
          %p243 = pneg %p157
        $region26: #{tpu_custom_call.1} parent=11 // pred_check_branch
          %245 = sbr.rel (%p243) target = $region28
        $region27: #{tpu_custom_call.1} parent=11 // pred_region
          _
        $region28: #{tpu_custom_call.1} parent=11 // pred_fallthru
          _
      $region12: #{tpu_custom_call.1} parent=5 // pred_fallthru
        _
      %p246 = scmp.lt.s32.totalorder %s21, 2
      // Predicated region
      $region29: #{tpu_custom_call.1} parent=5 // pred_check
        %p247 = pneg %p246
      $region30: #{tpu_custom_call.1} parent=5 // pred_check_branch
        %249 = sbr.rel (%p247) target = $region32
      $region31: #{tpu_custom_call.1} parent=5 // pred_region
        // Predicated region
        $region33: #{tpu_custom_call.1} parent=31 // pred_check
          %p250 = pneg %p41
        $region34: #{tpu_custom_call.1} parent=31 // pred_check_branch
          %252 = sbr.rel (%p250) target = $region36
        $region35: #{tpu_custom_call.1} parent=31 // pred_region
          %s253 = sand.u32 %s31, 1
          %s254 = scalar_lea.sflag [#allocation3], %s253
          %s255 = sand.u32 %s31, 1
          %s256 = smul.addr %s255, 192
          %s257 = scalar_lea.vmem [#allocation2], %s256
          %s258 = smul.u32 12, %s21
          %s259 = ssub.s32 13, %s258
          %p260 = scmp.lt.s32.totalorder %s259, 12
          %s261 = scalar_select %p260, %s259, 12
          %s262 = smul.u32 128, %s261
          %s263 = smul.u32 %s262, 2
          %s265 = ssub.s32 3072, %s263
          %266 = vsyncadd %s254, %s265
          %p267 = scmp.ne.s32.totalorder 0, %s263
          %s268 = smul.addr %s258, 2
          %s269 = smul.addr %s268, 128
          %s270 = scalar_lea.hbm %s0, %s269
          %s271 = smul.u32 16, %s261
          %s272 = sshll.u32 %s257, 4
          %s273 = int_to_ptr.vmem [resolvable:$true] %s272
          %s274 = sshll.u32 %s271, 4
          %278 = dma.hbm_to_vmem [thread:$0]  (%p267), %s270, %s274, %s273, %s254, 256, 256, 16
        $region36: #{tpu_custom_call.1} parent=31 // pred_fallthru
          _
        // Predicated region
        $region37: #{tpu_custom_call.1} parent=31 // pred_check
          %p279 = pneg %p67
        $region38: #{tpu_custom_call.1} parent=31 // pred_check_branch
          %281 = sbr.rel (%p279) target = $region40
        $region39: #{tpu_custom_call.1} parent=31 // pred_region
          %s282 = smul.u32 12, %s21
          %s283 = ssub.s32 13, %s282
          %p284 = scmp.lt.s32.totalorder %s283, 12
          %s285 = scalar_select %p284, %s283, 12
          %s286 = smul.u32 128, %s285
          %p287 = scmp.lt.s32.totalorder %s282, 12
          %s288 = scalar_select %p287, %s282, 12
          %s289 = smul.addr %s288, 8
          %s290 = scalar_lea.vmem %s1, %s289
          %s291 = smul.u32 12, %s21
          %s292 = ssub.s32 13, %s291
          %p293 = scmp.lt.s32.totalorder %s292, 12
          %s294 = scalar_select %p293, %s292, 12
          %s295 = smul.u32 128, %s294
        $region40: #{tpu_custom_call.1} parent=31 // pred_fallthru
          _
      $region32: #{tpu_custom_call.1} parent=5 // pred_fallthru
        _
      %p296 = scmp.le.s32.totalorder 1, %s21
      %p297 = scmp.lt.s32.totalorder %s21, 3
      %p298 = pnand %p296, %p297
      %p299 = pneg %p298
      // Predicated region
      $region41: #{tpu_custom_call.1} parent=5 // pred_check
        _
      $region42: #{tpu_custom_call.1} parent=5 // pred_check_branch
        %301 = sbr.rel (%p298) target = $region44
      $region43: #{tpu_custom_call.1} parent=5 // pred_region
        %s302 = ssub.s32 %s21, 1
        %s303 = sand.u32 %s34, 1
        %s304 = scalar_lea.sflag [#allocation3], %s303
        %s305 = sand.u32 %s34, 1
        %s306 = smul.addr %s305, 192
        %s307 = scalar_lea.vmem [#allocation2], %s306
        // Predicated region
        $region45: #{tpu_custom_call.1} parent=43 // pred_check
          %p308 = pneg %p47
        $region46: #{tpu_custom_call.1} parent=43 // pred_check_branch
          %310 = sbr.rel (%p308) target = $region48
        $region47: #{tpu_custom_call.1} parent=43 // pred_region
          %311 = dma.done %s304, 3072
        $region48: #{tpu_custom_call.1} parent=43 // pred_fallthru
          _
        // Predicated region
        $region49: #{tpu_custom_call.1} parent=43 // pred_check
          %p312 = pneg %p115
        $region50: #{tpu_custom_call.1} parent=43 // pred_check_branch
          %314 = sbr.rel (%p312) target = $region52
        $region51: #{tpu_custom_call.1} parent=43 // pred_region
          %315 = dma.done [#allocation6], 2048
        $region52: #{tpu_custom_call.1} parent=43 // pred_fallthru
          _
        %s316 = sand.u32 %s34, 1
        %s317 = scalar_lea.sflag [#allocation3], %s316
        %s318 = sand.u32 %s34, 1
        %s319 = smul.addr %s318, 192
        %s320 = scalar_lea.vmem [#allocation2], %s319
        %p321 = pneg %p47
        %p322 = pneg %p44
        %s323 = smul.u32 12, %s26
        %s324 = ssub.s32 13, %s323
        %p325 = scmp.lt.s32.totalorder %s324, 12
        %s326 = scalar_select %p325, %s324, 12
        %s327 = smul.u32 128, %s326
        %p328 = scmp.lt.s32.totalorder %s323, 12
        %s329 = scalar_select %p328, %s323, 12
        %s330 = smul.addr %s329, 8
        %s331 = scalar_lea.vmem %s1, %s330
        %p332 = pneg %p73
        %p333 = pneg %p70
        %p334 = pneg %p94
        %p335 = pneg %p91
        %p336 = pneg %p115
        %p337 = pneg %p112
        %p338 = pneg %p136
        %p339 = pneg %p133
        %p340 = pneg %p157
        %p341 = pneg %p154
        %p342 = pneg %p183
        %p343 = pneg %p180
        %s344 = sand.u32 %s170, 1
        %s345 = scalar_lea.sflag [#allocation4], %s344
        %s346 = sand.u32 %s170, 1
        %s347 = smul.addr %s346, 96
        %s348 = scalar_lea.vmem [#allocation7], %s347
        %p349 = pneg %p209
        %p350 = pneg %p206
        %s351 = sand.u32 %s196, 1
        %s352 = sand.u32 %s196, 1
        %s353 = smul.addr %s352, 96
        %s354 = scalar_lea.vmem [#allocation8], %s353
        %s355 = smul.u32 12, %s26
        %s356 = ssub.s32 13, %s355
        %p357 = scmp.lt.s32.totalorder %s356, 12
        %s358 = scalar_select %p357, %s356, 12
        %s359 = smul.u32 128, %s358
        %s360 = smul.u32 %s359, 2
        %s361 = smul.u32 12, %s26
        %s362 = ssub.s32 13, %s361
        %p363 = scmp.lt.s32.totalorder %s362, 12
        %s364 = scalar_select %p363, %s362, 12
        %s365 = smul.u32 128, %s364
        %p366 = scmp.lt.s32.totalorder %s361, 12
        %s367 = scalar_select %p366, %s361, 12
        %s368 = smul.addr %s367, 8
        %s369 = scalar_lea.vmem %s1, %s368
        %s370 = smul.u32 12, %s26
        %s371 = ssub.s32 13, %s370
        %p372 = scmp.lt.s32.totalorder %s371, 12
        %s373 = scalar_select %p372, %s371, 12
        %s374 = smul.u32 128, %s373
        %s375 = smul.u32 12, %s26
        %s376 = ssub.s32 13, %s375
        %p377 = scmp.lt.s32.totalorder %s376, 12
        %s378 = scalar_select %p377, %s376, 12
        %s379 = smul.u32 128, %s378
        %s380 = smul.u32 12, %s26
        %s381 = ssub.s32 13, %s380
        %p382 = scmp.lt.s32.totalorder %s381, 12
        %s383 = scalar_select %p382, %s381, 12
        %s384 = smul.u32 128, %s383
        %v386 = vld [vmem:[%s307] sm:$0xff]
        %v387 = vld [vmem:[%s307 + $0x8] sm:$0xff]
        %v388 = vld [vmem:[%s307 + $0x10] sm:$0xff]
        %v389 = vld [vmem:[%s307 + $0x18] sm:$0xff]
        %v390 = vld [vmem:[%s307 + $0x20] sm:$0xff]
        %v391 = vld [vmem:[%s307 + $0x28] sm:$0xff]
        %v392 = vld [vmem:[%s307 + $0x30] sm:$0xff]
        %v393 = vld [vmem:[%s307 + $0x38] sm:$0xff]
        %v394 = vld [vmem:[%s307 + $0x40] sm:$0xff]
        %v395 = vld [vmem:[%s307 + $0x48] sm:$0xff]
        %v396 = vld [vmem:[%s307 + $0x50] sm:$0xff]
        %v397 = vld [vmem:[%s307 + $0x58] sm:$0xff]
        %v398 = vld [vmem:[%s307 + $0x60] sm:$0xff]
        %v399 = vld [vmem:[%s307 + $0x68] sm:$0xff]
        %v400 = vld [vmem:[%s307 + $0x70] sm:$0xff]
        %v401 = vld [vmem:[%s307 + $0x78] sm:$0xff]
        %v402 = vld [vmem:[%s307 + $0x80] sm:$0xff]
        %v403 = vld [vmem:[%s307 + $0x88] sm:$0xff]
        %v404 = vld [vmem:[%s307 + $0x90] sm:$0xff]
        %v405 = vld [vmem:[%s307 + $0x98] sm:$0xff]
        %v406 = vld [vmem:[%s307 + $0xa0] sm:$0xff]
        %v407 = vld [vmem:[%s307 + $0xa8] sm:$0xff]
        %v408 = vld [vmem:[%s307 + $0xb0] sm:$0xff]
        %v409 = vld [vmem:[%s307 + $0xb8] sm:$0xff]
        %v410 = vpack.c.bf16 %v388, %v386
        %v411 = vpack.c.bf16 %v389, %v387
        %v412 = vpack.c.bf16 %v392, %v390
        %v413 = vpack.c.bf16 %v393, %v391
        %v414 = vpack.c.bf16 %v396, %v394
        %v415 = vpack.c.bf16 %v397, %v395
        %v416 = vpack.c.bf16 %v400, %v398
        %v417 = vpack.c.bf16 %v401, %v399
        %v418 = vpack.c.bf16 %v404, %v402
        %v419 = vpack.c.bf16 %v405, %v403
        %v420 = vpack.c.bf16 %v408, %v406
        %v421 = vpack.c.bf16 %v409, %v407
        %v422 = vld [vmem:[#allocation5] sm:$0xf]
        %v423 = vld [vmem:[#allocation5 + $0x4] sm:$0xf]
        %v424 = vld [vmem:[#allocation5 + $0x8] sm:$0xf]
        %v425 = vld [vmem:[#allocation5 + $0xc] sm:$0xf]
        %v426 = vld [vmem:[#allocation5 + $0x10] sm:$0xf]
        %v427 = vld [vmem:[#allocation5 + $0x14] sm:$0xf]
        %v428 = vld [vmem:[#allocation5 + $0x18] sm:$0xf]
        %v429 = vld [vmem:[#allocation5 + $0x1c] sm:$0xf]
        %v430 = vld [vmem:[#allocation5 + $0x20] sm:$0xf]
        %v431 = vld [vmem:[#allocation5 + $0x24] sm:$0xf]
        %v432 = vld [vmem:[#allocation5 + $0x28] sm:$0xf]
        %v433 = vld [vmem:[#allocation5 + $0x2c] sm:$0xf]
        %v434 = vld [vmem:[#allocation5 + $0x30] sm:$0xf]
        %v435 = vld [vmem:[#allocation5 + $0x34] sm:$0xf]
        %v436 = vld [vmem:[#allocation5 + $0x38] sm:$0xf]
        %v437 = vld [vmem:[#allocation5 + $0x3c] sm:$0xf]
        %v438 = vld [vmem:[#allocation5 + $0x40] sm:$0xf]
        %v439 = vld [vmem:[#allocation5 + $0x44] sm:$0xf]
        %v440 = vld [vmem:[#allocation5 + $0x48] sm:$0xf]
        %v441 = vld [vmem:[#allocation5 + $0x4c] sm:$0xf]
        %v442 = vld [vmem:[#allocation5 + $0x50] sm:$0xf]
        %v443 = vld [vmem:[#allocation5 + $0x54] sm:$0xf]
        %v444 = vld [vmem:[#allocation5 + $0x58] sm:$0xf]
        %v445 = vld [vmem:[#allocation5 + $0x5c] sm:$0xf]
        %v446 = vld [vmem:[#allocation5 + $0x60] sm:$0xf]
        %v447 = vld [vmem:[#allocation5 + $0x64] sm:$0xf]
        %v448 = vld [vmem:[#allocation5 + $0x68] sm:$0xf]
        %v449 = vld [vmem:[#allocation5 + $0x6c] sm:$0xf]
        %v450 = vld [vmem:[#allocation5 + $0x70] sm:$0xf]
        %v451 = vld [vmem:[#allocation5 + $0x74] sm:$0xf]
        %v452 = vld [vmem:[#allocation5 + $0x78] sm:$0xf]
        %v453 = vld [vmem:[#allocation5 + $0x7c] sm:$0xf]
        %v454 = vand.u32 2147483647, %v386
        %v455 = vand.u32 2147483647, %v387
        %v456 = vand.u32 2147483647, %v388
        %v457 = vand.u32 2147483647, %v389
        %v458 = vand.u32 2147483647, %v390
        %v459 = vand.u32 2147483647, %v391
        %v460 = vand.u32 2147483647, %v392
        %v461 = vand.u32 2147483647, %v393
        %v462 = vand.u32 2147483647, %v394
        %v463 = vand.u32 2147483647, %v395
        %v464 = vand.u32 2147483647, %v396
        %v465 = vand.u32 2147483647, %v397
        %v466 = vand.u32 2147483647, %v398
        %v467 = vand.u32 2147483647, %v399
        %v468 = vand.u32 2147483647, %v400
        %v469 = vand.u32 2147483647, %v401
        %v470 = vand.u32 2147483647, %v402
        %v471 = vand.u32 2147483647, %v403
        %v472 = vand.u32 2147483647, %v404
        %v473 = vand.u32 2147483647, %v405
        %v474 = vand.u32 2147483647, %v406
        %v475 = vand.u32 2147483647, %v407
        %v476 = vand.u32 2147483647, %v408
        %v477 = vand.u32 2147483647, %v409
        %v478 = vadd.f32 %v454, %v455
        %479 = vadd.xlane.f32.xlu0 %v478
        %v480 = vpop.xlane.xlu0 %479
        %v481 = vadd.f32 %v456, %v457
        %482 = vadd.xlane.f32.xlu0 %v481
        %v483 = vpop.xlane.xlu0 %482
        %v484 = vadd.f32 %v458, %v459
        %485 = vadd.xlane.f32.xlu0 %v484
        %v486 = vpop.xlane.xlu0 %485
        %v487 = vadd.f32 %v460, %v461
        %488 = vadd.xlane.f32.xlu0 %v487
        %v489 = vpop.xlane.xlu0 %488
        %v490 = vadd.f32 %v462, %v463
        %491 = vadd.xlane.f32.xlu0 %v490
        %v492 = vpop.xlane.xlu0 %491
        %v493 = vadd.f32 %v464, %v465
        %494 = vadd.xlane.f32.xlu0 %v493
        %v495 = vpop.xlane.xlu0 %494
        %v496 = vadd.f32 %v466, %v467
        %497 = vadd.xlane.f32.xlu0 %v496
        %v498 = vpop.xlane.xlu0 %497
        %v499 = vadd.f32 %v468, %v469
        %500 = vadd.xlane.f32.xlu0 %v499
        %v501 = vpop.xlane.xlu0 %500
        %v502 = vadd.f32 %v470, %v471
        %503 = vadd.xlane.f32.xlu0 %v502
        %v504 = vpop.xlane.xlu0 %503
        %v505 = vadd.f32 %v472, %v473
        %506 = vadd.xlane.f32.xlu0 %v505
        %v507 = vpop.xlane.xlu0 %506
        %v508 = vadd.f32 %v474, %v475
        %509 = vadd.xlane.f32.xlu0 %v508
        %v510 = vpop.xlane.xlu0 %509
        %v511 = vadd.f32 %v476, %v477
        %512 = vadd.xlane.f32.xlu0 %v511
        %v513 = vpop.xlane.xlu0 %512
        %vm514 = vcmask 7168
        %515 = vst.msk [vmem:[%s354] sm:$0xff] %vm514, %v480
        %516 = vst.msk [vmem:[%s354 + $0x8] sm:$0xff] %vm514, %v483
        %517 = vst.msk [vmem:[%s354 + $0x10] sm:$0xff] %vm514, %v486
        %518 = vst.msk [vmem:[%s354 + $0x18] sm:$0xff] %vm514, %v489
        %519 = vst.msk [vmem:[%s354 + $0x20] sm:$0xff] %vm514, %v492
        %520 = vst.msk [vmem:[%s354 + $0x28] sm:$0xff] %vm514, %v495
        %521 = vst.msk [vmem:[%s354 + $0x30] sm:$0xff] %vm514, %v498
        %522 = vst.msk [vmem:[%s354 + $0x38] sm:$0xff] %vm514, %v501
        %523 = vst.msk [vmem:[%s354 + $0x40] sm:$0xff] %vm514, %v504
        %524 = vst.msk [vmem:[%s354 + $0x48] sm:$0xff] %vm514, %v507
        %525 = vst.msk [vmem:[%s354 + $0x50] sm:$0xff] %vm514, %v510
        %526 = vst.msk [vmem:[%s354 + $0x58] sm:$0xff] %vm514, %v513
        %v527 = vld [vmem:[%s369] sm:$0xff]
        %v528 = vld [vmem:[%s369 + $0x8] sm:$0xff]
        %v529 = vld [vmem:[%s369 + $0x10] sm:$0xff]
        %v530 = vld [vmem:[%s369 + $0x18] sm:$0xff]
        %v531 = vld [vmem:[%s369 + $0x20] sm:$0xff]
        %v532 = vld [vmem:[%s369 + $0x28] sm:$0xff]
        %v533 = vld [vmem:[%s369 + $0x30] sm:$0xff]
        %v534 = vld [vmem:[%s369 + $0x38] sm:$0xff]
        %v535 = vld [vmem:[%s369 + $0x40] sm:$0xff]
        %v536 = vld [vmem:[%s369 + $0x48] sm:$0xff]
        %v537 = vld [vmem:[%s369 + $0x50] sm:$0xff]
        %v538 = vld [vmem:[%s369 + $0x58] sm:$0xff]
        %v539 = vld [vmem:[%s2] sm:$0x1]
        %541 = vset.pattern.permute.xlu0 0
        %542 = vperm.xlu0 %541, %v527
        %v543 = vpop.permute.xlu0 %542
        %546 = vset.pattern.permute.xlu0 0
        %547 = vperm.xlu0 %546, %v528
        %v548 = vpop.permute.xlu0 %547
        %551 = vset.pattern.permute.xlu0 0
        %552 = vperm.xlu0 %551, %v529
        %v553 = vpop.permute.xlu0 %552
        %556 = vset.pattern.permute.xlu0 0
        %557 = vperm.xlu0 %556, %v530
        %v558 = vpop.permute.xlu0 %557
        %561 = vset.pattern.permute.xlu0 0
        %562 = vperm.xlu0 %561, %v531
        %v563 = vpop.permute.xlu0 %562
        %566 = vset.pattern.permute.xlu0 0
        %567 = vperm.xlu0 %566, %v532
        %v568 = vpop.permute.xlu0 %567
        %571 = vset.pattern.permute.xlu0 0
        %572 = vperm.xlu0 %571, %v533
        %v573 = vpop.permute.xlu0 %572
        %576 = vset.pattern.permute.xlu0 0
        %577 = vperm.xlu0 %576, %v534
        %v578 = vpop.permute.xlu0 %577
        %581 = vset.pattern.permute.xlu0 0
        %582 = vperm.xlu0 %581, %v535
        %v583 = vpop.permute.xlu0 %582
        %586 = vset.pattern.permute.xlu0 0
        %587 = vperm.xlu0 %586, %v536
        %v588 = vpop.permute.xlu0 %587
        %591 = vset.pattern.permute.xlu0 0
        %592 = vperm.xlu0 %591, %v537
        %v593 = vpop.permute.xlu0 %592
        %596 = vset.pattern.permute.xlu0 0
        %597 = vperm.xlu0 %596, %v538
        %v598 = vpop.permute.xlu0 %597
        %v600 = vlaneseq
        %v601 = vshrl.u32 %v600, 7
        %v602 = vsub.s32 0, %v601
        %v603 = vrot.slane %v539, %v602
        %v604 = vmul.f32 %v543, %v603
        %v605 = vmul.f32 %v548, %v603
        %v606 = vmul.f32 %v553, %v603
        %v607 = vmul.f32 %v558, %v603
        %v608 = vmul.f32 %v563, %v603
        %v609 = vmul.f32 %v568, %v603
        %v610 = vmul.f32 %v573, %v603
        %v611 = vmul.f32 %v578, %v603
        %v612 = vmul.f32 %v583, %v603
        %v613 = vmul.f32 %v588, %v603
        %v614 = vmul.f32 %v593, %v603
        %v615 = vmul.f32 %v598, %v603
        %v616 = vld [vmem:[%s2 + $0x1] sm:$0x1]
        %617 = vset.pattern.permute.xlu0 1
        %618 = vperm.xlu0 %617, %v527
        %v619 = vpop.permute.xlu0 %618
        %621 = vset.pattern.permute.xlu0 1
        %622 = vperm.xlu0 %621, %v528
        %v623 = vpop.permute.xlu0 %622
        %625 = vset.pattern.permute.xlu0 1
        %626 = vperm.xlu0 %625, %v529
        %v627 = vpop.permute.xlu0 %626
        %629 = vset.pattern.permute.xlu0 1
        %630 = vperm.xlu0 %629, %v530
        %v631 = vpop.permute.xlu0 %630
        %633 = vset.pattern.permute.xlu0 1
        %634 = vperm.xlu0 %633, %v531
        %v635 = vpop.permute.xlu0 %634
        %637 = vset.pattern.permute.xlu0 1
        %638 = vperm.xlu0 %637, %v532
        %v639 = vpop.permute.xlu0 %638
        %641 = vset.pattern.permute.xlu0 1
        %642 = vperm.xlu0 %641, %v533
        %v643 = vpop.permute.xlu0 %642
        %645 = vset.pattern.permute.xlu0 1
        %646 = vperm.xlu0 %645, %v534
        %v647 = vpop.permute.xlu0 %646
        %649 = vset.pattern.permute.xlu0 1
        %650 = vperm.xlu0 %649, %v535
        %v651 = vpop.permute.xlu0 %650
        %653 = vset.pattern.permute.xlu0 1
        %654 = vperm.xlu0 %653, %v536
        %v655 = vpop.permute.xlu0 %654
        %657 = vset.pattern.permute.xlu0 1
        %658 = vperm.xlu0 %657, %v537
        %v659 = vpop.permute.xlu0 %658
        %661 = vset.pattern.permute.xlu0 1
        %662 = vperm.xlu0 %661, %v538
        %v663 = vpop.permute.xlu0 %662
        %v665 = vlaneseq
        %v666 = vshrl.u32 %v665, 7
        %v667 = vsub.s32 0, %v666
        %v668 = vrot.slane %v616, %v667
        %v669 = vmul.f32 %v619, %v668
        %v670 = vmul.f32 %v623, %v668
        %v671 = vmul.f32 %v627, %v668
        %v672 = vmul.f32 %v631, %v668
        %v673 = vmul.f32 %v635, %v668
        %v674 = vmul.f32 %v639, %v668
        %v675 = vmul.f32 %v643, %v668
        %v676 = vmul.f32 %v647, %v668
        %v677 = vmul.f32 %v651, %v668
        %v678 = vmul.f32 %v655, %v668
        %v679 = vmul.f32 %v659, %v668
        %v680 = vmul.f32 %v663, %v668
        %v681 = vadd.f32 %v604, %v669
        %v682 = vadd.f32 %v605, %v670
        %v683 = vadd.f32 %v606, %v671
        %v684 = vadd.f32 %v607, %v672
        %v685 = vadd.f32 %v608, %v673
        %v686 = vadd.f32 %v609, %v674
        %v687 = vadd.f32 %v610, %v675
        %v688 = vadd.f32 %v611, %v676
        %v689 = vadd.f32 %v612, %v677
        %v690 = vadd.f32 %v613, %v678
        %v691 = vadd.f32 %v614, %v679
        %v692 = vadd.f32 %v615, %v680
        %v693 = vld [vmem:[%s2 + $0x2] sm:$0x1]
        %694 = vset.pattern.permute.xlu0 2
        %695 = vperm.xlu0 %694, %v527
        %v696 = vpop.permute.xlu0 %695
        %698 = vset.pattern.permute.xlu0 2
        %699 = vperm.xlu0 %698, %v528
        %v700 = vpop.permute.xlu0 %699
        %702 = vset.pattern.permute.xlu0 2
        %703 = vperm.xlu0 %702, %v529
        %v704 = vpop.permute.xlu0 %703
        %706 = vset.pattern.permute.xlu0 2
        %707 = vperm.xlu0 %706, %v530
        %v708 = vpop.permute.xlu0 %707
        %710 = vset.pattern.permute.xlu0 2
        %711 = vperm.xlu0 %710, %v531
        %v712 = vpop.permute.xlu0 %711
        %714 = vset.pattern.permute.xlu0 2
        %715 = vperm.xlu0 %714, %v532
        %v716 = vpop.permute.xlu0 %715
        %718 = vset.pattern.permute.xlu0 2
        %719 = vperm.xlu0 %718, %v533
        %v720 = vpop.permute.xlu0 %719
        %722 = vset.pattern.permute.xlu0 2
        %723 = vperm.xlu0 %722, %v534
        %v724 = vpop.permute.xlu0 %723
        %726 = vset.pattern.permute.xlu0 2
        %727 = vperm.xlu0 %726, %v535
        %v728 = vpop.permute.xlu0 %727
        %730 = vset.pattern.permute.xlu0 2
        %731 = vperm.xlu0 %730, %v536
        %v732 = vpop.permute.xlu0 %731
        %734 = vset.pattern.permute.xlu0 2
        %735 = vperm.xlu0 %734, %v537
        %v736 = vpop.permute.xlu0 %735
        %738 = vset.pattern.permute.xlu0 2
        %739 = vperm.xlu0 %738, %v538
        %v740 = vpop.permute.xlu0 %739
        %v742 = vlaneseq
        %v743 = vshrl.u32 %v742, 7
        %v744 = vsub.s32 0, %v743
        %v745 = vrot.slane %v693, %v744
        %v746 = vmul.f32 %v696, %v745
        %v747 = vmul.f32 %v700, %v745
        %v748 = vmul.f32 %v704, %v745
        %v749 = vmul.f32 %v708, %v745
        %v750 = vmul.f32 %v712, %v745
        %v751 = vmul.f32 %v716, %v745
        %v752 = vmul.f32 %v720, %v745
        %v753 = vmul.f32 %v724, %v745
        %v754 = vmul.f32 %v728, %v745
        %v755 = vmul.f32 %v732, %v745
        %v756 = vmul.f32 %v736, %v745
        %v757 = vmul.f32 %v740, %v745
        %v758 = vadd.f32 %v681, %v746
        %v759 = vadd.f32 %v682, %v747
        %v760 = vadd.f32 %v683, %v748
        %v761 = vadd.f32 %v684, %v749
        %v762 = vadd.f32 %v685, %v750
        %v763 = vadd.f32 %v686, %v751
        %v764 = vadd.f32 %v687, %v752
        %v765 = vadd.f32 %v688, %v753
        %v766 = vadd.f32 %v689, %v754
        %v767 = vadd.f32 %v690, %v755
        %v768 = vadd.f32 %v691, %v756
        %v769 = vadd.f32 %v692, %v757
        %v770 = vld [vmem:[%s2 + $0x3] sm:$0x1]
        %771 = vset.pattern.permute.xlu0 3
        %772 = vperm.xlu0 %771, %v527
        %v773 = vpop.permute.xlu0 %772
        %775 = vset.pattern.permute.xlu0 3
        %776 = vperm.xlu0 %775, %v528
        %v777 = vpop.permute.xlu0 %776
        %779 = vset.pattern.permute.xlu0 3
        %780 = vperm.xlu0 %779, %v529
        %v781 = vpop.permute.xlu0 %780
        %783 = vset.pattern.permute.xlu0 3
        %784 = vperm.xlu0 %783, %v530
        %v785 = vpop.permute.xlu0 %784
        %787 = vset.pattern.permute.xlu0 3
        %788 = vperm.xlu0 %787, %v531
        %v789 = vpop.permute.xlu0 %788
        %791 = vset.pattern.permute.xlu0 3
        %792 = vperm.xlu0 %791, %v532
        %v793 = vpop.permute.xlu0 %792
        %795 = vset.pattern.permute.xlu0 3
        %796 = vperm.xlu0 %795, %v533
        %v797 = vpop.permute.xlu0 %796
        %799 = vset.pattern.permute.xlu0 3
        %800 = vperm.xlu0 %799, %v534
        %v801 = vpop.permute.xlu0 %800
        %803 = vset.pattern.permute.xlu0 3
        %804 = vperm.xlu0 %803, %v535
        %v805 = vpop.permute.xlu0 %804
        %807 = vset.pattern.permute.xlu0 3
        %808 = vperm.xlu0 %807, %v536
        %v809 = vpop.permute.xlu0 %808
        %811 = vset.pattern.permute.xlu0 3
        %812 = vperm.xlu0 %811, %v537
        %v813 = vpop.permute.xlu0 %812
        %815 = vset.pattern.permute.xlu0 3
        %816 = vperm.xlu0 %815, %v538
        %v817 = vpop.permute.xlu0 %816
        %v819 = vlaneseq
        %v820 = vshrl.u32 %v819, 7
        %v821 = vsub.s32 0, %v820
        %v822 = vrot.slane %v770, %v821
        %v823 = vmul.f32 %v773, %v822
        %v824 = vmul.f32 %v777, %v822
        %v825 = vmul.f32 %v781, %v822
        %v826 = vmul.f32 %v785, %v822
        %v827 = vmul.f32 %v789, %v822
        %v828 = vmul.f32 %v793, %v822
        %v829 = vmul.f32 %v797, %v822
        %v830 = vmul.f32 %v801, %v822
        %v831 = vmul.f32 %v805, %v822
        %v832 = vmul.f32 %v809, %v822
        %v833 = vmul.f32 %v813, %v822
        %v834 = vmul.f32 %v817, %v822
        %v835 = vadd.f32 %v758, %v823
        %v836 = vadd.f32 %v759, %v824
        %v837 = vadd.f32 %v760, %v825
        %v838 = vadd.f32 %v761, %v826
        %v839 = vadd.f32 %v762, %v827
        %v840 = vadd.f32 %v763, %v828
        %v841 = vadd.f32 %v764, %v829
        %v842 = vadd.f32 %v765, %v830
        %v843 = vadd.f32 %v766, %v831
        %v844 = vadd.f32 %v767, %v832
        %v845 = vadd.f32 %v768, %v833
        %v846 = vadd.f32 %v769, %v834
        %v847 = vld [vmem:[%s2 + $0x4] sm:$0x1]
        %848 = vset.pattern.permute.xlu0 4
        %849 = vperm.xlu0 %848, %v527
        %v850 = vpop.permute.xlu0 %849
        %852 = vset.pattern.permute.xlu0 4
        %853 = vperm.xlu0 %852, %v528
        %v854 = vpop.permute.xlu0 %853
        %856 = vset.pattern.permute.xlu0 4
        %857 = vperm.xlu0 %856, %v529
        %v858 = vpop.permute.xlu0 %857
        %860 = vset.pattern.permute.xlu0 4
        %861 = vperm.xlu0 %860, %v530
        %v862 = vpop.permute.xlu0 %861
        %864 = vset.pattern.permute.xlu0 4
        %865 = vperm.xlu0 %864, %v531
        %v866 = vpop.permute.xlu0 %865
        %868 = vset.pattern.permute.xlu0 4
        %869 = vperm.xlu0 %868, %v532
        %v870 = vpop.permute.xlu0 %869
        %872 = vset.pattern.permute.xlu0 4
        %873 = vperm.xlu0 %872, %v533
        %v874 = vpop.permute.xlu0 %873
        %876 = vset.pattern.permute.xlu0 4
        %877 = vperm.xlu0 %876, %v534
        %v878 = vpop.permute.xlu0 %877
        %880 = vset.pattern.permute.xlu0 4
        %881 = vperm.xlu0 %880, %v535
        %v882 = vpop.permute.xlu0 %881
        %884 = vset.pattern.permute.xlu0 4
        %885 = vperm.xlu0 %884, %v536
        %v886 = vpop.permute.xlu0 %885
        %888 = vset.pattern.permute.xlu0 4
        %889 = vperm.xlu0 %888, %v537
        %v890 = vpop.permute.xlu0 %889
        %892 = vset.pattern.permute.xlu0 4
        %893 = vperm.xlu0 %892, %v538
        %v894 = vpop.permute.xlu0 %893
        %v896 = vlaneseq
        %v897 = vshrl.u32 %v896, 7
        %v898 = vsub.s32 0, %v897
        %v899 = vrot.slane %v847, %v898
        %v900 = vmul.f32 %v850, %v899
        %v901 = vmul.f32 %v854, %v899
        %v902 = vmul.f32 %v858, %v899
        %v903 = vmul.f32 %v862, %v899
        %v904 = vmul.f32 %v866, %v899
        %v905 = vmul.f32 %v870, %v899
        %v906 = vmul.f32 %v874, %v899
        %v907 = vmul.f32 %v878, %v899
        %v908 = vmul.f32 %v882, %v899
        %v909 = vmul.f32 %v886, %v899
        %v910 = vmul.f32 %v890, %v899
        %v911 = vmul.f32 %v894, %v899
        %v912 = vadd.f32 %v835, %v900
        %v913 = vadd.f32 %v836, %v901
        %v914 = vadd.f32 %v837, %v902
        %v915 = vadd.f32 %v838, %v903
        %v916 = vadd.f32 %v839, %v904
        %v917 = vadd.f32 %v840, %v905
        %v918 = vadd.f32 %v841, %v906
        %v919 = vadd.f32 %v842, %v907
        %v920 = vadd.f32 %v843, %v908
        %v921 = vadd.f32 %v844, %v909
        %v922 = vadd.f32 %v845, %v910
        %v923 = vadd.f32 %v846, %v911
        %v924 = vpack.c.bf16 %v913, %v912
        %v925 = vpack.c.bf16 %v915, %v914
        %v926 = vpack.c.bf16 %v917, %v916
        %v927 = vpack.c.bf16 %v919, %v918
        %v928 = vpack.c.bf16 %v921, %v920
        %v929 = vpack.c.bf16 %v923, %v922
        %v930 = vld [vmem:[%s4] sm:$0xf]
        %v931 = vld [vmem:[%s4 + $0x4] sm:$0xf]
        %v932 = vld [vmem:[%s4 + $0x8] sm:$0xf]
        %v933 = vld [vmem:[%s4 + $0xc] sm:$0xf]
        %v934 = vld [vmem:[%s4 + $0x10] sm:$0xf]
        %v935 = vld [vmem:[%s4 + $0x14] sm:$0xf]
        %v936 = vld [vmem:[%s4 + $0x18] sm:$0xf]
        %v937 = vld [vmem:[%s4 + $0x1c] sm:$0xf]
        %v938 = vld [vmem:[%s4 + $0x20] sm:$0xf]
        %v939 = vld [vmem:[%s4 + $0x24] sm:$0xf]
        %v940 = vld [vmem:[%s4 + $0x28] sm:$0xf]
        %v941 = vld [vmem:[%s4 + $0x2c] sm:$0xf]
        %v942 = vld [vmem:[%s4 + $0x30] sm:$0xf]
        %v943 = vld [vmem:[%s4 + $0x34] sm:$0xf]
        %v944 = vld [vmem:[%s4 + $0x38] sm:$0xf]
        %v945 = vld [vmem:[%s4 + $0x3c] sm:$0xf]
        %v962 = vunpack.c.l.b16 %v930
        %v963 = vunpack.c.l.b16 %v931
        %v964 = vunpack.c.l.b16 %v932
        %v965 = vunpack.c.l.b16 %v933
        %v966 = vunpack.c.l.b16 %v934
        %v967 = vunpack.c.l.b16 %v935
        %v968 = vunpack.c.l.b16 %v936
        %v969 = vunpack.c.l.b16 %v937
        %v970 = vunpack.c.l.b16 %v938
        %v971 = vunpack.c.l.b16 %v939
        %v972 = vunpack.c.l.b16 %v940
        %v973 = vunpack.c.l.b16 %v941
        %v974 = vunpack.c.l.b16 %v942
        %v975 = vunpack.c.l.b16 %v943
        %v976 = vunpack.c.l.b16 %v944
        %v977 = vunpack.c.l.b16 %v945
        %v978 = vpack.c.b16 %v963, %v962
        %v979 = vpack.c.b16 %v965, %v964
        %v980 = vpack.c.b16 %v967, %v966
        %v981 = vpack.c.b16 %v969, %v968
        %v982 = vpack.c.b16 %v971, %v970
        %v983 = vpack.c.b16 %v973, %v972
        %v984 = vpack.c.b16 %v975, %v974
        %v985 = vpack.c.b16 %v977, %v976
        %994 = vmatprep.subr.bf16.mxu0 0
        %995 = vmatpush1.bf16.msra.mxu0 %v978
        %996 = vmatprep.subr.bf16.mxu0 0
        %997 = vmatpush1.bf16.msra.mxu0 %v979
        %998 = vmatprep.subr.bf16.mxu0 0
        %999 = vmatpush1.bf16.msra.mxu0 %v980
        %1000 = vmatprep.subr.bf16.mxu0 0
        %1001 = vmatpush1.bf16.msra.mxu0 %v981
        %1002 = vmatprep.subr.bf16.mxu0 0
        %1003 = vmatpush1.bf16.msra.mxu0 %v982
        %1004 = vmatprep.subr.bf16.mxu0 0
        %1005 = vmatpush1.bf16.msra.mxu0 %v983
        %1006 = vmatprep.subr.bf16.mxu0 0
        %1007 = vmatpush1.bf16.msra.mxu0 %v984
        %1008 = vmatprep.subr.bf16.mxu0 0
        %1009 = vmatpush1.bf16.msra.mxu0 %v985
        %1010 = vmatprep.subr.bf16.mxu0 0
        %1011 = vmatpush1.bf16.msra.mxu0 0
        %1012 = vmatprep.subr.bf16.mxu0 0
        %1013 = vmatpush1.bf16.msra.mxu0 0
        %1014 = vmatprep.subr.bf16.mxu0 0
        %1015 = vmatpush1.bf16.msra.mxu0 0
        %1016 = vmatprep.subr.bf16.mxu0 0
        %1017 = vmatpush1.bf16.msra.mxu0 0
        %1018 = vmatprep.subr.bf16.mxu0 0
        %1019 = vmatpush1.bf16.msra.mxu0 0
        %1020 = vmatprep.subr.bf16.mxu0 0
        %1021 = vmatpush1.bf16.msra.mxu0 0
        %1022 = vmatprep.subr.bf16.mxu0 0
        %1023 = vmatpush1.bf16.msra.mxu0 0
        %1024 = vmatprep.subr.bf16.mxu0 0
        %1025 = vmatpush1.bf16.msra.mxu0 0
        %1026 = vmatprep.mubr.bf16.mxu0 0
        %1027 = vmatmul.mubr.bf16.gmra.mrb[0].mxu0 %v924
        %v1028 = vpop.f32.mrb[0].mxu0
        %v1029 = vadd.f32 0.0, %v1028
        %v1030 = vpop.f32.mrb[0].mxu0
        %v1031 = vpop.f32.mrb[0].mxu0
        %v1032 = vadd.f32 0.0, %v1031
        %v1033 = vpop.f32.mrb[0].mxu0
        %1034 = vmatprep.mubr.bf16.mxu0 0
        %1035 = vmatmul.mubr.bf16.gmra.mrb[0].mxu0 %v925
        %v1036 = vpop.f32.mrb[0].mxu0
        %v1037 = vadd.f32 0.0, %v1036
        %v1038 = vpop.f32.mrb[0].mxu0
        %v1039 = vpop.f32.mrb[0].mxu0
        %v1040 = vadd.f32 0.0, %v1039
        %v1041 = vpop.f32.mrb[0].mxu0
        %1042 = vmatprep.mubr.bf16.mxu0 0
        %1043 = vmatmul.mubr.bf16.gmra.mrb[0].mxu0 %v926
        %v1044 = vpop.f32.mrb[0].mxu0
        %v1045 = vadd.f32 0.0, %v1044
        %v1046 = vpop.f32.mrb[0].mxu0
        %v1047 = vpop.f32.mrb[0].mxu0
        %v1048 = vadd.f32 0.0, %v1047
        %v1049 = vpop.f32.mrb[0].mxu0
        %1050 = vmatprep.mubr.bf16.mxu0 0
        %1051 = vmatmul.mubr.bf16.gmra.mrb[0].mxu0 %v927
        %v1052 = vpop.f32.mrb[0].mxu0
        %v1053 = vadd.f32 0.0, %v1052
        %v1054 = vpop.f32.mrb[0].mxu0
        %v1055 = vpop.f32.mrb[0].mxu0
        %v1056 = vadd.f32 0.0, %v1055
        %v1057 = vpop.f32.mrb[0].mxu0
        %1058 = vmatprep.mubr.bf16.mxu0 0
        %1059 = vmatmul.mubr.bf16.gmra.mrb[0].mxu0 %v928
        %v1060 = vpop.f32.mrb[0].mxu0
        %v1061 = vadd.f32 0.0, %v1060
        %v1062 = vpop.f32.mrb[0].mxu0
        %v1063 = vpop.f32.mrb[0].mxu0
        %v1064 = vadd.f32 0.0, %v1063
        %v1065 = vpop.f32.mrb[0].mxu0
        %1066 = vmatprep.mubr.bf16.mxu0 0
        %1067 = vmatmul.mubr.bf16.gmra.mrb[0].mxu0 %v929
        %v1068 = vpop.f32.mrb[0].mxu0
        %v1069 = vadd.f32 0.0, %v1068
        %v1070 = vpop.f32.mrb[0].mxu0
        %v1071 = vpop.f32.mrb[0].mxu0
        %v1072 = vadd.f32 0.0, %v1071
        %v1073 = vpop.f32.mrb[0].mxu0
        %1074 = vdwg.mxu0
        %v1107 = vunpack.c.l.b16 %v422
        %v1108 = vunpack.c.l.b16 %v423
        %v1109 = vunpack.c.l.b16 %v424
        %v1110 = vunpack.c.l.b16 %v425
        %v1111 = vunpack.c.l.b16 %v426
        %v1112 = vunpack.c.l.b16 %v427
        %v1113 = vunpack.c.l.b16 %v428
        %v1114 = vunpack.c.l.b16 %v429
        %v1115 = vunpack.c.l.b16 %v430
        %v1116 = vunpack.c.l.b16 %v431
        %v1117 = vunpack.c.l.b16 %v432
        %v1118 = vunpack.c.l.b16 %v433
        %v1119 = vunpack.c.l.b16 %v434
        %v1120 = vunpack.c.l.b16 %v435
        %v1121 = vunpack.c.l.b16 %v436
        %v1122 = vunpack.c.l.b16 %v437
        %v1123 = vunpack.c.l.b16 %v438
        %v1124 = vunpack.c.l.b16 %v439
        %v1125 = vunpack.c.l.b16 %v440
        %v1126 = vunpack.c.l.b16 %v441
        %v1127 = vunpack.c.l.b16 %v442
        %v1128 = vunpack.c.l.b16 %v443
        %v1129 = vunpack.c.l.b16 %v444
        %v1130 = vunpack.c.l.b16 %v445
        %v1131 = vunpack.c.l.b16 %v446
        %v1132 = vunpack.c.l.b16 %v447
        %v1133 = vunpack.c.l.b16 %v448
        %v1134 = vunpack.c.l.b16 %v449
        %v1135 = vunpack.c.l.b16 %v450
        %v1136 = vunpack.c.l.b16 %v451
        %v1137 = vunpack.c.l.b16 %v452
        %v1138 = vunpack.c.l.b16 %v453
        %v1139 = vpack.c.b16 %v1108, %v1107
        %v1140 = vpack.c.b16 %v1110, %v1109
        %v1141 = vpack.c.b16 %v1112, %v1111
        %v1142 = vpack.c.b16 %v1114, %v1113
        %v1143 = vpack.c.b16 %v1116, %v1115
        %v1144 = vpack.c.b16 %v1118, %v1117
        %v1145 = vpack.c.b16 %v1120, %v1119
        %v1146 = vpack.c.b16 %v1122, %v1121
        %v1147 = vpack.c.b16 %v1124, %v1123
        %v1148 = vpack.c.b16 %v1126, %v1125
        %v1149 = vpack.c.b16 %v1128, %v1127
        %v1150 = vpack.c.b16 %v1130, %v1129
        %v1151 = vpack.c.b16 %v1132, %v1131
        %v1152 = vpack.c.b16 %v1134, %v1133
        %v1153 = vpack.c.b16 %v1136, %v1135
        %v1154 = vpack.c.b16 %v1138, %v1137
        %1171 = vmatprep.subr.bf16.mxu0 0
        %1172 = vmatpush1.bf16.msra.mxu0 %v1139
        %1173 = vmatprep.subr.bf16.mxu0 0
        %1174 = vmatpush1.bf16.msra.mxu0 %v1140
        %1175 = vmatprep.subr.bf16.mxu0 0
        %1176 = vmatpush1.bf16.msra.mxu0 %v1141
        %1177 = vmatprep.subr.bf16.mxu0 0
        %1178 = vmatpush1.bf16.msra.mxu0 %v1142
        %1179 = vmatprep.subr.bf16.mxu0 0
        %1180 = vmatpush1.bf16.msra.mxu0 %v1143
        %1181 = vmatprep.subr.bf16.mxu0 0
        %1182 = vmatpush1.bf16.msra.mxu0 %v1144
        %1183 = vmatprep.subr.bf16.mxu0 0
        %1184 = vmatpush1.bf16.msra.mxu0 %v1145
        %1185 = vmatprep.subr.bf16.mxu0 0
        %1186 = vmatpush1.bf16.msra.mxu0 %v1146
        %1187 = vmatprep.subr.bf16.mxu0 0
        %1188 = vmatpush1.bf16.msra.mxu0 %v1147
        %1189 = vmatprep.subr.bf16.mxu0 0
        %1190 = vmatpush1.bf16.msra.mxu0 %v1148
        %1191 = vmatprep.subr.bf16.mxu0 0
        %1192 = vmatpush1.bf16.msra.mxu0 %v1149
        %1193 = vmatprep.subr.bf16.mxu0 0
        %1194 = vmatpush1.bf16.msra.mxu0 %v1150
        %1195 = vmatprep.subr.bf16.mxu0 0
        %1196 = vmatpush1.bf16.msra.mxu0 %v1151
        %1197 = vmatprep.subr.bf16.mxu0 0
        %1198 = vmatpush1.bf16.msra.mxu0 %v1152
        %1199 = vmatprep.subr.bf16.mxu0 0
        %1200 = vmatpush1.bf16.msra.mxu0 %v1153
        %1201 = vmatprep.subr.bf16.mxu0 0
        %1202 = vmatpush1.bf16.msra.mxu0 %v1154
        %1203 = vmatprep.mubr.bf16.mxu0 %v411
        %1204 = vmatmul.mubr.bf16.gmra.mrb[0].mxu0 %v410
        %v1205 = vpop.f32.mrb[0].mxu0
        %v1206 = vadd.f32 %v1029, %v1205
        %v1207 = vpop.f32.mrb[0].mxu0
        %v1208 = vpop.f32.mrb[0].mxu0
        %v1209 = vadd.f32 %v1032, %v1208
        %v1210 = vpop.f32.mrb[0].mxu0
        %1211 = vmatprep.mubr.bf16.mxu0 %v413
        %1212 = vmatmul.mubr.bf16.gmra.mrb[0].mxu0 %v412
        %v1213 = vpop.f32.mrb[0].mxu0
        %v1214 = vadd.f32 %v1037, %v1213
        %v1215 = vpop.f32.mrb[0].mxu0
        %v1216 = vpop.f32.mrb[0].mxu0
        %v1217 = vadd.f32 %v1040, %v1216
        %v1218 = vpop.f32.mrb[0].mxu0
        %1219 = vmatprep.mubr.bf16.mxu0 %v415
        %1220 = vmatmul.mubr.bf16.gmra.mrb[0].mxu0 %v414
        %v1221 = vpop.f32.mrb[0].mxu0
        %v1222 = vadd.f32 %v1045, %v1221
        %v1223 = vpop.f32.mrb[0].mxu0
        %v1224 = vpop.f32.mrb[0].mxu0
        %v1225 = vadd.f32 %v1048, %v1224
        %v1226 = vpop.f32.mrb[0].mxu0
        %1227 = vmatprep.mubr.bf16.mxu0 %v417
        %1228 = vmatmul.mubr.bf16.gmra.mrb[0].mxu0 %v416
        %v1229 = vpop.f32.mrb[0].mxu0
        %v1230 = vadd.f32 %v1053, %v1229
        %v1231 = vpop.f32.mrb[0].mxu0
        %v1232 = vpop.f32.mrb[0].mxu0
        %v1233 = vadd.f32 %v1056, %v1232
        %v1234 = vpop.f32.mrb[0].mxu0
        %1235 = vmatprep.mubr.bf16.mxu0 %v419
        %1236 = vmatmul.mubr.bf16.gmra.mrb[0].mxu0 %v418
        %v1237 = vpop.f32.mrb[0].mxu0
        %v1238 = vadd.f32 %v1061, %v1237
        %v1239 = vpop.f32.mrb[0].mxu0
        %v1240 = vpop.f32.mrb[0].mxu0
        %v1241 = vadd.f32 %v1064, %v1240
        %v1242 = vpop.f32.mrb[0].mxu0
        %1243 = vmatprep.mubr.bf16.mxu0 %v421
        %1244 = vmatmul.mubr.bf16.gmra.mrb[0].mxu0 %v420
        %v1245 = vpop.f32.mrb[0].mxu0
        %v1246 = vadd.f32 %v1069, %v1245
        %v1247 = vpop.f32.mrb[0].mxu0
        %v1248 = vpop.f32.mrb[0].mxu0
        %v1249 = vadd.f32 %v1072, %v1248
        %v1250 = vpop.f32.mrb[0].mxu0
        %1251 = vdwg.mxu0
        %v1252 = vld [vmem:[%s5] sm:$0x1]
        %v1254 = vlaneseq
        %v1255 = vshrl.u32 %v1254, 7
        %v1256 = vsub.s32 0, %v1255
        %v1257 = vrot.slane %v1252, %v1256
        %v1259 = vadd.f32 %v1206, %v1257
        %v1260 = vadd.f32 %v1209, %v1257
        %v1261 = vadd.f32 %v1214, %v1257
        %v1262 = vadd.f32 %v1217, %v1257
        %v1263 = vadd.f32 %v1222, %v1257
        %v1264 = vadd.f32 %v1225, %v1257
        %v1265 = vadd.f32 %v1230, %v1257
        %v1266 = vadd.f32 %v1233, %v1257
        %v1267 = vadd.f32 %v1238, %v1257
        %v1268 = vadd.f32 %v1241, %v1257
        %v1269 = vadd.f32 %v1246, %v1257
        %v1270 = vadd.f32 %v1249, %v1257
        %1271 = vst [vmem:[%s348] sm:$0xff] %v1259
        %1272 = vst [vmem:[%s348 + $0x8] sm:$0xff] %v1260
        %1273 = vst [vmem:[%s348 + $0x10] sm:$0xff] %v1261
        %1274 = vst [vmem:[%s348 + $0x18] sm:$0xff] %v1262
        %1275 = vst [vmem:[%s348 + $0x20] sm:$0xff] %v1263
        %1276 = vst [vmem:[%s348 + $0x28] sm:$0xff] %v1264
        %1277 = vst [vmem:[%s348 + $0x30] sm:$0xff] %v1265
        %1278 = vst [vmem:[%s348 + $0x38] sm:$0xff] %v1266
        %1279 = vst [vmem:[%s348 + $0x40] sm:$0xff] %v1267
        %1280 = vst [vmem:[%s348 + $0x48] sm:$0xff] %v1268
        %1281 = vst [vmem:[%s348 + $0x50] sm:$0xff] %v1269
        %1282 = vst [vmem:[%s348 + $0x58] sm:$0xff] %v1270
        %s1283 = sand.u32 %s170, 1
        %s1284 = scalar_lea.sflag [#allocation4], %s1283
        %s1285 = sand.u32 %s170, 1
        %s1286 = smul.addr %s1285, 96
        %s1287 = scalar_lea.vmem [#allocation7], %s1286
        %s1288 = sand.u32 %s196, 1
        %s1289 = sand.u32 %s196, 1
        %s1290 = smul.addr %s1289, 96
        %s1291 = scalar_lea.vmem [#allocation8], %s1290
        // Predicated region
        $region53: #{tpu_custom_call.1} parent=43 // pred_check
          %p1292 = pneg %p180
        $region54: #{tpu_custom_call.1} parent=43 // pred_check_branch
          %1294 = sbr.rel (%p1292) target = $region56
        $region55: #{tpu_custom_call.1} parent=43 // pred_region
          %s1295 = smul.u32 12, %s26
          %s1296 = ssub.s32 13, %s1295
          %p1297 = scmp.lt.s32.totalorder %s1296, 12
          %s1298 = scalar_select %p1297, %s1296, 12
          %s1299 = smul.u32 128, %s1298
          %s1301 = ssub.s32 1536, %s1299
          %1302 = vsyncadd %s1284, %s1301
          %p1303 = scmp.ne.s32.totalorder 0, %s1299
          %s1304 = smul.addr %s1295, 128
          %s1305 = scalar_lea.hbm %s6, %s1304
          %s1306 = smul.u32 8, %s1298
          %s1307 = sshll.u32 %s1287, 4
          %s1308 = int_to_ptr.vmem [resolvable:$true] %s1307
          %s1309 = sshll.u32 %s1306, 4
          %1313 = dma.vmem_to_hbm [thread:$0]  (%p1303), %s1308, %s1309, %s1305, %s1284, 128, 128, 8
        $region56: #{tpu_custom_call.1} parent=43 // pred_fallthru
          _
        // Predicated region
        $region57: #{tpu_custom_call.1} parent=43 // pred_check
          %p1314 = pneg %p206
        $region58: #{tpu_custom_call.1} parent=43 // pred_check_branch
          %1316 = sbr.rel (%p1314) target = $region60
        $region59: #{tpu_custom_call.1} parent=43 // pred_region
          %s1317 = smul.u32 12, %s26
          %s1318 = ssub.s32 13, %s1317
          %p1319 = scmp.lt.s32.totalorder %s1318, 12
          %s1320 = scalar_select %p1319, %s1318, 12
          %s1321 = smul.u32 128, %s1320
          %p1322 = scmp.ne.s32.totalorder 0, %s1321
          %s1323 = smul.addr %s1317, 8
          %s1324 = scalar_lea.vmem %s7, %s1323
          // Predicated region
          $region61: #{tpu_custom_call.1} parent=59 // pred_check
            %p1325 = pneg %p1322
          $region62: #{tpu_custom_call.1} parent=59 // pred_check_branch
            %1327 = sbr.rel (%p1325) target = $region64
          $region63: #{tpu_custom_call.1} parent=59 // pred_region
            // Predicated region
            $region65: #{tpu_custom_call.1} parent=63 // pred_check
              _
            $region66: #{tpu_custom_call.1} parent=63 // pred_check_branch
              %1329 = sbr.rel (0) target = $region68
            $region67: #{tpu_custom_call.1} parent=63 // pred_region
              // Predicated region
              $region87: #{tpu_custom_call.1} parent=67 // pred_check
                _
              $region88: #{tpu_custom_call.1} parent=67 // pred_check_branch
                %1401 = sbr.rel (0) target = $region90
              $region89: #{tpu_custom_call.1} parent=67 // pred_region
                %s1402 = sdiv.u32.pop %s1320, 12
                %s1403 = srem.u32.pop %s1320, 12
                // While loop
                $region91: #{tpu_custom_call.1} parent=89 // loop_pre_header
                  _
                $region92: #{tpu_custom_call.1} parent=89 // loop_header
                  %s1405 = sphi 0, %s1407
                  %p1406 = scmp.ge.s32.totalorder %s1405, %s1402
                  %s1410 = sphi 0, %s1439
                  %s1411 = sphi %s1291, %s1442
                  %s1412 = sphi %s1324, %s1443
                $region93: #{tpu_custom_call.1} parent=89 // loop_header_branch
                  %1409 = sbr.rel (%p1406) target = $region97
                $region94: #{tpu_custom_call.1} parent=89 // loop_body
                  %v1413 = vld [vmem:[%s1411] sm:$0xff]
                  %1414 = vst [vmem:[%s1412] sm:$0xff] %v1413
                  %v1415 = vld [vmem:[%s1411 + $0x8] sm:$0xff]
                  %1416 = vst [vmem:[%s1412 + $0x8] sm:$0xff] %v1415
                  %v1417 = vld [vmem:[%s1411 + $0x10] sm:$0xff]
                  %1418 = vst [vmem:[%s1412 + $0x10] sm:$0xff] %v1417
                  %v1419 = vld [vmem:[%s1411 + $0x18] sm:$0xff]
                  %1420 = vst [vmem:[%s1412 + $0x18] sm:$0xff] %v1419
                  %v1421 = vld [vmem:[%s1411 + $0x20] sm:$0xff]
                  %1422 = vst [vmem:[%s1412 + $0x20] sm:$0xff] %v1421
                  %v1423 = vld [vmem:[%s1411 + $0x28] sm:$0xff]
                  %1424 = vst [vmem:[%s1412 + $0x28] sm:$0xff] %v1423
                  %v1425 = vld [vmem:[%s1411 + $0x30] sm:$0xff]
                  %1426 = vst [vmem:[%s1412 + $0x30] sm:$0xff] %v1425
                  %v1427 = vld [vmem:[%s1411 + $0x38] sm:$0xff]
                  %1428 = vst [vmem:[%s1412 + $0x38] sm:$0xff] %v1427
                  %v1429 = vld [vmem:[%s1411 + $0x40] sm:$0xff]
                  %1430 = vst [vmem:[%s1412 + $0x40] sm:$0xff] %v1429
                  %v1431 = vld [vmem:[%s1411 + $0x48] sm:$0xff]
                  %1432 = vst [vmem:[%s1412 + $0x48] sm:$0xff] %v1431
                  %v1433 = vld [vmem:[%s1411 + $0x50] sm:$0xff]
                  %1434 = vst [vmem:[%s1412 + $0x50] sm:$0xff] %v1433
                  %v1435 = vld [vmem:[%s1411 + $0x58] sm:$0xff]
                  %1436 = vst [vmem:[%s1412 + $0x58] sm:$0xff] %v1435
                  %s1437 = sadd.s32 1, %s1410
                  %p1438 = scmp.ge.s32.totalorder %s1437, %s1402
                  %s1439 = scalar_select %p1438, 0, %s1437
                  %s1440 = smul.u32 %s1439, 96
                  %s1441 = smul.u32 %s1439, 96
                  %s1442 = scalar_lea.vmem %s1291, %s1440 [#allocation8]
                  %s1443 = scalar_lea.vmem %s1324, %s1441
                $region95: #{tpu_custom_call.1} parent=89 // loop_footer
                  %s1407 = sadd.s32 %s1405, 1
                $region96: #{tpu_custom_call.1} parent=89 // loop_footer_branch
                  %1404 = sbr.rel target = $region92
                $region97: #{tpu_custom_call.1} parent=89 // loop_exit
                  _
                %s1444 = sdiv.u32.pop %s1320, 12
                %s1445 = srem.u32.pop %s1320, 12
                %s1446 = smul.u32 %s1444, 12
                %s1447 = smul.u32 8, %s1446
                %s1448 = scalar_lea.vmem %s1291, %s1447 [#allocation8]
                %s1449 = smul.u32 8, %s1446
                %s1450 = scalar_lea.vmem %s1324, %s1449
                // While loop
                $region98: #{tpu_custom_call.1} parent=89 // loop_pre_header
                  _
                $region99: #{tpu_custom_call.1} parent=89 // loop_header
                  %s1452 = sphi 0, %s1454
                  %p1453 = scmp.ge.s32.totalorder %s1452, %s1445
                  %s1457 = sphi 0, %s1464
                  %s1458 = sphi %s1448, %s1467
                  %s1459 = sphi %s1450, %s1468
                $region100: #{tpu_custom_call.1} parent=89 // loop_header_branch
                  %1456 = sbr.rel (%p1453) target = $region104
                $region101: #{tpu_custom_call.1} parent=89 // loop_body
                  %v1460 = vld [vmem:[%s1458] sm:$0xff]
                  %1461 = vst [vmem:[%s1459] sm:$0xff] %v1460
                  %s1462 = sadd.s32 1, %s1457
                  %p1463 = scmp.ge.s32.totalorder %s1462, %s1445
                  %s1464 = scalar_select %p1463, 0, %s1462
                  %s1465 = smul.u32 %s1464, 8
                  %s1466 = smul.u32 %s1464, 8
                  %s1467 = scalar_lea.vmem %s1448, %s1465 [#allocation8]
                  %s1468 = scalar_lea.vmem %s1450, %s1466
                $region102: #{tpu_custom_call.1} parent=89 // loop_footer
                  %s1454 = sadd.s32 %s1452, 1
                $region103: #{tpu_custom_call.1} parent=89 // loop_footer_branch
                  %1451 = sbr.rel target = $region99
                $region104: #{tpu_custom_call.1} parent=89 // loop_exit
                  _
              $region90: #{tpu_custom_call.1} parent=67 // pred_fallthru
                _
              // Predicated region
              $region105: #{tpu_custom_call.1} parent=67 // pred_check
                _
              $region106: #{tpu_custom_call.1} parent=67 // pred_check_branch
                %1470 = sbr.rel target = $region108
              $region107: #{tpu_custom_call.1} parent=67 // pred_region
                _
              $region108: #{tpu_custom_call.1} parent=67 // pred_fallthru
                _
            $region68: #{tpu_custom_call.1} parent=63 // pred_fallthru
              _
            // Predicated region
            $region69: #{tpu_custom_call.1} parent=63 // pred_check
              _
            $region70: #{tpu_custom_call.1} parent=63 // pred_check_branch
              %1331 = sbr.rel target = $region72
            $region71: #{tpu_custom_call.1} parent=63 // pred_region
              %s1333 = sdiv.u32.pop %s1320, 12
              %s1334 = srem.u32.pop %s1320, 12
              // While loop
              $region73: #{tpu_custom_call.1} parent=71 // loop_pre_header
                _
              $region74: #{tpu_custom_call.1} parent=71 // loop_header
                %s1336 = sphi 0, %s1338
                %p1337 = scmp.ge.s32.totalorder %s1336, %s1333
                %s1341 = sphi 0, %s1370
                %s1342 = sphi %s1291, %s1373
                %s1343 = sphi %s1324, %s1374
              $region75: #{tpu_custom_call.1} parent=71 // loop_header_branch
                %1340 = sbr.rel (%p1337) target = $region79
              $region76: #{tpu_custom_call.1} parent=71 // loop_body
                %v1344 = vld [vmem:[%s1342] sm:$0xff]
                %1345 = vst [vmem:[%s1343] sm:$0xff] %v1344
                %v1346 = vld [vmem:[%s1342 + $0x8] sm:$0xff]
                %1347 = vst [vmem:[%s1343 + $0x8] sm:$0xff] %v1346
                %v1348 = vld [vmem:[%s1342 + $0x10] sm:$0xff]
                %1349 = vst [vmem:[%s1343 + $0x10] sm:$0xff] %v1348
                %v1350 = vld [vmem:[%s1342 + $0x18] sm:$0xff]
                %1351 = vst [vmem:[%s1343 + $0x18] sm:$0xff] %v1350
                %v1352 = vld [vmem:[%s1342 + $0x20] sm:$0xff]
                %1353 = vst [vmem:[%s1343 + $0x20] sm:$0xff] %v1352
                %v1354 = vld [vmem:[%s1342 + $0x28] sm:$0xff]
                %1355 = vst [vmem:[%s1343 + $0x28] sm:$0xff] %v1354
                %v1356 = vld [vmem:[%s1342 + $0x30] sm:$0xff]
                %1357 = vst [vmem:[%s1343 + $0x30] sm:$0xff] %v1356
                %v1358 = vld [vmem:[%s1342 + $0x38] sm:$0xff]
                %1359 = vst [vmem:[%s1343 + $0x38] sm:$0xff] %v1358
                %v1360 = vld [vmem:[%s1342 + $0x40] sm:$0xff]
                %1361 = vst [vmem:[%s1343 + $0x40] sm:$0xff] %v1360
                %v1362 = vld [vmem:[%s1342 + $0x48] sm:$0xff]
                %1363 = vst [vmem:[%s1343 + $0x48] sm:$0xff] %v1362
                %v1364 = vld [vmem:[%s1342 + $0x50] sm:$0xff]
                %1365 = vst [vmem:[%s1343 + $0x50] sm:$0xff] %v1364
                %v1366 = vld [vmem:[%s1342 + $0x58] sm:$0xff]
                %1367 = vst [vmem:[%s1343 + $0x58] sm:$0xff] %v1366
                %s1368 = sadd.s32 1, %s1341
                %p1369 = scmp.ge.s32.totalorder %s1368, %s1333
                %s1370 = scalar_select %p1369, 0, %s1368
                %s1371 = smul.u32 %s1370, 96
                %s1372 = smul.u32 %s1370, 96
                %s1373 = scalar_lea.vmem %s1291, %s1371 [#allocation8]
                %s1374 = scalar_lea.vmem %s1324, %s1372
              $region77: #{tpu_custom_call.1} parent=71 // loop_footer
                %s1338 = sadd.s32 %s1336, 1
              $region78: #{tpu_custom_call.1} parent=71 // loop_footer_branch
                %1335 = sbr.rel target = $region74
              $region79: #{tpu_custom_call.1} parent=71 // loop_exit
                _
              %s1375 = sdiv.u32.pop %s1320, 12
              %s1376 = srem.u32.pop %s1320, 12
              %s1377 = smul.u32 %s1375, 12
              %s1378 = smul.u32 8, %s1377
              %s1379 = scalar_lea.vmem %s1291, %s1378 [#allocation8]
              %s1380 = smul.u32 8, %s1377
              %s1381 = scalar_lea.vmem %s1324, %s1380
              // While loop
              $region80: #{tpu_custom_call.1} parent=71 // loop_pre_header
                _
              $region81: #{tpu_custom_call.1} parent=71 // loop_header
                %s1383 = sphi 0, %s1385
                %p1384 = scmp.ge.s32.totalorder %s1383, %s1376
                %s1388 = sphi 0, %s1395
                %s1389 = sphi %s1379, %s1398
                %s1390 = sphi %s1381, %s1399
              $region82: #{tpu_custom_call.1} parent=71 // loop_header_branch
                %1387 = sbr.rel (%p1384) target = $region86
              $region83: #{tpu_custom_call.1} parent=71 // loop_body
                %v1391 = vld [vmem:[%s1389] sm:$0xff]
                %1392 = vst [vmem:[%s1390] sm:$0xff] %v1391
                %s1393 = sadd.s32 1, %s1388
                %p1394 = scmp.ge.s32.totalorder %s1393, %s1376
                %s1395 = scalar_select %p1394, 0, %s1393
                %s1396 = smul.u32 %s1395, 8
                %s1397 = smul.u32 %s1395, 8
                %s1398 = scalar_lea.vmem %s1379, %s1396 [#allocation8]
                %s1399 = scalar_lea.vmem %s1381, %s1397
              $region84: #{tpu_custom_call.1} parent=71 // loop_footer
                %s1385 = sadd.s32 %s1383, 1
              $region85: #{tpu_custom_call.1} parent=71 // loop_footer_branch
                %1382 = sbr.rel target = $region81
              $region86: #{tpu_custom_call.1} parent=71 // loop_exit
                _
            $region72: #{tpu_custom_call.1} parent=63 // pred_fallthru
              _
          $region64: #{tpu_custom_call.1} parent=59 // pred_fallthru
            _
          %1471 = vnop
        $region60: #{tpu_custom_call.1} parent=43 // pred_fallthru
          _
      $region44: #{tpu_custom_call.1} parent=5 // pred_fallthru
        _
      %p1472 = scmp.le.s32.totalorder 2, %s21
      // Predicated region
      $region109: #{tpu_custom_call.1} parent=5 // pred_check
        %p1473 = pneg %p1472
      $region110: #{tpu_custom_call.1} parent=5 // pred_check_branch
        %1475 = sbr.rel (%p1473) target = $region112
      $region111: #{tpu_custom_call.1} parent=5 // pred_region
        %s1476 = ssub.s32 %s21, 2
        // Predicated region
        $region113: #{tpu_custom_call.1} parent=111 // pred_check
          %p1477 = pneg %p186
        $region114: #{tpu_custom_call.1} parent=111 // pred_check_branch
          %1479 = sbr.rel (%p1477) target = $region116
        $region115: #{tpu_custom_call.1} parent=111 // pred_region
          %s1480 = sand.u32 %s171, 1
          %s1481 = scalar_lea.sflag [#allocation4], %s1480
          %s1482 = sand.u32 %s171, 1
          %s1483 = smul.addr %s1482, 96
          %s1484 = scalar_lea.vmem [#allocation7], %s1483
          %1485 = dma.done %s1481, 1536
        $region116: #{tpu_custom_call.1} parent=111 // pred_fallthru
          _
        // Predicated region
        $region117: #{tpu_custom_call.1} parent=111 // pred_check
          %p1486 = pneg %p212
        $region118: #{tpu_custom_call.1} parent=111 // pred_check_branch
          %1488 = sbr.rel (%p1486) target = $region120
        $region119: #{tpu_custom_call.1} parent=111 // pred_region
          %s1489 = sand.u32 %s197, 1
          %s1490 = sand.u32 %s197, 1
          %s1491 = smul.addr %s1490, 96
          %s1492 = scalar_lea.vmem [#allocation8], %s1491
        $region120: #{tpu_custom_call.1} parent=111 // pred_fallthru
          _
      $region112: #{tpu_custom_call.1} parent=5 // pred_fallthru
        _
    $region6: #{tpu_custom_call.1} parent=1 // loop_footer
      %s25 = sadd.s32 1, %s21
    $region7: #{tpu_custom_call.1} parent=1 // loop_footer_branch
      %20 = sbr.rel target = $region3
    $region8: #{tpu_custom_call.1} parent=1 // loop_exit
      _
    %1493 = vsyncpa [#allocation3], 1
    %s1494 = scalar_lea.sflag [#allocation3], 1
    %1495 = vsyncpa %s1494, 1
    %1496 = vsyncpa [#allocation6], 1
    %1497 = vsyncpa [#allocation4], 1
    %s1498 = scalar_lea.sflag [#allocation4], 1
    %1499 = vsyncpa %s1498, 1

// kernel: tpu_custom_call.1
$region0: #{tpu_custom_call.1}
  #allocation0 [shape = 'u32[]', space=smem, size = 0x4, offset = 0x4, fixed_abs, tag = 'smem constant byte address 0x4 - core index']
  #allocation1 [shape = 'u32[144,128]{1,0:T(1,128)}', space=vmem, size = 0x12000, scoped, tag = 'internal scratch']
  %s0 = inlined_call_operand.hbm [shape: f32[100,256], index: 0, kind: input, shape index: {}]
  %s1 = inlined_call_operand.vmem [shape: f32[100,5], index: 1, kind: input, shape index: {}]
  %s2 = inlined_call_operand.vmem [shape: f32[5,128], index: 2, kind: input, shape index: {}]
  %s3 = inlined_call_operand.hbm [shape: bf16[256,128], index: 3, kind: input, shape index: {}]
  %s4 = inlined_call_operand.vmem [shape: bf16[128,128], index: 4, kind: input, shape index: {}]
  %s5 = inlined_call_operand.vmem [shape: f32[1,128], index: 5, kind: input, shape index: {}]
  %s6 = inlined_call_operand.hbm [shape: f32[100,128], index: 6, kind: output, shape index: {0}]
  %s7 = inlined_call_operand.vmem [shape: f32[100,1], index: 7, kind: output, shape index: {1}]
  %8 = xla_tuple %s6, %s7
  %s9 = sld [smem:[#allocation0]]
  $region121: #{tpu_custom_call.1} parent=0
    _
  %s11 = ssub.s32 1, %s9
  %s12 = scalar_select 0, %s11, %s9
  $region1: #{tpu_custom_call.1} parent=0
    #allocation2 [shape = 'u8[196608]{0}', space=vmem, size = 0x30000, scoped, tag = 'input window, operand 0']
    #allocation3 [shape = 's32[2]{0}', space=sflag, size = 0x8, scoped, tag = 'scoped memory for tpu_custom_call.1']
    #allocation4 [shape = 's32[2]{0}', space=sflag, size = 0x8, scoped, tag = 'scoped memory for tpu_custom_call.1']
    #allocation5 [shape = 'u8[65536]{0}', space=vmem, size = 0x10000, scoped, tag = 'input window, operand 3, single buffered']
    #allocation6 [shape = 's32[1]{0}', space=sflag, size = 0x4, scoped, tag = 'scoped memory for tpu_custom_call.1']
    #allocation7 [shape = 'u8[98304]{0}', space=vmem, size = 0x18000, scoped, tag = 'output window, operand 0']
    #allocation8 [shape = 'u8[98304]{0}', space=vmem, size = 0x18000, scoped, tag = 'output window, operand 1']
    %13 = vsyncpa [#allocation3], 0
    %s14 = scalar_lea.sflag [#allocation3], 1
    %15 = vsyncpa %s14, 0
    %16 = vsyncpa [#allocation6], 0
    %17 = vsyncpa [#allocation4], 0
    %s18 = scalar_lea.sflag [#allocation4], 1
    %19 = vsyncpa %s18, 0
    loop: start=0, step=1, limit=4
    $region2: #{tpu_custom_call.1} parent=1 // loop_pre_header
      _
    $region3: #{tpu_custom_call.1} parent=1 // loop_header
      %s21 = sphi 0, %s25
      %p22 = scmp.ge.s32.totalorder %s21, 4
      %s31 = sphi 0, %s33
      %s34 = sphi 0, %s31
      %s35 = sphi 0, %s34
      %s51 = sphi 0, %s35
      %s57 = sphi 0, %s59
      %s60 = sphi 0, %s57
      %s61 = sphi 0, %s60
      %s77 = sphi 0, %s61
      %s81 = sphi 0, %s81
      %s83 = sphi 0, %s81
      %s84 = sphi 0, %s83
      %s98 = sphi 0, %s84
      %s102 = sphi 0, %s102
      %s104 = sphi 0, %s102
      %s105 = sphi 0, %s104
      %s119 = sphi 0, %s105
      %s123 = sphi 0, %s123
      %s125 = sphi 0, %s123
      %s126 = sphi 0, %s125
      %s140 = sphi 0, %s126
      %s144 = sphi 0, %s144
      %s146 = sphi 0, %s144
      %s147 = sphi 0, %s146
      %s161 = sphi 0, %s147
      %s167 = sphi 0, %s169
      %s170 = sphi 0, %s167
      %s171 = sphi 0, %s170
      %s187 = sphi 0, %s171
      %s193 = sphi 0, %s195
      %s196 = sphi 0, %s193
      %s197 = sphi 0, %s196
      %s213 = sphi 0, %s197
    $region4: #{tpu_custom_call.1} parent=1 // loop_header_branch
      %24 = sbr.rel (%p22) target = $region8
    $region5: #{tpu_custom_call.1} parent=1 // loop_body
      %s26 = ssub.s32 %s21, 1
      %s27 = ssub.s32 %s21, 2
      %s28 = sadd.s32 %s21, 1
      %s29 = ssub.s32 %s21, %s28
      %p30 = scmp.eq.s32.totalorder %s29, 0
      %s32 = sadd.s32 %s31, 1
      %s33 = scalar_select %p30, %s31, %s32
      %p36 = pneg %p30
      %p37 = scmp.eq.s32.totalorder %s21, 1
      %p38 = por %p36, %p37
      %p39 = scmp.ne.s32.totalorder %s31, %s34
      %p40 = scmp.eq.s32.totalorder %s21, 0
      %p41 = por %p39, %p40
      %p42 = scmp.ne.s32.totalorder %s31, %s34
      %p43 = scmp.eq.s32.totalorder %s26, 1
      %p44 = por %p42, %p43
      %p45 = scmp.ne.s32.totalorder %s34, %s35
      %p46 = scmp.eq.s32.totalorder %s26, 0
      %p47 = por %p45, %p46
      %p48 = scmp.ne.s32.totalorder %s34, %s35
      %p49 = scmp.eq.s32.totalorder %s27, 1
      %p50 = por %p48, %p49
      %p52 = scmp.ne.s32.totalorder %s35, %s51
      %p53 = scmp.eq.s32.totalorder %s27, 0
      %p54 = por %p52, %p53
      %s55 = ssub.s32 %s21, %s28
      %p56 = scmp.eq.s32.totalorder %s55, 0
      %s58 = sadd.s32 %s57, 1
      %s59 = scalar_select %p56, %s57, %s58
      %p62 = pneg %p56
      %p63 = scmp.eq.s32.totalorder %s21, 1
      %p64 = por %p62, %p63
      %p65 = scmp.ne.s32.totalorder %s57, %s60
      %p66 = scmp.eq.s32.totalorder %s21, 0
      %p67 = por %p65, %p66
      %p68 = scmp.ne.s32.totalorder %s57, %s60
      %p69 = scmp.eq.s32.totalorder %s26, 1
      %p70 = por %p68, %p69
      %p71 = scmp.ne.s32.totalorder %s60, %s61
      %p72 = scmp.eq.s32.totalorder %s26, 0
      %p73 = por %p71, %p72
      %p74 = scmp.ne.s32.totalorder %s60, %s61
      %p75 = scmp.eq.s32.totalorder %s27, 1
      %p76 = por %p74, %p75
      %p78 = scmp.ne.s32.totalorder %s61, %s77
      %p79 = scmp.eq.s32.totalorder %s27, 0
      %p80 = por %p78, %p79
      %s82 = sadd.s32 %s81, 1
      %p85 = scmp.eq.s32.totalorder %s21, 1
      %p86 = scmp.ne.s32.totalorder %s81, %s83
      %p87 = scmp.eq.s32.totalorder %s21, 0
      %p88 = por %p86, %p87
      %p89 = scmp.ne.s32.totalorder %s81, %s83
      %p90 = scmp.eq.s32.totalorder %s26, 1
      %p91 = por %p89, %p90
      %p92 = scmp.ne.s32.totalorder %s83, %s84
      %p93 = scmp.eq.s32.totalorder %s26, 0
      %p94 = por %p92, %p93
      %p95 = scmp.ne.s32.totalorder %s83, %s84
      %p96 = scmp.eq.s32.totalorder %s27, 1
      %p97 = por %p95, %p96
      %p99 = scmp.ne.s32.totalorder %s84, %s98
      %p100 = scmp.eq.s32.totalorder %s27, 0
      %p101 = por %p99, %p100
      %s103 = sadd.s32 %s102, 1
      %p106 = scmp.eq.s32.totalorder %s21, 1
      %p107 = scmp.ne.s32.totalorder %s102, %s104
      %p108 = scmp.eq.s32.totalorder %s21, 0
      %p109 = por %p107, %p108
      %p110 = scmp.ne.s32.totalorder %s102, %s104
      %p111 = scmp.eq.s32.totalorder %s26, 1
      %p112 = por %p110, %p111
      %p113 = scmp.ne.s32.totalorder %s104, %s105
      %p114 = scmp.eq.s32.totalorder %s26, 0
      %p115 = por %p113, %p114
      %p116 = scmp.ne.s32.totalorder %s104, %s105
      %p117 = scmp.eq.s32.totalorder %s27, 1
      %p118 = por %p116, %p117
      %p120 = scmp.ne.s32.totalorder %s105, %s119
      %p121 = scmp.eq.s32.totalorder %s27, 0
      %p122 = por %p120, %p121
      %s124 = sadd.s32 %s123, 1
      %p127 = scmp.eq.s32.totalorder %s21, 1
      %p128 = scmp.ne.s32.totalorder %s123, %s125
      %p129 = scmp.eq.s32.totalorder %s21, 0
      %p130 = por %p128, %p129
      %p131 = scmp.ne.s32.totalorder %s123, %s125
      %p132 = scmp.eq.s32.totalorder %s26, 1
      %p133 = por %p131, %p132
      %p134 = scmp.ne.s32.totalorder %s125, %s126
      %p135 = scmp.eq.s32.totalorder %s26, 0
      %p136 = por %p134, %p135
      %p137 = scmp.ne.s32.totalorder %s125, %s126
      %p138 = scmp.eq.s32.totalorder %s27, 1
      %p139 = por %p137, %p138
      %p141 = scmp.ne.s32.totalorder %s126, %s140
      %p142 = scmp.eq.s32.totalorder %s27, 0
      %p143 = por %p141, %p142
      %s145 = sadd.s32 %s144, 1
      %p148 = scmp.eq.s32.totalorder %s21, 1
      %p149 = scmp.ne.s32.totalorder %s144, %s146
      %p150 = scmp.eq.s32.totalorder %s21, 0
      %p151 = por %p149, %p150
      %p152 = scmp.ne.s32.totalorder %s144, %s146
      %p153 = scmp.eq.s32.totalorder %s26, 1
      %p154 = por %p152, %p153
      %p155 = scmp.ne.s32.totalorder %s146, %s147
      %p156 = scmp.eq.s32.totalorder %s26, 0
      %p157 = por %p155, %p156
      %p158 = scmp.ne.s32.totalorder %s146, %s147
      %p159 = scmp.eq.s32.totalorder %s27, 1
      %p160 = por %p158, %p159
      %p162 = scmp.ne.s32.totalorder %s147, %s161
      %p163 = scmp.eq.s32.totalorder %s27, 0
      %p164 = por %p162, %p163
      %s165 = ssub.s32 %s21, %s28
      %p166 = scmp.eq.s32.totalorder %s165, 0
      %s168 = sadd.s32 %s167, 1
      %s169 = scalar_select %p166, %s167, %s168
      %p172 = pneg %p166
      %p173 = scmp.eq.s32.totalorder %s21, 1
      %p174 = por %p172, %p173
      %p175 = scmp.ne.s32.totalorder %s167, %s170
      %p176 = scmp.eq.s32.totalorder %s21, 0
      %p177 = por %p175, %p176
      %p178 = scmp.ne.s32.totalorder %s167, %s170
      %p179 = scmp.eq.s32.totalorder %s26, 1
      %p180 = por %p178, %p179
      %p181 = scmp.ne.s32.totalorder %s170, %s171
      %p182 = scmp.eq.s32.totalorder %s26, 0
      %p183 = por %p181, %p182
      %p184 = scmp.ne.s32.totalorder %s170, %s171
      %p185 = scmp.eq.s32.totalorder %s27, 1
      %p186 = por %p184, %p185
      %p188 = scmp.ne.s32.totalorder %s171, %s187
      %p189 = scmp.eq.s32.totalorder %s27, 0
      %p190 = por %p188, %p189
      %s191 = ssub.s32 %s21, %s28
      %p192 = scmp.eq.s32.totalorder %s191, 0
      %s194 = sadd.s32 %s193, 1
      %s195 = scalar_select %p192, %s193, %s194
      %p198 = pneg %p192
      %p199 = scmp.eq.s32.totalorder %s21, 1
      %p200 = por %p198, %p199
      %p201 = scmp.ne.s32.totalorder %s193, %s196
      %p202 = scmp.eq.s32.totalorder %s21, 0
      %p203 = por %p201, %p202
      %p204 = scmp.ne.s32.totalorder %s193, %s196
      %p205 = scmp.eq.s32.totalorder %s26, 1
      %p206 = por %p204, %p205
      %p207 = scmp.ne.s32.totalorder %s196, %s197
      %p208 = scmp.eq.s32.totalorder %s26, 0
      %p209 = por %p207, %p208
      %p210 = scmp.ne.s32.totalorder %s196, %s197
      %p211 = scmp.eq.s32.totalorder %s27, 1
      %p212 = por %p210, %p211
      %p214 = scmp.ne.s32.totalorder %s197, %s213
      %p215 = scmp.eq.s32.totalorder %s27, 0
      %p216 = por %p214, %p215
      %p217 = scmp.le.s32.totalorder 1, %s21
      %p218 = scmp.lt.s32.totalorder %s21, 3
      %p219 = pnand %p217, %p218
      %p220 = pneg %p219
      // Predicated region
      $region9: #{tpu_custom_call.1} parent=5 // pred_check
        _
      $region10: #{tpu_custom_call.1} parent=5 // pred_check_branch
        %222 = sbr.rel (%p219) target = $region12
      $region11: #{tpu_custom_call.1} parent=5 // pred_region
        %s223 = ssub.s32 %s21, 1
        // Predicated region
        $region13: #{tpu_custom_call.1} parent=11 // pred_check
          %p224 = pneg %p94
        $region14: #{tpu_custom_call.1} parent=11 // pred_check_branch
          %226 = sbr.rel (%p224) target = $region16
        $region15: #{tpu_custom_call.1} parent=11 // pred_region
          _
        $region16: #{tpu_custom_call.1} parent=11 // pred_fallthru
          _
        // Predicated region
        $region17: #{tpu_custom_call.1} parent=11 // pred_check
          %p227 = pneg %p115
        $region18: #{tpu_custom_call.1} parent=11 // pred_check_branch
          %229 = sbr.rel (%p227) target = $region20
        $region19: #{tpu_custom_call.1} parent=11 // pred_region
          %s231 = ssub.s32 2048, 2048
          %232 = vsyncadd [#allocation6], %s231
          %s233 = sshll.u32 [#allocation5], 4
          %s234 = int_to_ptr.vmem [resolvable:$true] %s233
          %239 = dma.hbm_to_vmem [thread:$0]  %s3, 2048, %s234, [#allocation6], 64, 64, 4
        $region20: #{tpu_custom_call.1} parent=11 // pred_fallthru
          _
        // Predicated region
        $region21: #{tpu_custom_call.1} parent=11 // pred_check
          %p240 = pneg %p136
        $region22: #{tpu_custom_call.1} parent=11 // pred_check_branch
          %242 = sbr.rel (%p240) target = $region24
        $region23: #{tpu_custom_call.1} parent=11 // pred_region
          _
        $region24: #{tpu_custom_call.1} parent=11 // pred_fallthru
          _
        // Predicated region
        $region25: #{tpu_custom_call.1} parent=11 // pred_check
          %p243 = pneg %p157
        $region26: #{tpu_custom_call.1} parent=11 // pred_check_branch
          %245 = sbr.rel (%p243) target = $region28
        $region27: #{tpu_custom_call.1} parent=11 // pred_region
          _
        $region28: #{tpu_custom_call.1} parent=11 // pred_fallthru
          _
      $region12: #{tpu_custom_call.1} parent=5 // pred_fallthru
        _
      %p246 = scmp.lt.s32.totalorder %s21, 2
      // Predicated region
      $region29: #{tpu_custom_call.1} parent=5 // pred_check
        %p247 = pneg %p246
      $region30: #{tpu_custom_call.1} parent=5 // pred_check_branch
        %249 = sbr.rel (%p247) target = $region32
      $region31: #{tpu_custom_call.1} parent=5 // pred_region
        // Predicated region
        $region33: #{tpu_custom_call.1} parent=31 // pred_check
          %p250 = pneg %p41
        $region34: #{tpu_custom_call.1} parent=31 // pred_check_branch
          %252 = sbr.rel (%p250) target = $region36
        $region35: #{tpu_custom_call.1} parent=31 // pred_region
          %s253 = sand.u32 %s31, 1
          %s254 = scalar_lea.sflag [#allocation3], %s253
          %s255 = sand.u32 %s31, 1
          %s256 = smul.addr %s255, 192
          %s257 = scalar_lea.vmem [#allocation2], %s256
          %s258 = smul.u32 12, %s21
          %s259 = ssub.s32 13, %s258
          %p260 = scmp.lt.s32.totalorder %s259, 12
          %s261 = scalar_select %p260, %s259, 12
          %s262 = smul.u32 128, %s261
          %s263 = smul.u32 %s262, 2
          %s265 = ssub.s32 3072, %s263
          %266 = vsyncadd %s254, %s265
          %p267 = scmp.ne.s32.totalorder 0, %s263
          %s268 = smul.addr %s258, 2
          %s269 = smul.addr %s268, 128
          %s270 = scalar_lea.hbm %s0, %s269
          %s271 = smul.u32 16, %s261
          %s272 = sshll.u32 %s257, 4
          %s273 = int_to_ptr.vmem [resolvable:$true] %s272
          %s274 = sshll.u32 %s271, 4
          %278 = dma.hbm_to_vmem [thread:$0]  (%p267), %s270, %s274, %s273, %s254, 256, 256, 16
        $region36: #{tpu_custom_call.1} parent=31 // pred_fallthru
          _
        // Predicated region
        $region37: #{tpu_custom_call.1} parent=31 // pred_check
          %p279 = pneg %p67
        $region38: #{tpu_custom_call.1} parent=31 // pred_check_branch
          %281 = sbr.rel (%p279) target = $region40
        $region39: #{tpu_custom_call.1} parent=31 // pred_region
          %s282 = smul.u32 12, %s21
          %s283 = ssub.s32 13, %s282
          %p284 = scmp.lt.s32.totalorder %s283, 12
          %s285 = scalar_select %p284, %s283, 12
          %s286 = smul.u32 128, %s285
          %p287 = scmp.lt.s32.totalorder %s282, 12
          %s288 = scalar_select %p287, %s282, 12
          %s289 = smul.addr %s288, 8
          %s290 = scalar_lea.vmem %s1, %s289
          %s291 = smul.u32 12, %s21
          %s292 = ssub.s32 13, %s291
          %p293 = scmp.lt.s32.totalorder %s292, 12
          %s294 = scalar_select %p293, %s292, 12
          %s295 = smul.u32 128, %s294
        $region40: #{tpu_custom_call.1} parent=31 // pred_fallthru
          _
      $region32: #{tpu_custom_call.1} parent=5 // pred_fallthru
        _
      %p296 = scmp.le.s32.totalorder 1, %s21
      %p297 = scmp.lt.s32.totalorder %s21, 3
      %p298 = pnand %p296, %p297
      %p299 = pneg %p298
      // Predicated region
      $region41: #{tpu_custom_call.1} parent=5 // pred_check
        _
      $region42: #{tpu_custom_call.1} parent=5 // pred_check_branch
        %301 = sbr.rel (%p298) target = $region44
      $region43: #{tpu_custom_call.1} parent=5 // pred_region
        %s302 = ssub.s32 %s21, 1
        %s303 = sand.u32 %s34, 1
        %s304 = scalar_lea.sflag [#allocation3], %s303
        %s305 = sand.u32 %s34, 1
        %s306 = smul.addr %s305, 192
        %s307 = scalar_lea.vmem [#allocation2], %s306
        // Predicated region
        $region45: #{tpu_custom_call.1} parent=43 // pred_check
          %p308 = pneg %p47
        $region46: #{tpu_custom_call.1} parent=43 // pred_check_branch
          %310 = sbr.rel (%p308) target = $region48
        $region47: #{tpu_custom_call.1} parent=43 // pred_region
          %311 = dma.done %s304, 3072
        $region48: #{tpu_custom_call.1} parent=43 // pred_fallthru
          _
        // Predicated region
        $region49: #{tpu_custom_call.1} parent=43 // pred_check
          %p312 = pneg %p115
        $region50: #{tpu_custom_call.1} parent=43 // pred_check_branch
          %314 = sbr.rel (%p312) target = $region52
        $region51: #{tpu_custom_call.1} parent=43 // pred_region
          %315 = dma.done [#allocation6], 2048
        $region52: #{tpu_custom_call.1} parent=43 // pred_fallthru
          _
        %s316 = sand.u32 %s34, 1
        %s317 = scalar_lea.sflag [#allocation3], %s316
        %s318 = sand.u32 %s34, 1
        %s319 = smul.addr %s318, 192
        %s320 = scalar_lea.vmem [#allocation2], %s319
        %p321 = pneg %p47
        %p322 = pneg %p44
        %s323 = smul.u32 12, %s26
        %s324 = ssub.s32 13, %s323
        %p325 = scmp.lt.s32.totalorder %s324, 12
        %s326 = scalar_select %p325, %s324, 12
        %s327 = smul.u32 128, %s326
        %p328 = scmp.lt.s32.totalorder %s323, 12
        %s329 = scalar_select %p328, %s323, 12
        %s330 = smul.addr %s329, 8
        %s331 = scalar_lea.vmem %s1, %s330
        %p332 = pneg %p73
        %p333 = pneg %p70
        %p334 = pneg %p94
        %p335 = pneg %p91
        %p336 = pneg %p115
        %p337 = pneg %p112
        %p338 = pneg %p136
        %p339 = pneg %p133
        %p340 = pneg %p157
        %p341 = pneg %p154
        %p342 = pneg %p183
        %p343 = pneg %p180
        %s344 = sand.u32 %s170, 1
        %s345 = scalar_lea.sflag [#allocation4], %s344
        %s346 = sand.u32 %s170, 1
        %s347 = smul.addr %s346, 96
        %s348 = scalar_lea.vmem [#allocation7], %s347
        %p349 = pneg %p209
        %p350 = pneg %p206
        %s351 = sand.u32 %s196, 1
        %s352 = sand.u32 %s196, 1
        %s353 = smul.addr %s352, 96
        %s354 = scalar_lea.vmem [#allocation8], %s353
        %s355 = smul.u32 12, %s26
        %s356 = ssub.s32 13, %s355
        %p357 = scmp.lt.s32.totalorder %s356, 12
        %s358 = scalar_select %p357, %s356, 12
        %s359 = smul.u32 128, %s358
        %s360 = smul.u32 %s359, 2
        %s361 = smul.u32 12, %s26
        %s362 = ssub.s32 13, %s361
        %p363 = scmp.lt.s32.totalorder %s362, 12
        %s364 = scalar_select %p363, %s362, 12
        %s365 = smul.u32 128, %s364
        %p366 = scmp.lt.s32.totalorder %s361, 12
        %s367 = scalar_select %p366, %s361, 12
        %s368 = smul.addr %s367, 8
        %s369 = scalar_lea.vmem %s1, %s368
        %s370 = smul.u32 12, %s26
        %s371 = ssub.s32 13, %s370
        %p372 = scmp.lt.s32.totalorder %s371, 12
        %s373 = scalar_select %p372, %s371, 12
        %s374 = smul.u32 128, %s373
        %s375 = smul.u32 12, %s26
        %s376 = ssub.s32 13, %s375
        %p377 = scmp.lt.s32.totalorder %s376, 12
        %s378 = scalar_select %p377, %s376, 12
        %s379 = smul.u32 128, %s378
        %s380 = smul.u32 12, %s26
        %s381 = ssub.s32 13, %s380
        %p382 = scmp.lt.s32.totalorder %s381, 12
        %s383 = scalar_select %p382, %s381, 12
        %s384 = smul.u32 128, %s383
        %v386 = vld [vmem:[%s307] sm:$0xff]
        %v387 = vld [vmem:[%s307 + $0x8] sm:$0xff]
        %v388 = vld [vmem:[%s307 + $0x10] sm:$0xff]
        %v389 = vld [vmem:[%s307 + $0x18] sm:$0xff]
        %v390 = vld [vmem:[%s307 + $0x20] sm:$0xff]
        %v391 = vld [vmem:[%s307 + $0x28] sm:$0xff]
        %v392 = vld [vmem:[%s307 + $0x30] sm:$0xff]
        %v393 = vld [vmem:[%s307 + $0x38] sm:$0xff]
        %v394 = vld [vmem:[%s307 + $0x40] sm:$0xff]
        %v395 = vld [vmem:[%s307 + $0x48] sm:$0xff]
        %v396 = vld [vmem:[%s307 + $0x50] sm:$0xff]
        %v397 = vld [vmem:[%s307 + $0x58] sm:$0xff]
        %v398 = vld [vmem:[%s307 + $0x60] sm:$0xff]
        %v399 = vld [vmem:[%s307 + $0x68] sm:$0xff]
        %v400 = vld [vmem:[%s307 + $0x70] sm:$0xff]
        %v401 = vld [vmem:[%s307 + $0x78] sm:$0xff]
        %v402 = vld [vmem:[%s307 + $0x80] sm:$0xff]
        %v403 = vld [vmem:[%s307 + $0x88] sm:$0xff]
        %v404 = vld [vmem:[%s307 + $0x90] sm:$0xff]
        %v405 = vld [vmem:[%s307 + $0x98] sm:$0xff]
        %v406 = vld [vmem:[%s307 + $0xa0] sm:$0xff]
        %v407 = vld [vmem:[%s307 + $0xa8] sm:$0xff]
        %v408 = vld [vmem:[%s307 + $0xb0] sm:$0xff]
        %v409 = vld [vmem:[%s307 + $0xb8] sm:$0xff]
        %v410 = vpack.c.bf16 %v388, %v386
        %v411 = vpack.c.bf16 %v389, %v387
        %v412 = vpack.c.bf16 %v392, %v390
        %v413 = vpack.c.bf16 %v393, %v391
        %v414 = vpack.c.bf16 %v396, %v394
        %v415 = vpack.c.bf16 %v397, %v395
        %v416 = vpack.c.bf16 %v400, %v398
        %v417 = vpack.c.bf16 %v401, %v399
        %v418 = vpack.c.bf16 %v404, %v402
        %v419 = vpack.c.bf16 %v405, %v403
        %v420 = vpack.c.bf16 %v408, %v406
        %v421 = vpack.c.bf16 %v409, %v407
        %v422 = vld [vmem:[#allocation5] sm:$0xf]
        %v423 = vld [vmem:[#allocation5 + $0x4] sm:$0xf]
        %v424 = vld [vmem:[#allocation5 + $0x8] sm:$0xf]
        %v425 = vld [vmem:[#allocation5 + $0xc] sm:$0xf]
        %v426 = vld [vmem:[#allocation5 + $0x10] sm:$0xf]
        %v427 = vld [vmem:[#allocation5 + $0x14] sm:$0xf]
        %v428 = vld [vmem:[#allocation5 + $0x18] sm:$0xf]
        %v429 = vld [vmem:[#allocation5 + $0x1c] sm:$0xf]
        %v430 = vld [vmem:[#allocation5 + $0x20] sm:$0xf]
        %v431 = vld [vmem:[#allocation5 + $0x24] sm:$0xf]
        %v432 = vld [vmem:[#allocation5 + $0x28] sm:$0xf]
        %v433 = vld [vmem:[#allocation5 + $0x2c] sm:$0xf]
        %v434 = vld [vmem:[#allocation5 + $0x30] sm:$0xf]
        %v435 = vld [vmem:[#allocation5 + $0x34] sm:$0xf]
        %v436 = vld [vmem:[#allocation5 + $0x38] sm:$0xf]
        %v437 = vld [vmem:[#allocation5 + $0x3c] sm:$0xf]
        %v438 = vld [vmem:[#allocation5 + $0x40] sm:$0xf]
        %v439 = vld [vmem:[#allocation5 + $0x44] sm:$0xf]
        %v440 = vld [vmem:[#allocation5 + $0x48] sm:$0xf]
        %v441 = vld [vmem:[#allocation5 + $0x4c] sm:$0xf]
        %v442 = vld [vmem:[#allocation5 + $0x50] sm:$0xf]
        %v443 = vld [vmem:[#allocation5 + $0x54] sm:$0xf]
        %v444 = vld [vmem:[#allocation5 + $0x58] sm:$0xf]
        %v445 = vld [vmem:[#allocation5 + $0x5c] sm:$0xf]
        %v446 = vld [vmem:[#allocation5 + $0x60] sm:$0xf]
        %v447 = vld [vmem:[#allocation5 + $0x64] sm:$0xf]
        %v448 = vld [vmem:[#allocation5 + $0x68] sm:$0xf]
        %v449 = vld [vmem:[#allocation5 + $0x6c] sm:$0xf]
        %v450 = vld [vmem:[#allocation5 + $0x70] sm:$0xf]
        %v451 = vld [vmem:[#allocation5 + $0x74] sm:$0xf]
        %v452 = vld [vmem:[#allocation5 + $0x78] sm:$0xf]
        %v453 = vld [vmem:[#allocation5 + $0x7c] sm:$0xf]
        %v454 = vand.u32 2147483647, %v386
        %v455 = vand.u32 2147483647, %v387
        %v456 = vand.u32 2147483647, %v388
        %v457 = vand.u32 2147483647, %v389
        %v458 = vand.u32 2147483647, %v390
        %v459 = vand.u32 2147483647, %v391
        %v460 = vand.u32 2147483647, %v392
        %v461 = vand.u32 2147483647, %v393
        %v462 = vand.u32 2147483647, %v394
        %v463 = vand.u32 2147483647, %v395
        %v464 = vand.u32 2147483647, %v396
        %v465 = vand.u32 2147483647, %v397
        %v466 = vand.u32 2147483647, %v398
        %v467 = vand.u32 2147483647, %v399
        %v468 = vand.u32 2147483647, %v400
        %v469 = vand.u32 2147483647, %v401
        %v470 = vand.u32 2147483647, %v402
        %v471 = vand.u32 2147483647, %v403
        %v472 = vand.u32 2147483647, %v404
        %v473 = vand.u32 2147483647, %v405
        %v474 = vand.u32 2147483647, %v406
        %v475 = vand.u32 2147483647, %v407
        %v476 = vand.u32 2147483647, %v408
        %v477 = vand.u32 2147483647, %v409
        %v478 = vadd.f32 %v454, %v455
        %479 = vadd.xlane.f32.xlu0 %v478
        %v480 = vpop.xlane.xlu0 %479
        %v481 = vadd.f32 %v456, %v457
        %482 = vadd.xlane.f32.xlu0 %v481
        %v483 = vpop.xlane.xlu0 %482
        %v484 = vadd.f32 %v458, %v459
        %485 = vadd.xlane.f32.xlu0 %v484
        %v486 = vpop.xlane.xlu0 %485
        %v487 = vadd.f32 %v460, %v461
        %488 = vadd.xlane.f32.xlu0 %v487
        %v489 = vpop.xlane.xlu0 %488
        %v490 = vadd.f32 %v462, %v463
        %491 = vadd.xlane.f32.xlu0 %v490
        %v492 = vpop.xlane.xlu0 %491
        %v493 = vadd.f32 %v464, %v465
        %494 = vadd.xlane.f32.xlu0 %v493
        %v495 = vpop.xlane.xlu0 %494
        %v496 = vadd.f32 %v466, %v467
        %497 = vadd.xlane.f32.xlu0 %v496
        %v498 = vpop.xlane.xlu0 %497
        %v499 = vadd.f32 %v468, %v469
        %500 = vadd.xlane.f32.xlu0 %v499
        %v501 = vpop.xlane.xlu0 %500
        %v502 = vadd.f32 %v470, %v471
        %503 = vadd.xlane.f32.xlu0 %v502
        %v504 = vpop.xlane.xlu0 %503
        %v505 = vadd.f32 %v472, %v473
        %506 = vadd.xlane.f32.xlu0 %v505
        %v507 = vpop.xlane.xlu0 %506
        %v508 = vadd.f32 %v474, %v475
        %509 = vadd.xlane.f32.xlu0 %v508
        %v510 = vpop.xlane.xlu0 %509
        %v511 = vadd.f32 %v476, %v477
        %512 = vadd.xlane.f32.xlu0 %v511
        %v513 = vpop.xlane.xlu0 %512
        %vm514 = vcmask 7168
        %515 = vst.msk [vmem:[%s354] sm:$0xff] %vm514, %v480
        %516 = vst.msk [vmem:[%s354 + $0x8] sm:$0xff] %vm514, %v483
        %517 = vst.msk [vmem:[%s354 + $0x10] sm:$0xff] %vm514, %v486
        %518 = vst.msk [vmem:[%s354 + $0x18] sm:$0xff] %vm514, %v489
        %519 = vst.msk [vmem:[%s354 + $0x20] sm:$0xff] %vm514, %v492
        %520 = vst.msk [vmem:[%s354 + $0x28] sm:$0xff] %vm514, %v495
        %521 = vst.msk [vmem:[%s354 + $0x30] sm:$0xff] %vm514, %v498
        %522 = vst.msk [vmem:[%s354 + $0x38] sm:$0xff] %vm514, %v501
        %523 = vst.msk [vmem:[%s354 + $0x40] sm:$0xff] %vm514, %v504
        %524 = vst.msk [vmem:[%s354 + $0x48] sm:$0xff] %vm514, %v507
        %525 = vst.msk [vmem:[%s354 + $0x50] sm:$0xff] %vm514, %v510
        %526 = vst.msk [vmem:[%s354 + $0x58] sm:$0xff] %vm514, %v513
        %v527 = vld [vmem:[%s369] sm:$0xff]
        %v528 = vld [vmem:[%s369 + $0x8] sm:$0xff]
        %v529 = vld [vmem:[%s369 + $0x10] sm:$0xff]
        %v530 = vld [vmem:[%s369 + $0x18] sm:$0xff]
        %v531 = vld [vmem:[%s369 + $0x20] sm:$0xff]
        %v532 = vld [vmem:[%s369 + $0x28] sm:$0xff]
        %v533 = vld [vmem:[%s369 + $0x30] sm:$0xff]
        %v534 = vld [vmem:[%s369 + $0x38] sm:$0xff]
        %v535 = vld [vmem:[%s369 + $0x40] sm:$0xff]
        %v536 = vld [vmem:[%s369 + $0x48] sm:$0xff]
        %v537 = vld [vmem:[%s369 + $0x50] sm:$0xff]
        %v538 = vld [vmem:[%s369 + $0x58] sm:$0xff]
        %v539 = vld [vmem:[%s2] sm:$0x1]
        %541 = vset.pattern.permute.xlu0 0
        %542 = vperm.xlu0 %541, %v527
        %v543 = vpop.permute.xlu0 %542
        %546 = vset.pattern.permute.xlu0 0
        %547 = vperm.xlu0 %546, %v528
        %v548 = vpop.permute.xlu0 %547
        %551 = vset.pattern.permute.xlu0 0
        %552 = vperm.xlu0 %551, %v529
        %v553 = vpop.permute.xlu0 %552
        %556 = vset.pattern.permute.xlu0 0
        %557 = vperm.xlu0 %556, %v530
        %v558 = vpop.permute.xlu0 %557
        %561 = vset.pattern.permute.xlu0 0
        %562 = vperm.xlu0 %561, %v531
        %v563 = vpop.permute.xlu0 %562
        %566 = vset.pattern.permute.xlu0 0
        %567 = vperm.xlu0 %566, %v532
        %v568 = vpop.permute.xlu0 %567
        %571 = vset.pattern.permute.xlu0 0
        %572 = vperm.xlu0 %571, %v533
        %v573 = vpop.permute.xlu0 %572
        %576 = vset.pattern.permute.xlu0 0
        %577 = vperm.xlu0 %576, %v534
        %v578 = vpop.permute.xlu0 %577
        %581 = vset.pattern.permute.xlu0 0
        %582 = vperm.xlu0 %581, %v535
        %v583 = vpop.permute.xlu0 %582
        %586 = vset.pattern.permute.xlu0 0
        %587 = vperm.xlu0 %586, %v536
        %v588 = vpop.permute.xlu0 %587
        %591 = vset.pattern.permute.xlu0 0
        %592 = vperm.xlu0 %591, %v537
        %v593 = vpop.permute.xlu0 %592
        %596 = vset.pattern.permute.xlu0 0
        %597 = vperm.xlu0 %596, %v538
        %v598 = vpop.permute.xlu0 %597
        %v600 = vlaneseq
        %v601 = vshrl.u32 %v600, 7
        %v602 = vsub.s32 0, %v601
        %v603 = vrot.slane %v539, %v602
        %v604 = vmul.f32 %v543, %v603
        %v605 = vmul.f32 %v548, %v603
        %v606 = vmul.f32 %v553, %v603
        %v607 = vmul.f32 %v558, %v603
        %v608 = vmul.f32 %v563, %v603
        %v609 = vmul.f32 %v568, %v603
        %v610 = vmul.f32 %v573, %v603
        %v611 = vmul.f32 %v578, %v603
        %v612 = vmul.f32 %v583, %v603
        %v613 = vmul.f32 %v588, %v603
        %v614 = vmul.f32 %v593, %v603
        %v615 = vmul.f32 %v598, %v603
        %v616 = vld [vmem:[%s2 + $0x1] sm:$0x1]
        %617 = vset.pattern.permute.xlu0 1
        %618 = vperm.xlu0 %617, %v527
        %v619 = vpop.permute.xlu0 %618
        %621 = vset.pattern.permute.xlu0 1
        %622 = vperm.xlu0 %621, %v528
        %v623 = vpop.permute.xlu0 %622
        %625 = vset.pattern.permute.xlu0 1
        %626 = vperm.xlu0 %625, %v529
        %v627 = vpop.permute.xlu0 %626
        %629 = vset.pattern.permute.xlu0 1
        %630 = vperm.xlu0 %629, %v530
        %v631 = vpop.permute.xlu0 %630
        %633 = vset.pattern.permute.xlu0 1
        %634 = vperm.xlu0 %633, %v531
        %v635 = vpop.permute.xlu0 %634
        %637 = vset.pattern.permute.xlu0 1
        %638 = vperm.xlu0 %637, %v532
        %v639 = vpop.permute.xlu0 %638
        %641 = vset.pattern.permute.xlu0 1
        %642 = vperm.xlu0 %641, %v533
        %v643 = vpop.permute.xlu0 %642
        %645 = vset.pattern.permute.xlu0 1
        %646 = vperm.xlu0 %645, %v534
        %v647 = vpop.permute.xlu0 %646
        %649 = vset.pattern.permute.xlu0 1
        %650 = vperm.xlu0 %649, %v535
        %v651 = vpop.permute.xlu0 %650
        %653 = vset.pattern.permute.xlu0 1
        %654 = vperm.xlu0 %653, %v536
        %v655 = vpop.permute.xlu0 %654
        %657 = vset.pattern.permute.xlu0 1
        %658 = vperm.xlu0 %657, %v537
        %v659 = vpop.permute.xlu0 %658
        %661 = vset.pattern.permute.xlu0 1
        %662 = vperm.xlu0 %661, %v538
        %v663 = vpop.permute.xlu0 %662
        %v665 = vlaneseq
        %v666 = vshrl.u32 %v665, 7
        %v667 = vsub.s32 0, %v666
        %v668 = vrot.slane %v616, %v667
        %v669 = vmul.f32 %v619, %v668
        %v670 = vmul.f32 %v623, %v668
        %v671 = vmul.f32 %v627, %v668
        %v672 = vmul.f32 %v631, %v668
        %v673 = vmul.f32 %v635, %v668
        %v674 = vmul.f32 %v639, %v668
        %v675 = vmul.f32 %v643, %v668
        %v676 = vmul.f32 %v647, %v668
        %v677 = vmul.f32 %v651, %v668
        %v678 = vmul.f32 %v655, %v668
        %v679 = vmul.f32 %v659, %v668
        %v680 = vmul.f32 %v663, %v668
        %v681 = vadd.f32 %v604, %v669
        %v682 = vadd.f32 %v605, %v670
        %v683 = vadd.f32 %v606, %v671
        %v684 = vadd.f32 %v607, %v672
        %v685 = vadd.f32 %v608, %v673
        %v686 = vadd.f32 %v609, %v674
        %v687 = vadd.f32 %v610, %v675
        %v688 = vadd.f32 %v611, %v676
        %v689 = vadd.f32 %v612, %v677
        %v690 = vadd.f32 %v613, %v678
        %v691 = vadd.f32 %v614, %v679
        %v692 = vadd.f32 %v615, %v680
        %v693 = vld [vmem:[%s2 + $0x2] sm:$0x1]
        %694 = vset.pattern.permute.xlu0 2
        %695 = vperm.xlu0 %694, %v527
        %v696 = vpop.permute.xlu0 %695
        %698 = vset.pattern.permute.xlu0 2
        %699 = vperm.xlu0 %698, %v528
        %v700 = vpop.permute.xlu0 %699
        %702 = vset.pattern.permute.xlu0 2
        %703 = vperm.xlu0 %702, %v529
        %v704 = vpop.permute.xlu0 %703
        %706 = vset.pattern.permute.xlu0 2
        %707 = vperm.xlu0 %706, %v530
        %v708 = vpop.permute.xlu0 %707
        %710 = vset.pattern.permute.xlu0 2
        %711 = vperm.xlu0 %710, %v531
        %v712 = vpop.permute.xlu0 %711
        %714 = vset.pattern.permute.xlu0 2
        %715 = vperm.xlu0 %714, %v532
        %v716 = vpop.permute.xlu0 %715
        %718 = vset.pattern.permute.xlu0 2
        %719 = vperm.xlu0 %718, %v533
        %v720 = vpop.permute.xlu0 %719
        %722 = vset.pattern.permute.xlu0 2
        %723 = vperm.xlu0 %722, %v534
        %v724 = vpop.permute.xlu0 %723
        %726 = vset.pattern.permute.xlu0 2
        %727 = vperm.xlu0 %726, %v535
        %v728 = vpop.permute.xlu0 %727
        %730 = vset.pattern.permute.xlu0 2
        %731 = vperm.xlu0 %730, %v536
        %v732 = vpop.permute.xlu0 %731
        %734 = vset.pattern.permute.xlu0 2
        %735 = vperm.xlu0 %734, %v537
        %v736 = vpop.permute.xlu0 %735
        %738 = vset.pattern.permute.xlu0 2
        %739 = vperm.xlu0 %738, %v538
        %v740 = vpop.permute.xlu0 %739
        %v742 = vlaneseq
        %v743 = vshrl.u32 %v742, 7
        %v744 = vsub.s32 0, %v743
        %v745 = vrot.slane %v693, %v744
        %v746 = vmul.f32 %v696, %v745
        %v747 = vmul.f32 %v700, %v745
        %v748 = vmul.f32 %v704, %v745
        %v749 = vmul.f32 %v708, %v745
        %v750 = vmul.f32 %v712, %v745
        %v751 = vmul.f32 %v716, %v745
        %v752 = vmul.f32 %v720, %v745
        %v753 = vmul.f32 %v724, %v745
        %v754 = vmul.f32 %v728, %v745
        %v755 = vmul.f32 %v732, %v745
        %v756 = vmul.f32 %v736, %v745
        %v757 = vmul.f32 %v740, %v745
        %v758 = vadd.f32 %v681, %v746
        %v759 = vadd.f32 %v682, %v747
        %v760 = vadd.f32 %v683, %v748
        %v761 = vadd.f32 %v684, %v749
        %v762 = vadd.f32 %v685, %v750
        %v763 = vadd.f32 %v686, %v751
        %v764 = vadd.f32 %v687, %v752
        %v765 = vadd.f32 %v688, %v753
        %v766 = vadd.f32 %v689, %v754
        %v767 = vadd.f32 %v690, %v755
        %v768 = vadd.f32 %v691, %v756
        %v769 = vadd.f32 %v692, %v757
        %v770 = vld [vmem:[%s2 + $0x3] sm:$0x1]
        %771 = vset.pattern.permute.xlu0 3
        %772 = vperm.xlu0 %771, %v527
        %v773 = vpop.permute.xlu0 %772
        %775 = vset.pattern.permute.xlu0 3
        %776 = vperm.xlu0 %775, %v528
        %v777 = vpop.permute.xlu0 %776
        %779 = vset.pattern.permute.xlu0 3
        %780 = vperm.xlu0 %779, %v529
        %v781 = vpop.permute.xlu0 %780
        %783 = vset.pattern.permute.xlu0 3
        %784 = vperm.xlu0 %783, %v530
        %v785 = vpop.permute.xlu0 %784
        %787 = vset.pattern.permute.xlu0 3
        %788 = vperm.xlu0 %787, %v531
        %v789 = vpop.permute.xlu0 %788
        %791 = vset.pattern.permute.xlu0 3
        %792 = vperm.xlu0 %791, %v532
        %v793 = vpop.permute.xlu0 %792
        %795 = vset.pattern.permute.xlu0 3
        %796 = vperm.xlu0 %795, %v533
        %v797 = vpop.permute.xlu0 %796
        %799 = vset.pattern.permute.xlu0 3
        %800 = vperm.xlu0 %799, %v534
        %v801 = vpop.permute.xlu0 %800
        %803 = vset.pattern.permute.xlu0 3
        %804 = vperm.xlu0 %803, %v535
        %v805 = vpop.permute.xlu0 %804
        %807 = vset.pattern.permute.xlu0 3
        %808 = vperm.xlu0 %807, %v536
        %v809 = vpop.permute.xlu0 %808
        %811 = vset.pattern.permute.xlu0 3
        %812 = vperm.xlu0 %811, %v537
        %v813 = vpop.permute.xlu0 %812
        %815 = vset.pattern.permute.xlu0 3
        %816 = vperm.xlu0 %815, %v538
        %v817 = vpop.permute.xlu0 %816
        %v819 = vlaneseq
        %v820 = vshrl.u32 %v819, 7
        %v821 = vsub.s32 0, %v820
        %v822 = vrot.slane %v770, %v821
        %v823 = vmul.f32 %v773, %v822
        %v824 = vmul.f32 %v777, %v822
        %v825 = vmul.f32 %v781, %v822
        %v826 = vmul.f32 %v785, %v822
        %v827 = vmul.f32 %v789, %v822
        %v828 = vmul.f32 %v793, %v822
        %v829 = vmul.f32 %v797, %v822
        %v830 = vmul.f32 %v801, %v822
        %v831 = vmul.f32 %v805, %v822
        %v832 = vmul.f32 %v809, %v822
        %v833 = vmul.f32 %v813, %v822
        %v834 = vmul.f32 %v817, %v822
        %v835 = vadd.f32 %v758, %v823
        %v836 = vadd.f32 %v759, %v824
        %v837 = vadd.f32 %v760, %v825
        %v838 = vadd.f32 %v761, %v826
        %v839 = vadd.f32 %v762, %v827
        %v840 = vadd.f32 %v763, %v828
        %v841 = vadd.f32 %v764, %v829
        %v842 = vadd.f32 %v765, %v830
        %v843 = vadd.f32 %v766, %v831
        %v844 = vadd.f32 %v767, %v832
        %v845 = vadd.f32 %v768, %v833
        %v846 = vadd.f32 %v769, %v834
        %v847 = vld [vmem:[%s2 + $0x4] sm:$0x1]
        %848 = vset.pattern.permute.xlu0 4
        %849 = vperm.xlu0 %848, %v527
        %v850 = vpop.permute.xlu0 %849
        %852 = vset.pattern.permute.xlu0 4
        %853 = vperm.xlu0 %852, %v528
        %v854 = vpop.permute.xlu0 %853
        %856 = vset.pattern.permute.xlu0 4
        %857 = vperm.xlu0 %856, %v529
        %v858 = vpop.permute.xlu0 %857
        %860 = vset.pattern.permute.xlu0 4
        %861 = vperm.xlu0 %860, %v530
        %v862 = vpop.permute.xlu0 %861
        %864 = vset.pattern.permute.xlu0 4
        %865 = vperm.xlu0 %864, %v531
        %v866 = vpop.permute.xlu0 %865
        %868 = vset.pattern.permute.xlu0 4
        %869 = vperm.xlu0 %868, %v532
        %v870 = vpop.permute.xlu0 %869
        %872 = vset.pattern.permute.xlu0 4
        %873 = vperm.xlu0 %872, %v533
        %v874 = vpop.permute.xlu0 %873
        %876 = vset.pattern.permute.xlu0 4
        %877 = vperm.xlu0 %876, %v534
        %v878 = vpop.permute.xlu0 %877
        %880 = vset.pattern.permute.xlu0 4
        %881 = vperm.xlu0 %880, %v535
        %v882 = vpop.permute.xlu0 %881
        %884 = vset.pattern.permute.xlu0 4
        %885 = vperm.xlu0 %884, %v536
        %v886 = vpop.permute.xlu0 %885
        %888 = vset.pattern.permute.xlu0 4
        %889 = vperm.xlu0 %888, %v537
        %v890 = vpop.permute.xlu0 %889
        %892 = vset.pattern.permute.xlu0 4
        %893 = vperm.xlu0 %892, %v538
        %v894 = vpop.permute.xlu0 %893
        %v896 = vlaneseq
        %v897 = vshrl.u32 %v896, 7
        %v898 = vsub.s32 0, %v897
        %v899 = vrot.slane %v847, %v898
        %v900 = vmul.f32 %v850, %v899
        %v901 = vmul.f32 %v854, %v899
        %v902 = vmul.f32 %v858, %v899
        %v903 = vmul.f32 %v862, %v899
        %v904 = vmul.f32 %v866, %v899
        %v905 = vmul.f32 %v870, %v899
        %v906 = vmul.f32 %v874, %v899
        %v907 = vmul.f32 %v878, %v899
        %v908 = vmul.f32 %v882, %v899
        %v909 = vmul.f32 %v886, %v899
        %v910 = vmul.f32 %v890, %v899
        %v911 = vmul.f32 %v894, %v899
        %v912 = vadd.f32 %v835, %v900
        %v913 = vadd.f32 %v836, %v901
        %v914 = vadd.f32 %v837, %v902
        %v915 = vadd.f32 %v838, %v903
        %v916 = vadd.f32 %v839, %v904
        %v917 = vadd.f32 %v840, %v905
        %v918 = vadd.f32 %v841, %v906
        %v919 = vadd.f32 %v842, %v907
        %v920 = vadd.f32 %v843, %v908
        %v921 = vadd.f32 %v844, %v909
        %v922 = vadd.f32 %v845, %v910
        %v923 = vadd.f32 %v846, %v911
        %v924 = vpack.c.bf16 %v913, %v912
        %v925 = vpack.c.bf16 %v915, %v914
        %v926 = vpack.c.bf16 %v917, %v916
        %v927 = vpack.c.bf16 %v919, %v918
        %v928 = vpack.c.bf16 %v921, %v920
        %v929 = vpack.c.bf16 %v923, %v922
        %v930 = vld [vmem:[%s4] sm:$0xf]
        %v931 = vld [vmem:[%s4 + $0x4] sm:$0xf]
        %v932 = vld [vmem:[%s4 + $0x8] sm:$0xf]
        %v933 = vld [vmem:[%s4 + $0xc] sm:$0xf]
        %v934 = vld [vmem:[%s4 + $0x10] sm:$0xf]
        %v935 = vld [vmem:[%s4 + $0x14] sm:$0xf]
        %v936 = vld [vmem:[%s4 + $0x18] sm:$0xf]
        %v937 = vld [vmem:[%s4 + $0x1c] sm:$0xf]
        %v938 = vld [vmem:[%s4 + $0x20] sm:$0xf]
        %v939 = vld [vmem:[%s4 + $0x24] sm:$0xf]
        %v940 = vld [vmem:[%s4 + $0x28] sm:$0xf]
        %v941 = vld [vmem:[%s4 + $0x2c] sm:$0xf]
        %v942 = vld [vmem:[%s4 + $0x30] sm:$0xf]
        %v943 = vld [vmem:[%s4 + $0x34] sm:$0xf]
        %v944 = vld [vmem:[%s4 + $0x38] sm:$0xf]
        %v945 = vld [vmem:[%s4 + $0x3c] sm:$0xf]
        %v962 = vunpack.c.l.b16 %v930
        %v963 = vunpack.c.l.b16 %v931
        %v964 = vunpack.c.l.b16 %v932
        %v965 = vunpack.c.l.b16 %v933
        %v966 = vunpack.c.l.b16 %v934
        %v967 = vunpack.c.l.b16 %v935
        %v968 = vunpack.c.l.b16 %v936
        %v969 = vunpack.c.l.b16 %v937
        %v970 = vunpack.c.l.b16 %v938
        %v971 = vunpack.c.l.b16 %v939
        %v972 = vunpack.c.l.b16 %v940
        %v973 = vunpack.c.l.b16 %v941
        %v974 = vunpack.c.l.b16 %v942
        %v975 = vunpack.c.l.b16 %v943
        %v976 = vunpack.c.l.b16 %v944
        %v977 = vunpack.c.l.b16 %v945
        %v978 = vpack.c.b16 %v963, %v962
        %v979 = vpack.c.b16 %v965, %v964
        %v980 = vpack.c.b16 %v967, %v966
        %v981 = vpack.c.b16 %v969, %v968
        %v982 = vpack.c.b16 %v971, %v970
        %v983 = vpack.c.b16 %v973, %v972
        %v984 = vpack.c.b16 %v975, %v974
        %v985 = vpack.c.b16 %v977, %v976
        %994 = vmatprep.subr.bf16.mxu0 0
        %995 = vmatpush1.bf16.msra.mxu0 %v978
        %996 = vmatprep.subr.bf16.mxu0 0
        %997 = vmatpush1.bf16.msra.mxu0 %v979
        %998 = vmatprep.subr.bf16.mxu0 0
        %999 = vmatpush1.bf16.msra.mxu0 %v980
        %1000 = vmatprep.subr.bf16.mxu0 0
        %1001 = vmatpush1.bf16.msra.mxu0 %v981
        %1002 = vmatprep.subr.bf16.mxu0 0
        %1003 = vmatpush1.bf16.msra.mxu0 %v982
        %1004 = vmatprep.subr.bf16.mxu0 0
        %1005 = vmatpush1.bf16.msra.mxu0 %v983
        %1006 = vmatprep.subr.bf16.mxu0 0
        %1007 = vmatpush1.bf16.msra.mxu0 %v984
        %1008 = vmatprep.subr.bf16.mxu0 0
        %1009 = vmatpush1.bf16.msra.mxu0 %v985
        %1010 = vmatprep.subr.bf16.mxu0 0
        %1011 = vmatpush1.bf16.msra.mxu0 0
        %1012 = vmatprep.subr.bf16.mxu0 0
        %1013 = vmatpush1.bf16.msra.mxu0 0
        %1014 = vmatprep.subr.bf16.mxu0 0
        %1015 = vmatpush1.bf16.msra.mxu0 0
        %1016 = vmatprep.subr.bf16.mxu0 0
        %1017 = vmatpush1.bf16.msra.mxu0 0
        %1018 = vmatprep.subr.bf16.mxu0 0
        %1019 = vmatpush1.bf16.msra.mxu0 0
        %1020 = vmatprep.subr.bf16.mxu0 0
        %1021 = vmatpush1.bf16.msra.mxu0 0
        %1022 = vmatprep.subr.bf16.mxu0 0
        %1023 = vmatpush1.bf16.msra.mxu0 0
        %1024 = vmatprep.subr.bf16.mxu0 0
        %1025 = vmatpush1.bf16.msra.mxu0 0
        %1026 = vmatprep.mubr.bf16.mxu0 0
        %1027 = vmatmul.mubr.bf16.gmra.mrb[0].mxu0 %v924
        %v1028 = vpop.f32.mrb[0].mxu0
        %v1029 = vadd.f32 0.0, %v1028
        %v1030 = vpop.f32.mrb[0].mxu0
        %v1031 = vpop.f32.mrb[0].mxu0
        %v1032 = vadd.f32 0.0, %v1031
        %v1033 = vpop.f32.mrb[0].mxu0
        %1034 = vmatprep.mubr.bf16.mxu0 0
        %1035 = vmatmul.mubr.bf16.gmra.mrb[0].mxu0 %v925
        %v1036 = vpop.f32.mrb[0].mxu0
        %v1037 = vadd.f32 0.0, %v1036
        %v1038 = vpop.f32.mrb[0].mxu0
        %v1039 = vpop.f32.mrb[0].mxu0
        %v1040 = vadd.f32 0.0, %v1039
        %v1041 = vpop.f32.mrb[0].mxu0
        %1042 = vmatprep.mubr.bf16.mxu0 0
        %1043 = vmatmul.mubr.bf16.gmra.mrb[0].mxu0 %v926
        %v1044 = vpop.f32.mrb[0].mxu0
        %v1045 = vadd.f32 0.0, %v1044
        %v1046 = vpop.f32.mrb[0].mxu0
        %v1047 = vpop.f32.mrb[0].mxu0
        %v1048 = vadd.f32 0.0, %v1047
        %v1049 = vpop.f32.mrb[0].mxu0
        %1050 = vmatprep.mubr.bf16.mxu0 0
        %1051 = vmatmul.mubr.bf16.gmra.mrb[0].mxu0 %v927
        %v1052 = vpop.f32.mrb[0].mxu0
        %v1053 = vadd.f32 0.0, %v1052
        %v1054 = vpop.f32.mrb[0].mxu0
        %v1055 = vpop.f32.mrb[0].mxu0
        %v1056 = vadd.f32 0.0, %v1055
        %v1057 = vpop.f32.mrb[0].mxu0
        %1058 = vmatprep.mubr.bf16.mxu0 0
        %1059 = vmatmul.mubr.bf16.gmra.mrb[0].mxu0 %v928
        %v1060 = vpop.f32.mrb[0].mxu0
        %v1061 = vadd.f32 0.0, %v1060
        %v1062 = vpop.f32.mrb[0].mxu0
        %v1063 = vpop.f32.mrb[0].mxu0
        %v1064 = vadd.f32 0.0, %v1063
        %v1065 = vpop.f32.mrb[0].mxu0
        %1066 = vmatprep.mubr.bf16.mxu0 0
        %1067 = vmatmul.mubr.bf16.gmra.mrb[0].mxu0 %v929
        %v1068 = vpop.f32.mrb[0].mxu0
        %v1069 = vadd.f32 0.0, %v1068
        %v1070 = vpop.f32.mrb[0].mxu0
        %v1071 = vpop.f32.mrb[0].mxu0
        %v1072 = vadd.f32 0.0, %v1071
        %v1073 = vpop.f32.mrb[0].mxu0
        %1074 = vdwg.mxu0
        %v1107 = vunpack.c.l.b16 %v422
        %v1108 = vunpack.c.l.b16 %v423
        %v1109 = vunpack.c.l.b16 %v424
        %v1110 = vunpack.c.l.b16 %v425
        %v1111 = vunpack.c.l.b16 %v426
        %v1112 = vunpack.c.l.b16 %v427
        %v1113 = vunpack.c.l.b16 %v428
        %v1114 = vunpack.c.l.b16 %v429
        %v1115 = vunpack.c.l.b16 %v430
        %v1116 = vunpack.c.l.b16 %v431
        %v1117 = vunpack.c.l.b16 %v432
        %v1118 = vunpack.c.l.b16 %v433
        %v1119 = vunpack.c.l.b16 %v434
        %v1120 = vunpack.c.l.b16 %v435
        %v1121 = vunpack.c.l.b16 %v436
        %v1122 = vunpack.c.l.b16 %v437
        %v1123 = vunpack.c.l.b16 %v438
        %v1124 = vunpack.c.l.b16 %v439
        %v1125 = vunpack.c.l.b16 %v440
        %v1126 = vunpack.c.l.b16 %v441
        %v1127 = vunpack.c.l.b16 %v442
        %v1128 = vunpack.c.l.b16 %v443
        %v1129 = vunpack.c.l.b16 %v444
        %v1130 = vunpack.c.l.b16 %v445
        %v1131 = vunpack.c.l.b16 %v446
        %v1132 = vunpack.c.l.b16 %v447
        %v1133 = vunpack.c.l.b16 %v448
        %v1134 = vunpack.c.l.b16 %v449
        %v1135 = vunpack.c.l.b16 %v450
        %v1136 = vunpack.c.l.b16 %v451
        %v1137 = vunpack.c.l.b16 %v452
        %v1138 = vunpack.c.l.b16 %v453
        %v1139 = vpack.c.b16 %v1108, %v1107
        %v1140 = vpack.c.b16 %v1110, %v1109
        %v1141 = vpack.c.b16 %v1112, %v1111
        %v1142 = vpack.c.b16 %v1114, %v1113
        %v1143 = vpack.c.b16 %v1116, %v1115
        %v1144 = vpack.c.b16 %v1118, %v1117
        %v1145 = vpack.c.b16 %v1120, %v1119
        %v1146 = vpack.c.b16 %v1122, %v1121
        %v1147 = vpack.c.b16 %v1124, %v1123
        %v1148 = vpack.c.b16 %v1126, %v1125
        %v1149 = vpack.c.b16 %v1128, %v1127
        %v1150 = vpack.c.b16 %v1130, %v1129
        %v1151 = vpack.c.b16 %v1132, %v1131
        %v1152 = vpack.c.b16 %v1134, %v1133
        %v1153 = vpack.c.b16 %v1136, %v1135
        %v1154 = vpack.c.b16 %v1138, %v1137
        %1171 = vmatprep.subr.bf16.mxu0 0
        %1172 = vmatpush1.bf16.msra.mxu0 %v1139
        %1173 = vmatprep.subr.bf16.mxu0 0
        %1174 = vmatpush1.bf16.msra.mxu0 %v1140
        %1175 = vmatprep.subr.bf16.mxu0 0
        %1176 = vmatpush1.bf16.msra.mxu0 %v1141
        %1177 = vmatprep.subr.bf16.mxu0 0
        %1178 = vmatpush1.bf16.msra.mxu0 %v1142
        %1179 = vmatprep.subr.bf16.mxu0 0
        %1180 = vmatpush1.bf16.msra.mxu0 %v1143
        %1181 = vmatprep.subr.bf16.mxu0 0
        %1182 = vmatpush1.bf16.msra.mxu0 %v1144
        %1183 = vmatprep.subr.bf16.mxu0 0
        %1184 = vmatpush1.bf16.msra.mxu0 %v1145
        %1185 = vmatprep.subr.bf16.mxu0 0
        %1186 = vmatpush1.bf16.msra.mxu0 %v1146
        %1187 = vmatprep.subr.bf16.mxu0 0
        %1188 = vmatpush1.bf16.msra.mxu0 %v1147
        %1189 = vmatprep.subr.bf16.mxu0 0
        %1190 = vmatpush1.bf16.msra.mxu0 %v1148
        %1191 = vmatprep.subr.bf16.mxu0 0
        %1192 = vmatpush1.bf16.msra.mxu0 %v1149
        %1193 = vmatprep.subr.bf16.mxu0 0
        %1194 = vmatpush1.bf16.msra.mxu0 %v1150
        %1195 = vmatprep.subr.bf16.mxu0 0
        %1196 = vmatpush1.bf16.msra.mxu0 %v1151
        %1197 = vmatprep.subr.bf16.mxu0 0
        %1198 = vmatpush1.bf16.msra.mxu0 %v1152
        %1199 = vmatprep.subr.bf16.mxu0 0
        %1200 = vmatpush1.bf16.msra.mxu0 %v1153
        %1201 = vmatprep.subr.bf16.mxu0 0
        %1202 = vmatpush1.bf16.msra.mxu0 %v1154
        %1203 = vmatprep.mubr.bf16.mxu0 %v411
        %1204 = vmatmul.mubr.bf16.gmra.mrb[0].mxu0 %v410
        %v1205 = vpop.f32.mrb[0].mxu0
        %v1206 = vadd.f32 %v1029, %v1205
        %v1207 = vpop.f32.mrb[0].mxu0
        %v1208 = vpop.f32.mrb[0].mxu0
        %v1209 = vadd.f32 %v1032, %v1208
        %v1210 = vpop.f32.mrb[0].mxu0
        %1211 = vmatprep.mubr.bf16.mxu0 %v413
        %1212 = vmatmul.mubr.bf16.gmra.mrb[0].mxu0 %v412
        %v1213 = vpop.f32.mrb[0].mxu0
        %v1214 = vadd.f32 %v1037, %v1213
        %v1215 = vpop.f32.mrb[0].mxu0
        %v1216 = vpop.f32.mrb[0].mxu0
        %v1217 = vadd.f32 %v1040, %v1216
        %v1218 = vpop.f32.mrb[0].mxu0
        %1219 = vmatprep.mubr.bf16.mxu0 %v415
        %1220 = vmatmul.mubr.bf16.gmra.mrb[0].mxu0 %v414
        %v1221 = vpop.f32.mrb[0].mxu0
        %v1222 = vadd.f32 %v1045, %v1221
        %v1223 = vpop.f32.mrb[0].mxu0
        %v1224 = vpop.f32.mrb[0].mxu0
        %v1225 = vadd.f32 %v1048, %v1224
        %v1226 = vpop.f32.mrb[0].mxu0
        %1227 = vmatprep.mubr.bf16.mxu0 %v417
        %1228 = vmatmul.mubr.bf16.gmra.mrb[0].mxu0 %v416
        %v1229 = vpop.f32.mrb[0].mxu0
        %v1230 = vadd.f32 %v1053, %v1229
        %v1231 = vpop.f32.mrb[0].mxu0
        %v1232 = vpop.f32.mrb[0].mxu0
        %v1233 = vadd.f32 %v1056, %v1232
        %v1234 = vpop.f32.mrb[0].mxu0
        %1235 = vmatprep.mubr.bf16.mxu0 %v419
        %1236 = vmatmul.mubr.bf16.gmra.mrb[0].mxu0 %v418
        %v1237 = vpop.f32.mrb[0].mxu0
        %v1238 = vadd.f32 %v1061, %v1237
        %v1239 = vpop.f32.mrb[0].mxu0
        %v1240 = vpop.f32.mrb[0].mxu0
        %v1241 = vadd.f32 %v1064, %v1240
        %v1242 = vpop.f32.mrb[0].mxu0
        %1243 = vmatprep.mubr.bf16.mxu0 %v421
        %1244 = vmatmul.mubr.bf16.gmra.mrb[0].mxu0 %v420
        %v1245 = vpop.f32.mrb[0].mxu0
        %v1246 = vadd.f32 %v1069, %v1245
        %v1247 = vpop.f32.mrb[0].mxu0
        %v1248 = vpop.f32.mrb[0].mxu0
        %v1249 = vadd.f32 %v1072, %v1248
        %v1250 = vpop.f32.mrb[0].mxu0
        %1251 = vdwg.mxu0
        %v1252 = vld [vmem:[%s5] sm:$0x1]
        %v1254 = vlaneseq
        %v1255 = vshrl.u32 %v1254, 7
        %v1256 = vsub.s32 0, %v1255
        %v1257 = vrot.slane %v1252, %v1256
        %v1259 = vadd.f32 %v1206, %v1257
        %v1260 = vadd.f32 %v1209, %v1257
        %v1261 = vadd.f32 %v1214, %v1257
        %v1262 = vadd.f32 %v1217, %v1257
        %v1263 = vadd.f32 %v1222, %v1257
        %v1264 = vadd.f32 %v1225, %v1257
        %v1265 = vadd.f32 %v1230, %v1257
        %v1266 = vadd.f32 %v1233, %v1257
        %v1267 = vadd.f32 %v1238, %v1257
        %v1268 = vadd.f32 %v1241, %v1257
        %v1269 = vadd.f32 %v1246, %v1257
        %v1270 = vadd.f32 %v1249, %v1257
        %1271 = vst [vmem:[%s348] sm:$0xff] %v1259
        %1272 = vst [vmem:[%s348 + $0x8] sm:$0xff] %v1260
        %1273 = vst [vmem:[%s348 + $0x10] sm:$0xff] %v1261
        %1274 = vst [vmem:[%s348 + $0x18] sm:$0xff] %v1262
        %1275 = vst [vmem:[%s348 + $0x20] sm:$0xff] %v1263
        %1276 = vst [vmem:[%s348 + $0x28] sm:$0xff] %v1264
        %1277 = vst [vmem:[%s348 + $0x30] sm:$0xff] %v1265
        %1278 = vst [vmem:[%s348 + $0x38] sm:$0xff] %v1266
        %1279 = vst [vmem:[%s348 + $0x40] sm:$0xff] %v1267
        %1280 = vst [vmem:[%s348 + $0x48] sm:$0xff] %v1268
        %1281 = vst [vmem:[%s348 + $0x50] sm:$0xff] %v1269
        %1282 = vst [vmem:[%s348 + $0x58] sm:$0xff] %v1270
        %s1283 = sand.u32 %s170, 1
        %s1284 = scalar_lea.sflag [#allocation4], %s1283
        %s1285 = sand.u32 %s170, 1
        %s1286 = smul.addr %s1285, 96
        %s1287 = scalar_lea.vmem [#allocation7], %s1286
        %s1288 = sand.u32 %s196, 1
        %s1289 = sand.u32 %s196, 1
        %s1290 = smul.addr %s1289, 96
        %s1291 = scalar_lea.vmem [#allocation8], %s1290
        // Predicated region
        $region53: #{tpu_custom_call.1} parent=43 // pred_check
          %p1292 = pneg %p180
        $region54: #{tpu_custom_call.1} parent=43 // pred_check_branch
          %1294 = sbr.rel (%p1292) target = $region56
        $region55: #{tpu_custom_call.1} parent=43 // pred_region
          %s1295 = smul.u32 12, %s26
          %s1296 = ssub.s32 13, %s1295
          %p1297 = scmp.lt.s32.totalorder %s1296, 12
          %s1298 = scalar_select %p1297, %s1296, 12
          %s1299 = smul.u32 128, %s1298
          %s1301 = ssub.s32 1536, %s1299
          %1302 = vsyncadd %s1284, %s1301
          %p1303 = scmp.ne.s32.totalorder 0, %s1299
          %s1304 = smul.addr %s1295, 128
          %s1305 = scalar_lea.hbm %s6, %s1304
          %s1306 = smul.u32 8, %s1298
          %s1307 = sshll.u32 %s1287, 4
          %s1308 = int_to_ptr.vmem [resolvable:$true] %s1307
          %s1309 = sshll.u32 %s1306, 4
          %1313 = dma.vmem_to_hbm [thread:$0]  (%p1303), %s1308, %s1309, %s1305, %s1284, 128, 128, 8
        $region56: #{tpu_custom_call.1} parent=43 // pred_fallthru
          _
        // Predicated region
        $region57: #{tpu_custom_call.1} parent=43 // pred_check
          %p1314 = pneg %p206
        $region58: #{tpu_custom_call.1} parent=43 // pred_check_branch
          %1316 = sbr.rel (%p1314) target = $region60
        $region59: #{tpu_custom_call.1} parent=43 // pred_region
          %s1317 = smul.u32 12, %s26
          %s1318 = ssub.s32 13, %s1317
          %p1319 = scmp.lt.s32.totalorder %s1318, 12
          %s1320 = scalar_select %p1319, %s1318, 12
          %s1321 = smul.u32 128, %s1320
          %p1322 = scmp.ne.s32.totalorder 0, %s1321
          %s1323 = smul.addr %s1317, 8
          %s1324 = scalar_lea.vmem %s7, %s1323
          // Predicated region
          $region61: #{tpu_custom_call.1} parent=59 // pred_check
            %p1325 = pneg %p1322
          $region62: #{tpu_custom_call.1} parent=59 // pred_check_branch
            %1327 = sbr.rel (%p1325) target = $region64
          $region63: #{tpu_custom_call.1} parent=59 // pred_region
            // Predicated region
            $region65: #{tpu_custom_call.1} parent=63 // pred_check
              _
            $region66: #{tpu_custom_call.1} parent=63 // pred_check_branch
              %1329 = sbr.rel (0) target = $region68
            $region67: #{tpu_custom_call.1} parent=63 // pred_region
              // Predicated region
              $region87: #{tpu_custom_call.1} parent=67 // pred_check
                _
              $region88: #{tpu_custom_call.1} parent=67 // pred_check_branch
                %1401 = sbr.rel (0) target = $region90
              $region89: #{tpu_custom_call.1} parent=67 // pred_region
                %s1402 = sdiv.u32.pop %s1320, 12
                %s1403 = srem.u32.pop %s1320, 12
                // While loop
                $region91: #{tpu_custom_call.1} parent=89 // loop_pre_header
                  _
                $region92: #{tpu_custom_call.1} parent=89 // loop_header
                  %s1405 = sphi 0, %s1407
                  %p1406 = scmp.ge.s32.totalorder %s1405, %s1402
                  %s1410 = sphi 0, %s1439
                  %s1411 = sphi %s1291, %s1442
                  %s1412 = sphi %s1324, %s1443
                $region93: #{tpu_custom_call.1} parent=89 // loop_header_branch
                  %1409 = sbr.rel (%p1406) target = $region97
                $region94: #{tpu_custom_call.1} parent=89 // loop_body
                  %v1413 = vld [vmem:[%s1411] sm:$0xff]
                  %1414 = vst [vmem:[%s1412] sm:$0xff] %v1413
                  %v1415 = vld [vmem:[%s1411 + $0x8] sm:$0xff]
                  %1416 = vst [vmem:[%s1412 + $0x8] sm:$0xff] %v1415
                  %v1417 = vld [vmem:[%s1411 + $0x10] sm:$0xff]
                  %1418 = vst [vmem:[%s1412 + $0x10] sm:$0xff] %v1417
                  %v1419 = vld [vmem:[%s1411 + $0x18] sm:$0xff]
                  %1420 = vst [vmem:[%s1412 + $0x18] sm:$0xff] %v1419
                  %v1421 = vld [vmem:[%s1411 + $0x20] sm:$0xff]
                  %1422 = vst [vmem:[%s1412 + $0x20] sm:$0xff] %v1421
                  %v1423 = vld [vmem:[%s1411 + $0x28] sm:$0xff]
                  %1424 = vst [vmem:[%s1412 + $0x28] sm:$0xff] %v1423
                  %v1425 = vld [vmem:[%s1411 + $0x30] sm:$0xff]
                  %1426 = vst [vmem:[%s1412 + $0x30] sm:$0xff] %v1425
                  %v1427 = vld [vmem:[%s1411 + $0x38] sm:$0xff]
                  %1428 = vst [vmem:[%s1412 + $0x38] sm:$0xff] %v1427
                  %v1429 = vld [vmem:[%s1411 + $0x40] sm:$0xff]
                  %1430 = vst [vmem:[%s1412 + $0x40] sm:$0xff] %v1429
                  %v1431 = vld [vmem:[%s1411 + $0x48] sm:$0xff]
                  %1432 = vst [vmem:[%s1412 + $0x48] sm:$0xff] %v1431
                  %v1433 = vld [vmem:[%s1411 + $0x50] sm:$0xff]
                  %1434 = vst [vmem:[%s1412 + $0x50] sm:$0xff] %v1433
                  %v1435 = vld [vmem:[%s1411 + $0x58] sm:$0xff]
                  %1436 = vst [vmem:[%s1412 + $0x58] sm:$0xff] %v1435
                  %s1437 = sadd.s32 1, %s1410
                  %p1438 = scmp.ge.s32.totalorder %s1437, %s1402
                  %s1439 = scalar_select %p1438, 0, %s1437
                  %s1440 = smul.u32 %s1439, 96
                  %s1441 = smul.u32 %s1439, 96
                  %s1442 = scalar_lea.vmem %s1291, %s1440 [#allocation8]
                  %s1443 = scalar_lea.vmem %s1324, %s1441
                $region95: #{tpu_custom_call.1} parent=89 // loop_footer
                  %s1407 = sadd.s32 %s1405, 1
                $region96: #{tpu_custom_call.1} parent=89 // loop_footer_branch
                  %1404 = sbr.rel target = $region92
                $region97: #{tpu_custom_call.1} parent=89 // loop_exit
                  _
                %s1444 = sdiv.u32.pop %s1320, 12
                %s1445 = srem.u32.pop %s1320, 12
                %s1446 = smul.u32 %s1444, 12
                %s1447 = smul.u32 8, %s1446
                %s1448 = scalar_lea.vmem %s1291, %s1447 [#allocation8]
                %s1449 = smul.u32 8, %s1446
                %s1450 = scalar_lea.vmem %s1324, %s1449
                // While loop
                $region98: #{tpu_custom_call.1} parent=89 // loop_pre_header
                  _
                $region99: #{tpu_custom_call.1} parent=89 // loop_header
                  %s1452 = sphi 0, %s1454
                  %p1453 = scmp.ge.s32.totalorder %s1452, %s1445
                  %s1457 = sphi 0, %s1464
                  %s1458 = sphi %s1448, %s1467
                  %s1459 = sphi %s1450, %s1468
                $region100: #{tpu_custom_call.1} parent=89 // loop_header_branch
                  %1456 = sbr.rel (%p1453) target = $region104
                $region101: #{tpu_custom_call.1} parent=89 // loop_body
                  %v1460 = vld [vmem:[%s1458] sm:$0xff]
                  %1461 = vst [vmem:[%s1459] sm:$0xff] %v1460
                  %s1462 = sadd.s32 1, %s1457
                  %p1463 = scmp.ge.s32.totalorder %s1462, %s1445
                  %s1464 = scalar_select %p1463, 0, %s1462
                  %s1465 = smul.u32 %s1464, 8
                  %s1466 = smul.u32 %s1464, 8
                  %s1467 = scalar_lea.vmem %s1448, %s1465 [#allocation8]
                  %s1468 = scalar_lea.vmem %s1450, %s1466
                $region102: #{tpu_custom_call.1} parent=89 // loop_footer
                  %s1454 = sadd.s32 %s1452, 1
                $region103: #{tpu_custom_call.1} parent=89 // loop_footer_branch
                  %1451 = sbr.rel target = $region99
                $region104: #{tpu_custom_call.1} parent=89 // loop_exit
                  _
              $region90: #{tpu_custom_call.1} parent=67 // pred_fallthru
                _
              // Predicated region
              $region105: #{tpu_custom_call.1} parent=67 // pred_check
                _
              $region106: #{tpu_custom_call.1} parent=67 // pred_check_branch
                %1470 = sbr.rel target = $region108
              $region107: #{tpu_custom_call.1} parent=67 // pred_region
                _
              $region108: #{tpu_custom_call.1} parent=67 // pred_fallthru
                _
            $region68: #{tpu_custom_call.1} parent=63 // pred_fallthru
              _
            // Predicated region
            $region69: #{tpu_custom_call.1} parent=63 // pred_check
              _
            $region70: #{tpu_custom_call.1} parent=63 // pred_check_branch
              %1331 = sbr.rel target = $region72
            $region71: #{tpu_custom_call.1} parent=63 // pred_region
              %s1333 = sdiv.u32.pop %s1320, 12
              %s1334 = srem.u32.pop %s1320, 12
              // While loop
              $region73: #{tpu_custom_call.1} parent=71 // loop_pre_header
                _
              $region74: #{tpu_custom_call.1} parent=71 // loop_header
                %s1336 = sphi 0, %s1338
                %p1337 = scmp.ge.s32.totalorder %s1336, %s1333
                %s1341 = sphi 0, %s1370
                %s1342 = sphi %s1291, %s1373
                %s1343 = sphi %s1324, %s1374
              $region75: #{tpu_custom_call.1} parent=71 // loop_header_branch
                %1340 = sbr.rel (%p1337) target = $region79
              $region76: #{tpu_custom_call.1} parent=71 // loop_body
                %v1344 = vld [vmem:[%s1342] sm:$0xff]
                %1345 = vst [vmem:[%s1343] sm:$0xff] %v1344
                %v1346 = vld [vmem:[%s1342 + $0x8] sm:$0xff]
                %1347 = vst [vmem:[%s1343 + $0x8] sm:$0xff] %v1346
                %v1348 = vld [vmem:[%s1342 + $0x10] sm:$0xff]
                %1349 = vst [vmem:[%s1343 + $0x10] sm:$0xff] %v1348
                %v1350 = vld [vmem:[%s1342 + $0x18] sm:$0xff]
                %1351 = vst [vmem:[%s1343 + $0x18] sm:$0xff] %v1350
                %v1352 = vld [vmem:[%s1342 + $0x20] sm:$0xff]
                %1353 = vst [vmem:[%s1343 + $0x20] sm:$0xff] %v1352
                %v1354 = vld [vmem:[%s1342 + $0x28] sm:$0xff]
                %1355 = vst [vmem:[%s1343 + $0x28] sm:$0xff] %v1354
                %v1356 = vld [vmem:[%s1342 + $0x30] sm:$0xff]
                %1357 = vst [vmem:[%s1343 + $0x30] sm:$0xff] %v1356
                %v1358 = vld [vmem:[%s1342 + $0x38] sm:$0xff]
                %1359 = vst [vmem:[%s1343 + $0x38] sm:$0xff] %v1358
                %v1360 = vld [vmem:[%s1342 + $0x40] sm:$0xff]
                %1361 = vst [vmem:[%s1343 + $0x40] sm:$0xff] %v1360
                %v1362 = vld [vmem:[%s1342 + $0x48] sm:$0xff]
                %1363 = vst [vmem:[%s1343 + $0x48] sm:$0xff] %v1362
                %v1364 = vld [vmem:[%s1342 + $0x50] sm:$0xff]
                %1365 = vst [vmem:[%s1343 + $0x50] sm:$0xff] %v1364
                %v1366 = vld [vmem:[%s1342 + $0x58] sm:$0xff]
                %1367 = vst [vmem:[%s1343 + $0x58] sm:$0xff] %v1366
                %s1368 = sadd.s32 1, %s1341
                %p1369 = scmp.ge.s32.totalorder %s1368, %s1333
                %s1370 = scalar_select %p1369, 0, %s1368
                %s1371 = smul.u32 %s1370, 96
                %s1372 = smul.u32 %s1370, 96
                %s1373 = scalar_lea.vmem %s1291, %s1371 [#allocation8]
                %s1374 = scalar_lea.vmem %s1324, %s1372
              $region77: #{tpu_custom_call.1} parent=71 // loop_footer
                %s1338 = sadd.s32 %s1336, 1
              $region78: #{tpu_custom_call.1} parent=71 // loop_footer_branch
                %1335 = sbr.rel target = $region74
              $region79: #{tpu_custom_call.1} parent=71 // loop_exit
                _
              %s1375 = sdiv.u32.pop %s1320, 12
              %s1376 = srem.u32.pop %s1320, 12
              %s1377 = smul.u32 %s1375, 12
              %s1378 = smul.u32 8, %s1377
              %s1379 = scalar_lea.vmem %s1291, %s1378 [#allocation8]
              %s1380 = smul.u32 8, %s1377
              %s1381 = scalar_lea.vmem %s1324, %s1380
              // While loop
              $region80: #{tpu_custom_call.1} parent=71 // loop_pre_header
                _
              $region81: #{tpu_custom_call.1} parent=71 // loop_header
                %s1383 = sphi 0, %s1385
                %p1384 = scmp.ge.s32.totalorder %s1383, %s1376
                %s1388 = sphi 0, %s1395
                %s1389 = sphi %s1379, %s1398
                %s1390 = sphi %s1381, %s1399
              $region82: #{tpu_custom_call.1} parent=71 // loop_header_branch
                %1387 = sbr.rel (%p1384) target = $region86
              $region83: #{tpu_custom_call.1} parent=71 // loop_body
                %v1391 = vld [vmem:[%s1389] sm:$0xff]
                %1392 = vst [vmem:[%s1390] sm:$0xff] %v1391
                %s1393 = sadd.s32 1, %s1388
                %p1394 = scmp.ge.s32.totalorder %s1393, %s1376
                %s1395 = scalar_select %p1394, 0, %s1393
                %s1396 = smul.u32 %s1395, 8
                %s1397 = smul.u32 %s1395, 8
                %s1398 = scalar_lea.vmem %s1379, %s1396 [#allocation8]
                %s1399 = scalar_lea.vmem %s1381, %s1397
              $region84: #{tpu_custom_call.1} parent=71 // loop_footer
                %s1385 = sadd.s32 %s1383, 1
              $region85: #{tpu_custom_call.1} parent=71 // loop_footer_branch
                %1382 = sbr.rel target = $region81
              $region86: #{tpu_custom_call.1} parent=71 // loop_exit
                _
            $region72: #{tpu_custom_call.1} parent=63 // pred_fallthru
              _
          $region64: #{tpu_custom_call.1} parent=59 // pred_fallthru
            _
          %1471 = vnop
        $region60: #{tpu_custom_call.1} parent=43 // pred_fallthru
          _
      $region44: #{tpu_custom_call.1} parent=5 // pred_fallthru
        _
      %p1472 = scmp.le.s32.totalorder 2, %s21
      // Predicated region
      $region109: #{tpu_custom_call.1} parent=5 // pred_check
        %p1473 = pneg %p1472
      $region110: #{tpu_custom_call.1} parent=5 // pred_check_branch
        %1475 = sbr.rel (%p1473) target = $region112
      $region111: #{tpu_custom_call.1} parent=5 // pred_region
        %s1476 = ssub.s32 %s21, 2
        // Predicated region
        $region113: #{tpu_custom_call.1} parent=111 // pred_check
          %p1477 = pneg %p186
        $region114: #{tpu_custom_call.1} parent=111 // pred_check_branch
          %1479 = sbr.rel (%p1477) target = $region116
        $region115: #{tpu_custom_call.1} parent=111 // pred_region
          %s1480 = sand.u32 %s171, 1
          %s1481 = scalar_lea.sflag [#allocation4], %s1480
          %s1482 = sand.u32 %s171, 1
          %s1483 = smul.addr %s1482, 96
          %s1484 = scalar_lea.vmem [#allocation7], %s1483
          %1485 = dma.done %s1481, 1536
        $region116: #{tpu_custom_call.1} parent=111 // pred_fallthru
          _
        // Predicated region
        $region117: #{tpu_custom_call.1} parent=111 // pred_check
          %p1486 = pneg %p212
        $region118: #{tpu_custom_call.1} parent=111 // pred_check_branch
          %1488 = sbr.rel (%p1486) target = $region120
        $region119: #{tpu_custom_call.1} parent=111 // pred_region
          %s1489 = sand.u32 %s197, 1
          %s1490 = sand.u32 %s197, 1
          %s1491 = smul.addr %s1490, 96
          %s1492 = scalar_lea.vmem [#allocation8], %s1491
        $region120: #{tpu_custom_call.1} parent=111 // pred_fallthru
          _
      $region112: #{tpu_custom_call.1} parent=5 // pred_fallthru
        _
    $region6: #{tpu_custom_call.1} parent=1 // loop_footer
      %s25 = sadd.s32 1, %s21
    $region7: #{tpu_custom_call.1} parent=1 // loop_footer_branch
      %20 = sbr.rel target = $region3
    $region8: #{tpu_custom_call.1} parent=1 // loop_exit
      _
    %1493 = vsyncpa [#allocation3], 1
    %s1494 = scalar_lea.sflag [#allocation3], 1
    %1495 = vsyncpa %s1494, 1
    %1496 = vsyncpa [#allocation6], 1
    %1497 = vsyncpa [#allocation4], 1
    %s1498 = scalar_lea.sflag [#allocation4], 1
    %1499 = vsyncpa %s1498, 1

</llo_original>
